<compile_context>
chip_gen: v6e
topology: v6e:2x2x1
jax: 0.10.0
libtpu: 0.0.40
codegen_flags: <defaults>
</compile_context>

<pallas_src>
import functools

import numpy as np
import jax
import jax.numpy as jnp
from jax import lax
from jax.experimental import pallas as pl
from jax.experimental.pallas import tpu as pltpu


# ----------------------------------------------------------------------------
# Generic helpers
# ----------------------------------------------------------------------------
def _round_up(n, m):
    return ((n + m - 1) // m) * m


@functools.lru_cache(maxsize=1)
def _vmem_limit_bytes():
    cap = 128 * 1024 * 1024
    try:
        cap = int(pltpu.get_tpu_info().vmem_capacity_bytes)
    except Exception:
        pass
    # Footprints are now O(tile): largest is the double-buffered weight slab
    # of the deepest transconv (~19 MiB).  40 MiB on v7x / 64 MiB elsewhere.
    return int(min(cap * 5 // 8, 64 * 1024 * 1024))


def _cparams(ndims):
    return pltpu.CompilerParams(
        dimension_semantics=("parallel",) * ndims,
        vmem_limit_bytes=_vmem_limit_bytes())


# ----------------------------------------------------------------------------
# Padded-grid (PG) activation layout
#   rows = guard tile | n * (h+2)*(w+2) padded images | tail pad | guard tile
# ----------------------------------------------------------------------------
class _PGLayout:
    def __init__(self, n, h, w):
        self.n, self.h, self.w = n, h, w
        self.hp, self.wp = h + 2, w + 2
        self.sz = self.hp * self.wp
        self.r0 = n * self.sz                    # rows of the padded images
        if self.r0 >= 1024:
            tm = 512
        elif self.r0 >= 256:
            tm = 256
        else:
            tm = _round_up(self.r0, 8)
        tm = max(tm, _round_up(self.wp + 1, 8), 8)   # halo must fit in a tile
        self.tm = tm
        self.nm = -(-self.r0 // tm)              # compute row tiles
        self.rows = (self.nm + 2) * tm           # + leading/trailing guard tile
        self.base = tm
        self.halo = _round_up(self.wp + 1, 8)    # halo rows needed by 3x3 taps
        self._mask = None

    def mask(self):
        if self._mask is None:
            m = np.zeros((self.rows, 1), np.float32)
            body = np.zeros((self.hp, self.wp), np.float32)
            body[1:-1, 1:-1] = 1.0
            m[self.base:self.base + self.r0, 0] = np.tile(body.reshape(-1), self.n)
            self._mask = jnp.asarray(m)
        return self._mask

    def taps(self):
        return tuple(dy * self.wp + dx for dy in (-1, 0, 1) for dx in (-1, 0, 1))


_LAYOUTS = {}


def get_layout(n, h, w):
    key = (n, h, w)
    if key not in _LAYOUTS:
        _LAYOUTS[key] = _PGLayout(n, h, w)
    return _LAYOUTS[key]


def nhwc_to_pg(x, L):
    C = x.shape[-1]
    x = x.astype(jnp.bfloat16)
    xp = jnp.pad(x, ((0, 0), (1, 1), (1, 1), (0, 0))).reshape(L.n * L.sz, C)
    return jnp.pad(xp, ((L.base, L.rows - L.base - L.r0), (0, 0)))


def pg_to_nhwc(x_pg, L):
    C = x_pg.shape[1]
    body = lax.slice(x_pg, (L.base, 0), (L.base + L.r0, C))
    return body.reshape(L.n, L.hp, L.wp, C)[:, 1:-1, 1:-1, :]


# ----------------------------------------------------------------------------
# Pallas kernels
# ----------------------------------------------------------------------------
def _conv_tap_kernel(*refs, n_add, tm, halo, taps):
    # Fused: halo DMA (HBM -> bf16 VMEM scratch) + 9-tap MXU matmul + bias +
    # residual adds + row mask + per-tile BN partial sums (f32).
    x_hbm, w_ref, b_ref, m_ref = refs[:4]
    add_refs = refs[4:4 + n_add]
    o_ref, sum_ref, ssq_ref, xwin, sem = refs[4 + n_add:]

    win = xwin.shape[0]
    start = pl.multiple_of((pl.program_id(0) + 1) * tm - halo, 8)
    cp = pltpu.make_async_copy(x_hbm.at[pl.ds(start, win)], xwin, sem)
    cp.start()
    cp.wait()
    # TODO(synk): prefetch the next row-tile's halo (double-buffered) once a
    # scheme that is also safe under megacore grid splitting is in place.

    cout = o_ref.shape[1]
    acc = jnp.zeros((tm, cout), jnp.float32)
    for t, off in enumerate(taps):                       # static slice starts
        lhs = xwin[pl.ds(halo + off, tm), :]
        acc = acc + jnp.dot(lhs, w_ref[t], preferred_element_type=jnp.float32)
    acc = acc + b_ref[...]
    for a_ref in add_refs:
        acc = acc + a_ref[...].astype(jnp.float32)
    out = jnp.where(m_ref[...] > 0.5, acc, 0.0)
    o_ref[...] = out.astype(o_ref.dtype)
    s = jnp.sum(out, axis=0, keepdims=True)
    ss = jnp.sum(out * out, axis=0, keepdims=True)
    sum_ref[...] = jnp.broadcast_to(s, sum_ref.shape)
    ssq_ref[...] = jnp.broadcast_to(ss, ssq_ref.shape)


def _affine_kernel(x_ref, s_ref, t_ref, m_ref, o_ref, *, relu):
    # BatchNorm apply (+ ReLU); padding ring / guard tiles forced back to zero.
    y = x_ref[...].astype(jnp.float32) * s_ref[...] + t_ref[...]
    if relu:
        y = jnp.maximum(y, 0.0)
    o_ref[...] = jnp.where(m_ref[...] > 0.5, y, 0.0).astype(o_ref.dtype)


def _channel_attn_kernel(x_ref, o_ref):
    # softmax(Z^T Z) applied back to Z, with Z = (HW, C): C stays the lane dim.
    z = x_ref[0].astype(jnp.bfloat16)                     # (HW, C)
    s = lax.dot_general(z, z, (((0,), (0,)), ((), ())),
                        preferred_element_type=jnp.float32)   # (C, C)
    s = s - jnp.max(s, axis=-1, keepdims=True)
    e = jnp.exp(s)
    attn = e * pl.reciprocal(jnp.sum(e, axis=-1, keepdims=True), approx=True)
    o_ref[0] = lax.dot_general(z, attn.astype(jnp.bfloat16),
                               (((1,), (1,)), ((), ())),
                               preferred_element_type=jnp.float32)


# ----------------------------------------------------------------------------
# Pallas wrappers
# ----------------------------------------------------------------------------
def _conv_pg_raw(x_pg, L, w_tap, bias, addends, fused):
    x_pg = x_pg.astype(jnp.bfloat16)
    rows, cin_x = x_pg.shape
    n_taps, cin_w, cout = w_tap.shape
    cout_p = _round_up(cout, 8)
    if cout_p != cout:
        w_tap = jnp.pad(w_tap, ((0, 0), (0, 0), (0, cout_p - cout)))
        bias = jnp.pad(bias, (0, cout_p - cout))
    tm, nm = L.tm, L.nm
    taps = L.taps() if fused else (0,)
    halo = L.halo if fused else 0
    win = tm + 2 * halo

    kern = functools.partial(_conv_tap_kernel, n_add=len(addends),
                             tm=tm, halo=halo, taps=taps)
    in_specs = [
        pl.BlockSpec(memory_space=pl.ANY),                           # HBM input
        pl.BlockSpec((n_taps, cin_w, cout_p), lambda i: (0, 0, 0)),
        pl.BlockSpec((1, cout_p), lambda i: (0, 0)),
        pl.BlockSpec((tm, 1), lambda i: (i + 1, 0)),
    ]
    for _ in addends:
        in_specs.append(pl.BlockSpec((tm, cout_p), lambda i: (i + 1, 0)))
    out_specs = (
        pl.BlockSpec((tm, cout_p), lambda i: (i + 1, 0)),
        pl.BlockSpec((8, cout_p), lambda i: (i, 0)),
        pl.BlockSpec((8, cout_p), lambda i: (i, 0)),
    )
    out_shape = (
        jax.ShapeDtypeStruct((rows, cout_p), jnp.bfloat16),
        jax.ShapeDtypeStruct((nm * 8, cout_p), jnp.float32),
        jax.ShapeDtypeStruct((nm * 8, cout_p), jnp.float32),
    )
    out, ps, pss = pl.pallas_call(
        kern,
        grid=(nm,),
        in_specs=in_specs,
        out_specs=out_specs,
        out_shape=out_shape,
        scratch_shapes=[pltpu.VMEM((win, cin_x), jnp.bfloat16),
                        pltpu.SemaphoreType.DMA],
        compiler_params=_cparams(1),
    )(x_pg, w_tap.astype(jnp.bfloat16),
      bias.reshape(1, cout_p).astype(jnp.float32), L.mask(), *addends)

    col_sum = ps.reshape(nm, 8, cout_p)[:, 0, :].sum(axis=0)
    col_ssq = pss.reshape(nm, 8, cout_p)[:, 0, :].sum(axis=0)
    return out, col_sum, col_ssq, cout_p


_FUSED_OK = [None]


def _fused_conv_supported():
    if _FUSED_OK[0] is None:
        try:
            L = get_layout(1, 4, 4)
            x = jnp.zeros((L.rows, 8), jnp.bfloat16)
            w = jnp.zeros((9, 8, 8), jnp.float32)
            b = jnp.zeros((8,), jnp.float32)
            o, _, _, _ = _conv_pg_raw(x, L, w, b, (), True)
            jax.block_until_ready(o)
            _FUSED_OK[0] = True
        except Exception:
            _FUSED_OK[0] = False
    return _FUSED_OK[0]


def conv_apply_pg(x_pg, L, w_tap, bias, addends=()):
    """9-tap conv (halo-streamed) with fused bias/residual adds/BN stats."""
    if _fused_conv_supported():
        return _conv_pg_raw(x_pg, L, w_tap, bias, addends, True)
    # Fallback (only if the halo-slice path fails to lower on this toolchain):
    # materialize the 9 tap columns in HBM and run a single-tap kernel.
    cin = x_pg.shape[1]
    cols = jnp.concatenate(
        [lax.slice(x_pg, (L.base + off, 0), (L.base + off + L.r0, cin))
         for off in L.taps()], axis=1)
    cols = jnp.pad(cols, ((L.base, L.rows - L.base - L.r0), (0, 0)))
    w1 = w_tap.reshape(1, 9 * cin, w_tap.shape[2])
    return _conv_pg_raw(cols, L, w1, bias, addends, False)


def bn_stats(col_sum, col_ssq, count):
    mean = col_sum / count
    var = jnp.maximum(col_ssq / count - mean * mean, 0.0)
    return mean, var


def bn_relu_pg(x_pg, L, col_sum, col_ssq, gamma, beta, count, relu=True):
    C = x_pg.shape[1]
    if gamma.shape[0] != C:
        gamma = jnp.pad(gamma, (0, C - gamma.shape[0]), constant_values=1.0)
        beta = jnp.pad(beta, (0, C - beta.shape[0]))
    mean, var = bn_stats(col_sum, col_ssq, count)
    scale = gamma / jnp.sqrt(var + 1e-5)
    shift = beta - mean * scale
    tm = L.tm
    nt = L.rows // tm                 # full grid: also zeroes the guard tiles
    return pl.pallas_call(
        functools.partial(_affine_kernel, relu=relu),
        grid=(nt,),
        in_specs=[
            pl.BlockSpec((tm, C), lambda i: (i, 0)),
            pl.BlockSpec((1, C), lambda i: (0, 0)),
            pl.BlockSpec((1, C), lambda i: (0, 0)),
            pl.BlockSpec((tm, 1), lambda i: (i, 0)),
        ],
        out_specs=pl.BlockSpec((tm, C), lambda i: (i, 0)),
        out_shape=jax.ShapeDtypeStruct((L.rows, C), jnp.bfloat16),
        compiler_params=_cparams(1),
    )(x_pg, scale.reshape(1, C).astype(jnp.float32),
      shift.reshape(1, C).astype(jnp.float32), L.mask())


def pack_conv_w(w):
    # PyTorch Conv2d weight (Cout, Cin, 3, 3) -> (9, Cin, Cout), tap = (dy, dx).
    return jnp.transpose(w, (2, 3, 1, 0)).reshape(9, w.shape[1], w.shape[0])


def conv_bn_relu_pg(x_pg, L, conv_p, bn_p, addends=()):
    out, s, ss, _ = conv_apply_pg(x_pg, L, pack_conv_w(conv_p["w"]),
                                  conv_p["b"], addends)
    count = float(L.n * L.h * L.w)
    return bn_relu_pg(out, L, s, ss, bn_p["gamma"], bn_p["beta"], count, relu=True)


# ----------------------------------------------------------------------------
# MADNet sub-modules (tiny glue ops stay in XLA on purpose)
# ----------------------------------------------------------------------------
def max_pool2(x):
    N, H, W, C = x.shape
    return x.reshape(N, H // 2, 2, W // 2, 2, C).max(axis=(2, 4))


def shift_channel_fwd(p, x):
    # SE-style FCs on a (B, 4C) vector: too small for a Pallas kernel.
    xf = x.astype(jnp.float32)
    x0 = xf[:, 0::2, 0::2, :]
    x1 = xf[:, 1::2, 0::2, :]
    x2 = xf[:, 0::2, 1::2, :]
    x3 = xf[:, 1::2, 1::2, :]
    y = jnp.concatenate([x0.mean((1, 2)), x1.mean((1, 2)),
                         x2.mean((1, 2)), x3.mean((1, 2))], axis=1)   # (B, 4C)
    w1 = p["fc1"]["w"].reshape(p["fc1"]["w"].shape[0], -1).T
    h = jax.nn.relu(y @ w1 + p["fc1"]["b"])
    w2 = p["fc2"]["w"].reshape(p["fc2"]["w"].shape[0], -1).T
    s = jax.nn.sigmoid(h @ w2 + p["fc2"]["b"])
    return xf * s[:, None, None, :]


def downsample_fwd(p, x_nhwc):
    N, H, W, _ = x_nhwc.shape
    L = get_layout(N, H, W)
    x_pg = nhwc_to_pg(x_nhwc, L)
    x1 = conv_bn_relu_pg(x_pg, L, p["conv1"], p["bn1"])
    outs = [x1]
    for i in range(3):
        adds = tuple(outs[:i])                   # dense-block residual adds
        o = conv_bn_relu_pg(outs[i], L, p["dense"]["convs"][i],
                            p["dense"]["bns"][i], adds)
        outs.append(o)
    x2 = pg_to_nhwc(outs[-1], L)
    y = shift_channel_fwd(p["c_att"], x2)
    return max_pool2(y), y


def spatial_attention_fwd(p, x_nhwc, L):
    xf = x_nhwc.astype(jnp.float32)
    g = jnp.stack([jnp.max(xf, axis=-1), jnp.mean(xf, axis=-1)], axis=-1)
    g_pg = nhwc_to_pg(g, L)
    out, s, ss, _ = conv_apply_pg(g_pg, L, pack_conv_w(p["conv"]["w"]),
                                  p["conv"]["b"])
    count = float(L.n * L.h * L.w)
    mean, var = bn_stats(s, ss, count)
    gmap = pg_to_nhwc(out, L)[..., :1].astype(jnp.float32)
    scale = p["bn"]["gamma"][0] / jnp.sqrt(var[0] + 1e-5)
    gn = (gmap - mean[0]) * scale + p["bn"]["beta"][0]
    return jax.nn.sigmoid(gn) * xf


def channel_wise_fwd(p, x_nhwc):
    N, H, W, C = x_nhwc.shape
    z = x_nhwc.reshape(N, H * W, C).astype(jnp.bfloat16)   # C = lane dim
    out = pl.pallas_call(
        _channel_attn_kernel,
        grid=(N,),
        in_specs=[pl.BlockSpec((1, H * W, C), lambda b: (b, 0, 0))],
        out_specs=pl.BlockSpec((1, H * W, C), lambda b: (b, 0, 0)),
        out_shape=jax.ShapeDtypeStruct((N, H * W, C), jnp.float32),
        compiler_params=_cparams(1),
    )(z)
    return p["gamma"] * out.reshape(N, H, W, C)


def _pack_tconv_w(w):
    # ConvTranspose2d weight (Cin, Cout, 4, 4), stride=2, padding=1 -> 9-tap
    # weight producing the 4 stride-2 sub-pixel phases as 4*Cout channels.
    cin, cout = w.shape[0], w.shape[1]
    w9 = jnp.zeros((3, 3, cin, 4 * cout), w.dtype)
    taps = {0: ((0, 1), (-1, 3)), 1: ((0, 2), (1, 0))}   # phase -> (d, k) pairs
    for a in (0, 1):
        for dy, ky in taps[a]:
            for bp in (0, 1):
                for dx, kx in taps[bp]:
                    q = (a * 2 + bp) * cout
                    w9 = w9.at[dy + 1, dx + 1, :, q:q + cout].set(w[:, :, ky, kx])
    return w9.reshape(9, cin, 4 * cout)


def upsample_fwd(p, x_pg, Lin, y_nhwc):
    cout = p["transconv"]["w"].shape[1]
    w9 = _pack_tconv_w(p["transconv"]["w"])
    bias4 = jnp.tile(p["transconv"]["b"], 4)
    t_pg, _, _, _ = conv_apply_pg(x_pg, Lin, w9, bias4)
    t = pg_to_nhwc(t_pg, Lin)[..., :4 * cout]
    N, H, W, _ = t.shape
    t = t.reshape(N, H, W, 2, 2, cout).transpose(0, 1, 3, 2, 4, 5)
    t = t.reshape(N, 2 * H, 2 * W, cout)                 # pixel shuffle
    # TODO(synk): fuse this concat into conv1 via split weight slabs (two halo
    # inputs) to drop one HBM round-trip per up level.
    xcat = jnp.concatenate([t, y_nhwc.astype(jnp.bfloat16)], axis=-1)
    Lout = get_layout(N, 2 * H, 2 * W)
    h = conv_bn_relu_pg(nhwc_to_pg(xcat, Lout), Lout, p["conv1"], p["bn1"])
    h = conv_bn_relu_pg(h, Lout, p["conv2"], p["bn2"])
    return h, Lout


def madnet_fwd(params, x_nchw):
    x = jnp.transpose(x_nchw, (0, 2, 3, 1)).astype(jnp.float32)  # NCHW -> NHWC
    skips = []
    cur = x
    for name in ("down1", "down2", "down3", "down4"):
        cur, y = downsample_fwd(params[name], cur)
        skips.append(y)

    N, H, W, _ = cur.shape
    Lb = get_layout(N, H, W)
    h = conv_bn_relu_pg(nhwc_to_pg(cur, Lb), Lb, params["conv1"], params["bn1"])
    h_nhwc = pg_to_nhwc(h, Lb)
    comb = (channel_wise_fwd(params["c_att"], h_nhwc)
            + h_nhwc.astype(jnp.float32)
            + spatial_attention_fwd(params["s_att"], h_nhwc, Lb))
    h2 = conv_bn_relu_pg(nhwc_to_pg(comb, Lb), Lb, params["conv2"], params["bn2"])

    x_pg, Lcur = h2, Lb
    for name, y in zip(("up4", "up3", "up2", "up1"), skips[::-1]):
        x_pg, Lcur = upsample_fwd(params[name], x_pg, Lcur, y)

    x1 = pg_to_nhwc(x_pg, Lcur)
    N1, H1, W1, C1 = x1.shape
    wmat = params["outconv"]["w"].reshape(params["outconv"]["w"].shape[0], C1)
    out = x1.reshape(-1, C1).astype(jnp.float32) @ wmat.T + params["outconv"]["b"]
    out = out.reshape(N1, H1, W1, -1)
    return jnp.transpose(out, (0, 3, 1, 2))               # NHWC -> NCHW


# ----------------------------------------------------------------------------
# Deterministic parameter initialization (shapes mirror the PyTorch __init__)
# ----------------------------------------------------------------------------
def init_params(key):
    cnt = [0]

    def nxt(shape, scale):
        cnt[0] += 1
        return jax.random.normal(jax.random.fold_in(key, cnt[0]), shape,
                                 jnp.float32) * scale

    def conv(cin, cout, k):
        return {"w": nxt((cout, cin, k, k), 1.0 / (cin * k * k) ** 0.5),
                "b": nxt((cout,), 0.01)}

    def tconv(cin, cout, k):
        return {"w": nxt((cin, cout, k, k), 1.0 / (cin * k * k) ** 0.5),
                "b": nxt((cout,), 0.01)}

    def bn(c):
        return {"gamma": jnp.ones((c,), jnp.float32),
                "beta": jnp.zeros((c,), jnp.float32)}

    def down(cin, cout, r, nums=3):
        return {"conv1": conv(cin, cout, 3), "bn1": bn(cout),
                "dense": {"convs": [conv(cout, cout, 3) for _ in range(nums)],
                          "bns": [bn(cout) for _ in range(nums)]},
                "c_att": {"fc1": conv(cout * 4, cout // r, 1),
                          "fc2": conv(cout // r, cout, 1)}}

    def up(cin, cout):
        return {"transconv": tconv(cin, cout, 4),
                "conv1": conv(cin, cout, 3), "bn1": bn(cout),
                "conv2": conv(cout, cout, 3), "bn2": bn(cout)}

    return {
        "down1": down(3, 32, 4), "down2": down(32, 64, 8),
        "down3": down(64, 128, 16), "down4": down(128, 256, 32),
        "conv1": conv(256, 512, 3), "bn1": bn(512),
        "conv2": conv(512, 512, 3), "bn2": bn(512),
        "up4": up(512, 256), "up3": up(256, 128),
        "up2": up(128, 64), "up1": up(64, 32),
        "outconv": conv(32, 2, 1),
        "c_att": {"gamma": jnp.zeros((1,), jnp.float32)},
        "s_att": {"conv": conv(2, 1, 3), "bn": bn(1)},
    }


if __name__ == "__main__":
    params = init_params(jax.random.PRNGKey(1))
    x = jax.random.normal(jax.random.PRNGKey(0), (2, 3, 32, 32), jnp.float32)
    out = madnet_fwd(params, x)
    out = jax.block_until_ready(out)
    assert out.shape == (2, 2, 32, 32), out.shape
    assert bool(jnp.all(jnp.isfinite(out)))
    print("KERNEL_OK")
</pallas_src>

<mosaic_0001>
module attributes {stable_mosaic.version = 11 : i64} {
  func.func @_conv_tap_kernel(%arg0: i32, %arg1: memref<120x8xbf16, #tpu.memory_space<any>>, %arg2: memref<9x8x8xbf16, #tpu.memory_space<vmem>>, %arg3: memref<1x8xf32, #tpu.memory_space<vmem>>, %arg4: memref<40x1xf32, #tpu.memory_space<vmem>>, %arg5: memref<40x8xbf16, #tpu.memory_space<vmem>>, %arg6: memref<8x8xf32, #tpu.memory_space<vmem>>, %arg7: memref<8x8xf32, #tpu.memory_space<vmem>>, %arg8: memref<56x8xbf16, #tpu.memory_space<vmem>>, %arg9: memref<!tpu.dma_semaphore, #tpu.memory_space<semaphore_mem>>) attributes {dimension_semantics = [#tpu.dimension_semantics<parallel>], iteration_bounds = array<i64: 1>, scalar_prefetch = 0 : i64, scratch_operands = 2 : i64, tpu.core_type = #tpu.core_type<tc>, window_params = [{}, {pipeline_mode = #tpu.pipeline_mode<synchronous>, transform_indices = @transform_1, window_bounds = array<i64: 9, 8, 8>}, {pipeline_mode = #tpu.pipeline_mode<synchronous>, transform_indices = @transform_2, window_bounds = array<i64: 1, 8>}, {transform_indices = @transform_3, window_bounds = array<i64: 40, 1>}, {transform_indices = @transform_4, window_bounds = array<i64: 40, 8>}, {transform_indices = @transform_5, window_bounds = array<i64: 8, 8>}, {transform_indices = @transform_6, window_bounds = array<i64: 8, 8>}]} {
    %c1_i32 = arith.constant 1 : i32
    %0 = arith.addi %arg0, %c1_i32 : i32
    %c40_i32 = arith.constant 40 : i32
    %1 = arith.muli %0, %c40_i32 : i32
    %c8_i32 = arith.constant 8 : i32
    %2 = arith.subi %1, %c8_i32 : i32
    %3 = tpu.assume_multiple %2, 8 : i32
    %c0_i32 = arith.constant 0 : i32
    %4 = tpu.memref_slice %arg1[%3, %c0_i32] : memref<120x8xbf16, #tpu.memory_space<any>> -> memref<56x8xbf16, #tpu.memory_space<any>>
    tpu.enqueue_dma source(%4 : memref<56x8xbf16, #tpu.memory_space<any>>) target(%arg8 : memref<56x8xbf16, #tpu.memory_space<vmem>>) target_semaphore(%arg9 : memref<!tpu.dma_semaphore, #tpu.memory_space<semaphore_mem>>)
    %c0_i32_0 = arith.constant 0 : i32
    %5 = tpu.memref_slice %arg1[%3, %c0_i32_0] : memref<120x8xbf16, #tpu.memory_space<any>> -> memref<56x8xbf16, #tpu.memory_space<any>>
    tpu.wait_dma2 semaphore(%arg9 : memref<!tpu.dma_semaphore, #tpu.memory_space<semaphore_mem>>) src(%5 : memref<56x8xbf16, #tpu.memory_space<any>>) dst(%arg8 : memref<56x8xbf16, #tpu.memory_space<vmem>>)
    %cst = arith.constant 0.000000e+00 : f32
    %6 = vector.broadcast %cst : f32 to vector<40x8xf32>
    %c1 = arith.constant 1 : index
    %c0 = arith.constant 0 : index
    %7 = vector.load %arg8[%c1, %c0] : memref<56x8xbf16, #tpu.memory_space<vmem>>, vector<40x8xbf16>
    %c0_1 = arith.constant 0 : index
    %c0_2 = arith.constant 0 : index
    %c0_3 = arith.constant 0 : index
    %8 = vector.load %arg2[%c0_1, %c0_2, %c0_3] : memref<9x8x8xbf16, #tpu.memory_space<vmem>>, vector<1x8x8xbf16>
    %9 = vector.shape_cast %8 : vector<1x8x8xbf16> to vector<8x8xbf16>
    %cst_4 = arith.constant dense<0.000000e+00> : vector<40x8xf32>
    %10 = tpu.matmul %7, %9, %cst_4 {dimension_numbers = #tpu.dot_dimension_numbers<[1], [0], [0], [1], [0, 0, 1, 1], [], []>} : vector<40x8xbf16>, vector<8x8xbf16>, vector<40x8xf32> -> vector<40x8xf32>
    %11 = arith.addf %6, %10 : vector<40x8xf32>
    %c2 = arith.constant 2 : index
    %c0_5 = arith.constant 0 : index
    %12 = vector.load %arg8[%c2, %c0_5] : memref<56x8xbf16, #tpu.memory_space<vmem>>, vector<40x8xbf16>
    %c1_6 = arith.constant 1 : index
    %c0_7 = arith.constant 0 : index
    %c0_8 = arith.constant 0 : index
    %13 = vector.load %arg2[%c1_6, %c0_7, %c0_8] : memref<9x8x8xbf16, #tpu.memory_space<vmem>>, vector<1x8x8xbf16>
    %14 = vector.shape_cast %13 : vector<1x8x8xbf16> to vector<8x8xbf16>
    %cst_9 = arith.constant dense<0.000000e+00> : vector<40x8xf32>
    %15 = tpu.matmul %12, %14, %cst_9 {dimension_numbers = #tpu.dot_dimension_numbers<[1], [0], [0], [1], [0, 0, 1, 1], [], []>} : vector<40x8xbf16>, vector<8x8xbf16>, vector<40x8xf32> -> vector<40x8xf32>
    %16 = arith.addf %11, %15 : vector<40x8xf32>
    %c3 = arith.constant 3 : index
    %c0_10 = arith.constant 0 : index
    %17 = vector.load %arg8[%c3, %c0_10] : memref<56x8xbf16, #tpu.memory_space<vmem>>, vector<40x8xbf16>
    %c2_11 = arith.constant 2 : index
    %c0_12 = arith.constant 0 : index
    %c0_13 = arith.constant 0 : index
    %18 = vector.load %arg2[%c2_11, %c0_12, %c0_13] : memref<9x8x8xbf16, #tpu.memory_space<vmem>>, vector<1x8x8xbf16>
    %19 = vector.shape_cast %18 : vector<1x8x8xbf16> to vector<8x8xbf16>
    %cst_14 = arith.constant dense<0.000000e+00> : vector<40x8xf32>
    %20 = tpu.matmul %17, %19, %cst_14 {dimension_numbers = #tpu.dot_dimension_numbers<[1], [0], [0], [1], [0, 0, 1, 1], [], []>} : vector<40x8xbf16>, vector<8x8xbf16>, vector<40x8xf32> -> vector<40x8xf32>
    %21 = arith.addf %16, %20 : vector<40x8xf32>
    %c7 = arith.constant 7 : index
    %c0_15 = arith.constant 0 : index
    %22 = vector.load %arg8[%c7, %c0_15] : memref<56x8xbf16, #tpu.memory_space<vmem>>, vector<40x8xbf16>
    %c3_16 = arith.constant 3 : index
    %c0_17 = arith.constant 0 : index
    %c0_18 = arith.constant 0 : index
    %23 = vector.load %arg2[%c3_16, %c0_17, %c0_18] : memref<9x8x8xbf16, #tpu.memory_space<vmem>>, vector<1x8x8xbf16>
    %24 = vector.shape_cast %23 : vector<1x8x8xbf16> to vector<8x8xbf16>
    %cst_19 = arith.constant dense<0.000000e+00> : vector<40x8xf32>
    %25 = tpu.matmul %22, %24, %cst_19 {dimension_numbers = #tpu.dot_dimension_numbers<[1], [0], [0], [1], [0, 0, 1, 1], [], []>} : vector<40x8xbf16>, vector<8x8xbf16>, vector<40x8xf32> -> vector<40x8xf32>
    %26 = arith.addf %21, %25 : vector<40x8xf32>
    %c8 = arith.constant 8 : index
    %c0_20 = arith.constant 0 : index
    %27 = vector.load %arg8[%c8, %c0_20] : memref<56x8xbf16, #tpu.memory_space<vmem>>, vector<40x8xbf16>
    %c4 = arith.constant 4 : index
    %c0_21 = arith.constant 0 : index
    %c0_22 = arith.constant 0 : index
    %28 = vector.load %arg2[%c4, %c0_21, %c0_22] : memref<9x8x8xbf16, #tpu.memory_space<vmem>>, vector<1x8x8xbf16>
    %29 = vector.shape_cast %28 : vector<1x8x8xbf16> to vector<8x8xbf16>
    %cst_23 = arith.constant dense<0.000000e+00> : vector<40x8xf32>
    %30 = tpu.matmul %27, %29, %cst_23 {dimension_numbers = #tpu.dot_dimension_numbers<[1], [0], [0], [1], [0, 0, 1, 1], [], []>} : vector<40x8xbf16>, vector<8x8xbf16>, vector<40x8xf32> -> vector<40x8xf32>
    %31 = arith.addf %26, %30 : vector<40x8xf32>
    %c9 = arith.constant 9 : index
    %c0_24 = arith.constant 0 : index
    %32 = vector.load %arg8[%c9, %c0_24] : memref<56x8xbf16, #tpu.memory_space<vmem>>, vector<40x8xbf16>
    %c5 = arith.constant 5 : index
    %c0_25 = arith.constant 0 : index
    %c0_26 = arith.constant 0 : index
    %33 = vector.load %arg2[%c5, %c0_25, %c0_26] : memref<9x8x8xbf16, #tpu.memory_space<vmem>>, vector<1x8x8xbf16>
    %34 = vector.shape_cast %33 : vector<1x8x8xbf16> to vector<8x8xbf16>
    %cst_27 = arith.constant dense<0.000000e+00> : vector<40x8xf32>
    %35 = tpu.matmul %32, %34, %cst_27 {dimension_numbers = #tpu.dot_dimension_numbers<[1], [0], [0], [1], [0, 0, 1, 1], [], []>} : vector<40x8xbf16>, vector<8x8xbf16>, vector<40x8xf32> -> vector<40x8xf32>
    %36 = arith.addf %31, %35 : vector<40x8xf32>
    %c13 = arith.constant 13 : index
    %c0_28 = arith.constant 0 : index
    %37 = vector.load %arg8[%c13, %c0_28] : memref<56x8xbf16, #tpu.memory_space<vmem>>, vector<40x8xbf16>
    %c6 = arith.constant 6 : index
    %c0_29 = arith.constant 0 : index
    %c0_30 = arith.constant 0 : index
    %38 = vector.load %arg2[%c6, %c0_29, %c0_30] : memref<9x8x8xbf16, #tpu.memory_space<vmem>>, vector<1x8x8xbf16>
    %39 = vector.shape_cast %38 : vector<1x8x8xbf16> to vector<8x8xbf16>
    %cst_31 = arith.constant dense<0.000000e+00> : vector<40x8xf32>
    %40 = tpu.matmul %37, %39, %cst_31 {dimension_numbers = #tpu.dot_dimension_numbers<[1], [0], [0], [1], [0, 0, 1, 1], [], []>} : vector<40x8xbf16>, vector<8x8xbf16>, vector<40x8xf32> -> vector<40x8xf32>
    %41 = arith.addf %36, %40 : vector<40x8xf32>
    %c14 = arith.constant 14 : index
    %c0_32 = arith.constant 0 : index
    %42 = vector.load %arg8[%c14, %c0_32] : memref<56x8xbf16, #tpu.memory_space<vmem>>, vector<40x8xbf16>
    %c7_33 = arith.constant 7 : index
    %c0_34 = arith.constant 0 : index
    %c0_35 = arith.constant 0 : index
    %43 = vector.load %arg2[%c7_33, %c0_34, %c0_35] : memref<9x8x8xbf16, #tpu.memory_space<vmem>>, vector<1x8x8xbf16>
    %44 = vector.shape_cast %43 : vector<1x8x8xbf16> to vector<8x8xbf16>
    %cst_36 = arith.constant dense<0.000000e+00> : vector<40x8xf32>
    %45 = tpu.matmul %42, %44, %cst_36 {dimension_numbers = #tpu.dot_dimension_numbers<[1], [0], [0], [1], [0, 0, 1, 1], [], []>} : vector<40x8xbf16>, vector<8x8xbf16>, vector<40x8xf32> -> vector<40x8xf32>
    %46 = arith.addf %41, %45 : vector<40x8xf32>
    %c15 = arith.constant 15 : index
    %c0_37 = arith.constant 0 : index
    %47 = vector.load %arg8[%c15, %c0_37] : memref<56x8xbf16, #tpu.memory_space<vmem>>, vector<40x8xbf16>
    %c8_38 = arith.constant 8 : index
    %c0_39 = arith.constant 0 : index
    %c0_40 = arith.constant 0 : index
    %48 = vector.load %arg2[%c8_38, %c0_39, %c0_40] : memref<9x8x8xbf16, #tpu.memory_space<vmem>>, vector<1x8x8xbf16>
    %49 = vector.shape_cast %48 : vector<1x8x8xbf16> to vector<8x8xbf16>
    %cst_41 = arith.constant dense<0.000000e+00> : vector<40x8xf32>
    %50 = tpu.matmul %47, %49, %cst_41 {dimension_numbers = #tpu.dot_dimension_numbers<[1], [0], [0], [1], [0, 0, 1, 1], [], []>} : vector<40x8xbf16>, vector<8x8xbf16>, vector<40x8xf32> -> vector<40x8xf32>
    %51 = arith.addf %46, %50 : vector<40x8xf32>
    %c0_42 = arith.constant 0 : index
    %c0_43 = arith.constant 0 : index
    %52 = vector.load %arg3[%c0_42, %c0_43] : memref<1x8xf32, #tpu.memory_space<vmem>>, vector<1x8xf32>
    %53 = vector.broadcast %52 : vector<1x8xf32> to vector<40x8xf32>
    %54 = arith.addf %51, %53 : vector<40x8xf32>
    %c0_44 = arith.constant 0 : index
    %c0_45 = arith.constant 0 : index
    %55 = vector.load %arg4[%c0_44, %c0_45] : memref<40x1xf32, #tpu.memory_space<vmem>>, vector<40x1xf32>
    %cst_46 = arith.constant 5.000000e-01 : f32
    %56 = vector.broadcast %cst_46 : f32 to vector<40x1xf32>
    %57 = arith.cmpf ogt, %55, %56 : vector<40x1xf32>
    %cst_47 = arith.constant 0.000000e+00 : f32
    %58 = vector.shape_cast %57 : vector<40x1xi1> to vector<40x1xi1>
    %59 = vector.broadcast %58 : vector<40x1xi1> to vector<40x8xi1>
    %60 = vector.broadcast %cst_47 : f32 to vector<40x8xf32>
    %61 = arith.select %59, %54, %60 : vector<40x8xi1>, vector<40x8xf32>
    %62 = arith.truncf %61 : vector<40x8xf32> to vector<40x8xbf16>
    %c0_48 = arith.constant 0 : index
    %c0_49 = arith.constant 0 : index
    %63 = vector.load %arg5[%c0_48, %c0_49] : memref<40x8xbf16, #tpu.memory_space<vmem>>, vector<40x8xbf16>
    tpu.vector_store %arg5[%c0_48, %c0_49], %62 {strides = array<i32>} : memref<40x8xbf16, #tpu.memory_space<vmem>>, vector<40x8xbf16>,
    %cst_50 = arith.constant dense<0.000000e+00> : vector<8xf32>
    %64 = vector.multi_reduction <add>, %61, %cst_50 [0] : vector<40x8xf32> to vector<8xf32>
    %65 = vector.shape_cast %64 : vector<8xf32> to vector<1x8xf32>
    %66 = arith.mulf %61, %61 : vector<40x8xf32>
    %cst_51 = arith.constant dense<0.000000e+00> : vector<8xf32>
    %67 = vector.multi_reduction <add>, %66, %cst_51 [0] : vector<40x8xf32> to vector<8xf32>
    %68 = vector.shape_cast %67 : vector<8xf32> to vector<1x8xf32>
    %69 = vector.shape_cast %65 : vector<1x8xf32> to vector<1x8xf32>
    %70 = vector.broadcast %69 : vector<1x8xf32> to vector<8x8xf32>
    %c0_52 = arith.constant 0 : index
    %c0_53 = arith.constant 0 : index
    %71 = vector.load %arg6[%c0_52, %c0_53] : memref<8x8xf32, #tpu.memory_space<vmem>>, vector<8x8xf32>
    tpu.vector_store %arg6[%c0_52, %c0_53], %70 {strides = array<i32>} : memref<8x8xf32, #tpu.memory_space<vmem>>, vector<8x8xf32>,
    %72 = vector.shape_cast %68 : vector<1x8xf32> to vector<1x8xf32>
    %73 = vector.broadcast %72 : vector<1x8xf32> to vector<8x8xf32>
    %c0_54 = arith.constant 0 : index
    %c0_55 = arith.constant 0 : index
    %74 = vector.load %arg7[%c0_54, %c0_55] : memref<8x8xf32, #tpu.memory_space<vmem>>, vector<8x8xf32>
    tpu.vector_store %arg7[%c0_54, %c0_55], %73 {strides = array<i32>} : memref<8x8xf32, #tpu.memory_space<vmem>>, vector<8x8xf32>,
    return
  }
  func.func @transform_1(%arg0: i32) -> (i32, i32, i32) {
    %c0_i32 = arith.constant 0 : i32
    %c0_i32_0 = arith.constant 0 : i32
    %c0_i32_1 = arith.constant 0 : i32
    %c0_i32_2 = arith.constant 0 : i32
    return %c0_i32, %c0_i32_0, %c0_i32_1 : i32, i32, i32
  }
  func.func @transform_2(%arg0: i32) -> (i32, i32) {
    %c0_i32 = arith.constant 0 : i32
    %c0_i32_0 = arith.constant 0 : i32
    %c0_i32_1 = arith.constant 0 : i32
    return %c0_i32, %c0_i32_0 : i32, i32
  }
  func.func @transform_3(%arg0: i32) -> (i32, i32) {
    %c1_i32 = arith.constant 1 : i32
    %0 = arith.addi %arg0, %c1_i32 : i32
    %c0_i32 = arith.constant 0 : i32
    %c0_i32_0 = arith.constant 0 : i32
    return %0, %c0_i32 : i32, i32
  }
  func.func @transform_4(%arg0: i32) -> (i32, i32) {
    %c1_i32 = arith.constant 1 : i32
    %0 = arith.addi %arg0, %c1_i32 : i32
    %c0_i32 = arith.constant 0 : i32
    %c0_i32_0 = arith.constant 0 : i32
    return %0, %c0_i32 : i32, i32
  }
  func.func @transform_5(%arg0: i32) -> (i32, i32) {
    %c0_i32 = arith.constant 0 : i32
    %c0_i32_0 = arith.constant 0 : i32
    return %arg0, %c0_i32 : i32, i32
  }
  func.func @transform_6(%arg0: i32) -> (i32, i32) {
    %c0_i32 = arith.constant 0 : i32
    %c0_i32_0 = arith.constant 0 : i32
    return %arg0, %c0_i32 : i32, i32
  }
}

module attributes {stable_mosaic.version = 11 : i64} {
  func.func @_conv_tap_kernel(%arg0: i32, %arg1: memref<3584x27xbf16, #tpu.memory_space<any>>, %arg2: memref<1x27x32xbf16, #tpu.memory_space<vmem>>, %arg3: memref<1x32xf32, #tpu.memory_space<vmem>>, %arg4: memref<512x1xf32, #tpu.memory_space<vmem>>, %arg5: memref<512x32xbf16, #tpu.memory_space<vmem>>, %arg6: memref<8x32xf32, #tpu.memory_space<vmem>>, %arg7: memref<8x32xf32, #tpu.memory_space<vmem>>, %arg8: memref<512x27xbf16, #tpu.memory_space<vmem>>, %arg9: memref<!tpu.dma_semaphore, #tpu.memory_space<semaphore_mem>>) attributes {dimension_semantics = [#tpu.dimension_semantics<parallel>], iteration_bounds = array<i64: 5>, scalar_prefetch = 0 : i64, scratch_operands = 2 : i64, tpu.core_type = #tpu.core_type<tc>, window_params = [{}, {pipeline_mode = #tpu.pipeline_mode<synchronous>, transform_indices = @transform_1, window_bounds = array<i64: 1, 27, 32>}, {pipeline_mode = #tpu.pipeline_mode<synchronous>, transform_indices = @transform_2, window_bounds = array<i64: 1, 32>}, {transform_indices = @transform_3, window_bounds = array<i64: 512, 1>}, {transform_indices = @transform_4, window_bounds = array<i64: 512, 32>}, {transform_indices = @transform_5, window_bounds = array<i64: 8, 32>}, {transform_indices = @transform_6, window_bounds = array<i64: 8, 32>}]} {
    %c1_i32 = arith.constant 1 : i32
    %0 = arith.addi %arg0, %c1_i32 : i32
    %c512_i32 = arith.constant 512 : i32
    %1 = arith.muli %0, %c512_i32 : i32
    %c0_i32 = arith.constant 0 : i32
    %2 = arith.subi %1, %c0_i32 : i32
    %3 = tpu.assume_multiple %2, 8 : i32
    %c0_i32_0 = arith.constant 0 : i32
    %4 = tpu.memref_slice %arg1[%3, %c0_i32_0] : memref<3584x27xbf16, #tpu.memory_space<any>> -> memref<512x27xbf16, #tpu.memory_space<any>>
    tpu.enqueue_dma source(%4 : memref<512x27xbf16, #tpu.memory_space<any>>) target(%arg8 : memref<512x27xbf16, #tpu.memory_space<vmem>>) target_semaphore(%arg9 : memref<!tpu.dma_semaphore, #tpu.memory_space<semaphore_mem>>)
    %c0_i32_1 = arith.constant 0 : i32
    %5 = tpu.memref_slice %arg1[%3, %c0_i32_1] : memref<3584x27xbf16, #tpu.memory_space<any>> -> memref<512x27xbf16, #tpu.memory_space<any>>
    tpu.wait_dma2 semaphore(%arg9 : memref<!tpu.dma_semaphore, #tpu.memory_space<semaphore_mem>>) src(%5 : memref<512x27xbf16, #tpu.memory_space<any>>) dst(%arg8 : memref<512x27xbf16, #tpu.memory_space<vmem>>)
    %cst = arith.constant 0.000000e+00 : f32
    %6 = vector.broadcast %cst : f32 to vector<512x32xf32>
    %c0 = arith.constant 0 : index
    %c0_2 = arith.constant 0 : index
    %7 = vector.load %arg8[%c0, %c0_2] : memref<512x27xbf16, #tpu.memory_space<vmem>>, vector<512x27xbf16>
    %c0_3 = arith.constant 0 : index
    %c0_4 = arith.constant 0 : index
    %c0_5 = arith.constant 0 : index
    %8 = vector.load %arg2[%c0_3, %c0_4, %c0_5] : memref<1x27x32xbf16, #tpu.memory_space<vmem>>, vector<1x27x32xbf16>
    %9 = vector.shape_cast %8 : vector<1x27x32xbf16> to vector<27x32xbf16>
    %cst_6 = arith.constant dense<0.000000e+00> : vector<512x32xf32>
    %10 = tpu.matmul %7, %9, %cst_6 {dimension_numbers = #tpu.dot_dimension_numbers<[1], [0], [0], [1], [0, 0, 1, 1], [], []>} : vector<512x27xbf16>, vector<27x32xbf16>, vector<512x32xf32> -> vector<512x32xf32>
    %11 = arith.addf %6, %10 : vector<512x32xf32>
    %c0_7 = arith.constant 0 : index
    %c0_8 = arith.constant 0 : index
    %12 = vector.load %arg3[%c0_7, %c0_8] : memref<1x32xf32, #tpu.memory_space<vmem>>, vector<1x32xf32>
    %13 = vector.broadcast %12 : vector<1x32xf32> to vector<512x32xf32>
    %14 = arith.addf %11, %13 : vector<512x32xf32>
    %c0_9 = arith.constant 0 : index
    %c0_10 = arith.constant 0 : index
    %15 = vector.load %arg4[%c0_9, %c0_10] : memref<512x1xf32, #tpu.memory_space<vmem>>, vector<512x1xf32>
    %cst_11 = arith.constant 5.000000e-01 : f32
    %16 = vector.broadcast %cst_11 : f32 to vector<512x1xf32>
    %17 = arith.cmpf ogt, %15, %16 : vector<512x1xf32>
    %cst_12 = arith.constant 0.000000e+00 : f32
    %18 = vector.shape_cast %17 : vector<512x1xi1> to vector<512x1xi1>
    %19 = vector.broadcast %18 : vector<512x1xi1> to vector<512x32xi1>
    %20 = vector.broadcast %cst_12 : f32 to vector<512x32xf32>
    %21 = arith.select %19, %14, %20 : vector<512x32xi1>, vector<512x32xf32>
    %22 = arith.truncf %21 : vector<512x32xf32> to vector<512x32xbf16>
    %c0_13 = arith.constant 0 : index
    %c0_14 = arith.constant 0 : index
    %23 = vector.load %arg5[%c0_13, %c0_14] : memref<512x32xbf16, #tpu.memory_space<vmem>>, vector<512x32xbf16>
    tpu.vector_store %arg5[%c0_13, %c0_14], %22 {strides = array<i32>} : memref<512x32xbf16, #tpu.memory_space<vmem>>, vector<512x32xbf16>,
    %cst_15 = arith.constant dense<0.000000e+00> : vector<32xf32>
    %24 = vector.multi_reduction <add>, %21, %cst_15 [0] : vector<512x32xf32> to vector<32xf32>
    %25 = vector.shape_cast %24 : vector<32xf32> to vector<1x32xf32>
    %26 = arith.mulf %21, %21 : vector<512x32xf32>
    %cst_16 = arith.constant dense<0.000000e+00> : vector<32xf32>
    %27 = vector.multi_reduction <add>, %26, %cst_16 [0] : vector<512x32xf32> to vector<32xf32>
    %28 = vector.shape_cast %27 : vector<32xf32> to vector<1x32xf32>
    %29 = vector.shape_cast %25 : vector<1x32xf32> to vector<1x32xf32>
    %30 = vector.broadcast %29 : vector<1x32xf32> to vector<8x32xf32>
    %c0_17 = arith.constant 0 : index
    %c0_18 = arith.constant 0 : index
    %31 = vector.load %arg6[%c0_17, %c0_18] : memref<8x32xf32, #tpu.memory_space<vmem>>, vector<8x32xf32>
    tpu.vector_store %arg6[%c0_17, %c0_18], %30 {strides = array<i32>} : memref<8x32xf32, #tpu.memory_space<vmem>>, vector<8x32xf32>,
    %32 = vector.shape_cast %28 : vector<1x32xf32> to vector<1x32xf32>
    %33 = vector.broadcast %32 : vector<1x32xf32> to vector<8x32xf32>
    %c0_19 = arith.constant 0 : index
    %c0_20 = arith.constant 0 : index
    %34 = vector.load %arg7[%c0_19, %c0_20] : memref<8x32xf32, #tpu.memory_space<vmem>>, vector<8x32xf32>
    tpu.vector_store %arg7[%c0_19, %c0_20], %33 {strides = array<i32>} : memref<8x32xf32, #tpu.memory_space<vmem>>, vector<8x32xf32>,
    return
  }
  func.func @transform_1(%arg0: i32) -> (i32, i32, i32) {
    %c0_i32 = arith.constant 0 : i32
    %c0_i32_0 = arith.constant 0 : i32
    %c0_i32_1 = arith.constant 0 : i32
    %c0_i32_2 = arith.constant 0 : i32
    return %c0_i32, %c0_i32_0, %c0_i32_1 : i32, i32, i32
  }
  func.func @transform_2(%arg0: i32) -> (i32, i32) {
    %c0_i32 = arith.constant 0 : i32
    %c0_i32_0 = arith.constant 0 : i32
    %c0_i32_1 = arith.constant 0 : i32
    return %c0_i32, %c0_i32_0 : i32, i32
  }
  func.func @transform_3(%arg0: i32) -> (i32, i32) {
    %c1_i32 = arith.constant 1 : i32
    %0 = arith.addi %arg0, %c1_i32 : i32
    %c0_i32 = arith.constant 0 : i32
    %c0_i32_0 = arith.constant 0 : i32
    return %0, %c0_i32 : i32, i32
  }
  func.func @transform_4(%arg0: i32) -> (i32, i32) {
    %c1_i32 = arith.constant 1 : i32
    %0 = arith.addi %arg0, %c1_i32 : i32
    %c0_i32 = arith.constant 0 : i32
    %c0_i32_0 = arith.constant 0 : i32
    return %0, %c0_i32 : i32, i32
  }
  func.func @transform_5(%arg0: i32) -> (i32, i32) {
    %c0_i32 = arith.constant 0 : i32
    %c0_i32_0 = arith.constant 0 : i32
    return %arg0, %c0_i32 : i32, i32
  }
  func.func @transform_6(%arg0: i32) -> (i32, i32) {
    %c0_i32 = arith.constant 0 : i32
    %c0_i32_0 = arith.constant 0 : i32
    return %arg0, %c0_i32 : i32, i32
  }
}

</mosaic_0001>

<llo_original>
// kernel: tpu_custom_call.1
$region0: #{tpu_custom_call.1}
  #allocation0 [shape = 'u32[]', space=smem, size = 0x4, offset = 0x4, fixed_abs, tag = 'smem constant byte address 0x4 - core index']
  #allocation1 [shape = 'u32[144,128]{1,0:T(1,128)}', space=vmem, size = 0x12000, scoped, tag = 'internal scratch']
  #allocation2 [shape = 'bf16[56,8]{1,0:T(8,128)(2,1)}', space=vmem, size = 0x3800, scoped, tag = 'scratch operand']
  #allocation3 [shape = 's32[1]{0}', space=sflag, size = 0x4, scoped, tag = 'scratch operand']
  #allocation8 [shape = 's32[]', space=sflag, size = 0x4, offset = 0, fixed_abs, tag = 'sflag constant byte address 0x0 - dummy sync flag']
  %s0 = inlined_call_operand.vmem [shape: bf16[120,8], index: 0, kind: input, shape index: {}]
  %s1 = inlined_call_operand.vmem [shape: bf16[9,8,8], index: 1, kind: input, shape index: {}]
  %s2 = inlined_call_operand.vmem [shape: f32[1,8], index: 2, kind: input, shape index: {}]
  %s3 = inlined_call_operand.vmem [shape: f32[120,1], index: 3, kind: input, shape index: {}]
  %s4 = inlined_call_operand.vmem [shape: bf16[120,8], index: 4, kind: output, shape index: {0}]
  %s5 = inlined_call_operand.hbm [shape: f32[8,8], index: 5, kind: output, shape index: {1}]
  %s6 = inlined_call_operand.hbm [shape: f32[8,8], index: 6, kind: output, shape index: {2}]
  %7 = xla_tuple %s4, %s5, %s6
  %s8 = sld [smem:[#allocation0]]
  $region75: #{tpu_custom_call.1} parent=0
    _
  %s10 = ssub.s32 1, %s8
  %s11 = scalar_select 0, %s10, %s8
  $region1: #{tpu_custom_call.1} parent=0
    #allocation4 [shape = 'u8[4096]{0}', space=vmem, size = 0x1000, scoped, tag = 'output window, operand 1, single buffered']
    #allocation5 [shape = 's32[1]{0}', space=sflag, size = 0x4, scoped, tag = 'scoped memory for tpu_custom_call.1']
    #allocation6 [shape = 'u8[4096]{0}', space=vmem, size = 0x1000, scoped, tag = 'output window, operand 2, single buffered']
    #allocation7 [shape = 's32[1]{0}', space=sflag, size = 0x4, scoped, tag = 'scoped memory for tpu_custom_call.1']
    %12 = vsyncpa [#allocation5], 0
    %13 = vsyncpa [#allocation7], 0
    // Predicated region
    $region2: #{tpu_custom_call.1} parent=1 // pred_check
      _
    $region3: #{tpu_custom_call.1} parent=1 // pred_check_branch
      %15 = sbr.rel (0) target = $region5
    $region4: #{tpu_custom_call.1} parent=1 // pred_region
      _
    $region5: #{tpu_custom_call.1} parent=1 // pred_fallthru
      _
    // Predicated region
    $region6: #{tpu_custom_call.1} parent=1 // pred_check
      _
    $region7: #{tpu_custom_call.1} parent=1 // pred_check_branch
      %17 = sbr.rel (0) target = $region9
    $region8: #{tpu_custom_call.1} parent=1 // pred_region
      _
    $region9: #{tpu_custom_call.1} parent=1 // pred_fallthru
      _
    // Predicated region
    $region10: #{tpu_custom_call.1} parent=1 // pred_check
      _
    $region11: #{tpu_custom_call.1} parent=1 // pred_check_branch
      %19 = sbr.rel (0) target = $region13
    $region12: #{tpu_custom_call.1} parent=1 // pred_region
      %s20 = sadd.s32 0, 1
      %s21 = smul.u32 5, %s20
      %p22 = scmp.lt.s32.totalorder %s21, 14
      %s23 = scalar_select %p22, %s21, 14
      %s24 = smul.addr %s23, 8
      %s25 = scalar_lea.vmem %s3, %s24
      %s26 = sadd.s32 0, 1
      %s27 = smul.u32 5, %s26
    $region13: #{tpu_custom_call.1} parent=1 // pred_fallthru
      _
    %s28 = sadd.s32 0, 1
    %s29 = smul.u32 5, %s28
    %p30 = scmp.lt.s32.totalorder %s29, 14
    %s31 = scalar_select %p30, %s29, 14
    %s32 = smul.addr %s31, 8
    %s33 = scalar_lea.vmem %s3, %s32
    %s34 = sadd.s32 0, 1
    %s35 = smul.u32 5, %s34
    %p36 = scmp.lt.s32.totalorder %s35, 14
    %s37 = scalar_select %p36, %s35, 14
    %s38 = smul.addr %s37, 4
    %s39 = scalar_lea.vmem %s4, %s38
    %s40 = sadd.s32 0, 1
    %s41 = smul.u32 5, %s40
    %p42 = scmp.lt.s32.totalorder %s41, 14
    %s43 = scalar_select %p42, %s41, 14
    %s44 = smul.addr %s43, 8
    %s45 = scalar_lea.vmem %s3, %s44
    %s46 = sadd.s32 0, 1
    %s47 = smul.u32 5, %s46
    %s48 = sadd.s32 0, 1
    %s49 = smul.u32 5, %s48
    %p50 = scmp.lt.s32.totalorder %s49, 14
    %s51 = scalar_select %p50, %s49, 14
    %s52 = smul.addr %s51, 4
    %s53 = scalar_lea.vmem %s4, %s52
    %s54 = sadd.s32 0, 1
    %s55 = smul.u32 5, %s54
    %s57 = sadd.s32 0, 1
    %s58 = smul.u32 %s57, 40
    %s59 = ssub.s32 %s58, 8
    %s60 = sshra.s32 %s59, 3
    %s61 = sand.u32 %s59, 7
    %s62 = smul.addr %s60, 4
    %s63 = scalar_lea.vmem %s0, %s62
    %p65 = scmp.lt.u32.totalorder 28, 8
    %p66 = pneg %p65
    // Predicated region
    $region14: #{tpu_custom_call.1} parent=1 // pred_check
      _
    $region15: #{tpu_custom_call.1} parent=1 // pred_check_branch
      %68 = sbr.rel (%p65) target = $region17
    $region16: #{tpu_custom_call.1} parent=1 // pred_region
      %s84 = sand.u32 28, 7
      %p85 = scmp.eq.s32.totalorder %s84, 0
      %p86 = pneg %p85
      // Predicated region
      $region29: #{tpu_custom_call.1} parent=16 // pred_check
        _
      $region30: #{tpu_custom_call.1} parent=16 // pred_check_branch
        %88 = sbr.rel (%p85) target = $region32
      $region31: #{tpu_custom_call.1} parent=16 // pred_region
        %s89 = sand.u32 28, 7
        %s90 = ssub.s32 28, %s89
        %s91 = scalar_lea.vmem %s63, %s90
        %s92 = ssub.s32 28, %s89
        %s93 = scalar_lea.vmem [#allocation2], %s92
        loop: start=0, step=1, limit=1
        $region33: #{tpu_custom_call.1} parent=31 // loop_pre_header
          _
        $region34: #{tpu_custom_call.1} parent=31 // loop_header
          %s95 = sphi 0, %s99
          %p96 = scmp.ge.s32.totalorder %s95, 1
          %s100 = sphi %s63, %s63
          %s101 = sphi [#allocation2], [#allocation2]
        $region35: #{tpu_custom_call.1} parent=31 // loop_header_branch
          %98 = sbr.rel (%p96) target = $region39
        $region36: #{tpu_custom_call.1} parent=31 // loop_body
          %v102 = vld [vmem:[%s100] sm:$0xff]
          %103 = vst [vmem:[%s101] sm:$0xff] %v102
          %v104 = vld [vmem:[%s100 + $0x8] sm:$0xff]
          %105 = vst [vmem:[%s101 + $0x8] sm:$0xff] %v104
          %v106 = vld [vmem:[%s100 + $0x10] sm:$0xff]
          %107 = vst [vmem:[%s101 + $0x10] sm:$0xff] %v106
        $region37: #{tpu_custom_call.1} parent=31 // loop_footer
          %s99 = sadd.s32 1, %s95
        $region38: #{tpu_custom_call.1} parent=31 // loop_footer_branch
          %94 = sbr.rel target = $region34
        $region39: #{tpu_custom_call.1} parent=31 // loop_exit
          _
        %s108 = sshll.u32 1, %s89
        %s109 = ssub.s32 %s108, 1
        loop: start=0, step=1, limit=1
        $region40: #{tpu_custom_call.1} parent=31 // loop_pre_header
          _
        $region41: #{tpu_custom_call.1} parent=31 // loop_header
          %s111 = sphi 0, %s115
          %p112 = scmp.ge.s32.totalorder %s111, 1
          %s116 = sphi %s91, %s91
          %s117 = sphi %s93, %s93
        $region42: #{tpu_custom_call.1} parent=31 // loop_header_branch
          %114 = sbr.rel (%p112) target = $region46
        $region43: #{tpu_custom_call.1} parent=31 // loop_body
          %v118 = vld [vmem:[%s116] sm:%s109]
          %119 = vst [vmem:[%s117] sm:%s109] %v118
        $region44: #{tpu_custom_call.1} parent=31 // loop_footer
          %s115 = sadd.s32 1, %s111
        $region45: #{tpu_custom_call.1} parent=31 // loop_footer_branch
          %110 = sbr.rel target = $region41
        $region46: #{tpu_custom_call.1} parent=31 // loop_exit
          _
      $region32: #{tpu_custom_call.1} parent=16 // pred_fallthru
        _
    $region17: #{tpu_custom_call.1} parent=1 // pred_fallthru
      _
    // Predicated region
    $region18: #{tpu_custom_call.1} parent=1 // pred_check
      %p69 = pneg %p65
    $region19: #{tpu_custom_call.1} parent=1 // pred_check_branch
      %71 = sbr.rel (%p69) target = $region21
    $region20: #{tpu_custom_call.1} parent=1 // pred_region
      %s72 = sshll.u32 1, 28
      %s73 = ssub.s32 %s72, 1
      loop: start=0, step=1, limit=1
      $region22: #{tpu_custom_call.1} parent=20 // loop_pre_header
        _
      $region23: #{tpu_custom_call.1} parent=20 // loop_header
        %s75 = sphi 0, %s79
        %p76 = scmp.ge.s32.totalorder %s75, 1
        %s80 = sphi %s63, %s63
        %s81 = sphi [#allocation2], [#allocation2]
      $region24: #{tpu_custom_call.1} parent=20 // loop_header_branch
        %78 = sbr.rel (%p76) target = $region28
      $region25: #{tpu_custom_call.1} parent=20 // loop_body
        %v82 = vld [vmem:[%s80] sm:%s73]
        %83 = vst [vmem:[%s81] sm:%s73] %v82
      $region26: #{tpu_custom_call.1} parent=20 // loop_footer
        %s79 = sadd.s32 1, %s75
      $region27: #{tpu_custom_call.1} parent=20 // loop_footer_branch
        %74 = sbr.rel target = $region23
      $region28: #{tpu_custom_call.1} parent=20 // loop_exit
        _
    $region21: #{tpu_custom_call.1} parent=1 // pred_fallthru
      _
    // Predicated region
    $region47: #{tpu_custom_call.1} parent=1 // pred_check
      _
    $region48: #{tpu_custom_call.1} parent=1 // pred_check_branch
      %122 = sbr.rel (0) target = $region50
    $region49: #{tpu_custom_call.1} parent=1 // pred_region
      %123 = vsyncadd [#allocation3], 448
    $region50: #{tpu_custom_call.1} parent=1 // pred_fallthru
      _
    %s124 = smul.u32 4, 7
    %s125 = smul.u32 %s124, 1
    %s126 = sshll.u32 %s125, 4
    %127 = dma.done [#allocation3], %s126
    %v128 = vld [vmem:[#allocation2] sm:$0xf]
    %v129 = vld [vmem:[#allocation2 + $0x4] sm:$0xf]
    %v130 = vld [vmem:[#allocation2 + $0x8] sm:$0xf]
    %v131 = vld [vmem:[#allocation2 + $0xc] sm:$0xf]
    %v132 = vld [vmem:[#allocation2 + $0x10] sm:$0xf]
    %v133 = vld [vmem:[#allocation2 + $0x14] sm:$0x1]
    %v134 = vld [vmem:[%s1] sm:$0xf]
    %v135 = vld [vmem:[#allocation2] sm:$0xe]
    %s136 = scalar_lea.vmem %s1, 4
    %v137 = vld [vmem:[%s136] sm:$0xf]
    %v144 = vunpack.c.l.b16 %v135
    %v145 = vunpack.c.l.b16 %v129
    %v146 = vunpack.c.l.b16 %v130
    %v147 = vunpack.c.l.b16 %v131
    %v148 = vunpack.c.l.b16 %v132
    %v149 = vunpack.c.l.b16 %v133
    %v150 = vpack.c.b16 %v145, %v144
    %v151 = vpack.c.b16 %v147, %v146
    %v152 = vpack.c.b16 %v149, %v148
    %vm153 = vcmask 1046528
    %v154 = vrot.slane %v150, 1
    %v155 = vrot.slane %v151, 1
    %v156 = vsel %vm153, %v154, %v155
    %v157 = vrot.slane %v152, 1
    %v158 = vsel %vm153, %v155, %v157
    %vm159 = vcmask 64512
    %v161 = vsel %vm159, %v156, 0
    %v164 = vsel %vm159, %v158, 0
    %v167 = vsel %vm159, %v157, 0
    %vm169 = vcmask 1043456
    %v171 = vsel %vm169, %v137, 0
    %173 = vmatprep.subr.bf16.mxu0 0
    %174 = vmatpush1.bf16.msra.mxu0 0
    %175 = vmatprep.subr.bf16.mxu0 0
    %176 = vmatpush1.bf16.msra.mxu0 0
    %177 = vmatprep.subr.bf16.mxu0 0
    %178 = vmatpush1.bf16.msra.mxu0 0
    %179 = vmatprep.subr.bf16.mxu0 0
    %180 = vmatpush1.bf16.msra.mxu0 0
    %181 = vmatprep.subr.bf16.mxu0 0
    %182 = vmatpush1.bf16.msra.mxu0 0
    %183 = vmatprep.subr.bf16.mxu0 0
    %184 = vmatpush1.bf16.msra.mxu0 0
    %185 = vmatprep.subr.bf16.mxu0 0
    %186 = vmatpush1.bf16.msra.mxu0 0
    %187 = vmatprep.subr.bf16.mxu0 0
    %188 = vmatpush1.bf16.msra.mxu0 %v171
    %189 = vmatprep.subr.bf16.mxu0 0
    %190 = vmatpush2.bf16.msra.mxu0 0
    %191 = vmatprep.subr.bf16.mxu0 0
    %192 = vmatpush2.bf16.msra.mxu0 0
    %193 = vmatprep.subr.bf16.mxu0 0
    %194 = vmatpush2.bf16.msra.mxu0 0
    %195 = vmatprep.subr.bf16.mxu0 0
    %196 = vmatpush2.bf16.msra.mxu0 0
    %197 = vmatprep.subr.bf16.mxu0 0
    %198 = vmatpush2.bf16.msra.mxu0 0
    %199 = vmatprep.subr.bf16.mxu0 0
    %200 = vmatpush2.bf16.msra.mxu0 0
    %201 = vmatprep.subr.bf16.mxu0 0
    %202 = vmatpush2.bf16.msra.mxu0 0
    %203 = vmatprep.subr.bf16.mxu0 0
    %204 = vmatpush2.bf16.msra.mxu0 0
    %205 = vmatprep.mubr.bf16.mxu0 0
    %206 = vmatmul.mubr.bf16.gmra.mxu0 %v161
    %v207 = vpop.f32.mrf.mxu0
    %v208 = vadd.f32 0.0, %v207
    %v209 = vpop.f32.mrf.mxu0
    %v210 = vpop.f32.mrf.mxu0
    %v211 = vadd.f32 0.0, %v210
    %v212 = vpop.f32.mrf.mxu0
    %213 = vmatprep.mubr.bf16.mxu0 0
    %214 = vmatmul.mubr.bf16.gmra.mxu0 %v164
    %v215 = vpop.f32.mrf.mxu0
    %v216 = vadd.f32 0.0, %v215
    %v217 = vpop.f32.mrf.mxu0
    %v218 = vpop.f32.mrf.mxu0
    %v219 = vadd.f32 0.0, %v218
    %v220 = vpop.f32.mrf.mxu0
    %221 = vmatprep.mubr.bf16.mxu0 0
    %222 = vmatmul.mubr.bf16.gmra.mxu0 %v167
    %v223 = vpop.f32.mrf.mxu0
    %v224 = vadd.f32 0.0, %v223
    %v225 = vpop.f32.mrf.mxu0
    %v226 = vpop.f32.mrf.mxu0
    %v227 = vpop.f32.mrf.mxu0
    %228 = vdwg.mxu0
    %v230 = vunpack.c.l.b16 %v128
    %v231 = vpack.c.b16 %v145, %v230
    %vm232 = vsmask.f32 7424
    %v234 = vshrl.u32 %v231, 16
    %v236 = vshll.u32 %v231, 16
    %v238 = vrot.slane %v236, 1
    %v239 = vor.u32 %v234, %v238
    %v241 = vshll.u32 %v151, 16
    %v243 = vrot.slane %v241, 1
    %v244 = vsel %vm232, %v239, %v243
    %v245 = vshrl.u32 %v151, 16
    %v247 = vor.u32 %v245, %v243
    %v249 = vshll.u32 %v152, 16
    %v251 = vrot.slane %v249, 1
    %v252 = vsel %vm232, %v247, %v251
    %v253 = vshrl.u32 %v152, 16
    %v255 = vor.u32 %v253, %v251
    %v257 = vsel %vm159, %v244, 0
    %v260 = vsel %vm159, %v252, 0
    %v263 = vsel %vm159, %v255, 0
    %v266 = vsel %vm169, %v134, 0
    %268 = vmatprep.subr.bf16.mxu0 0
    %269 = vmatpush1.bf16.msra.mxu0 0
    %270 = vmatprep.subr.bf16.mxu0 0
    %271 = vmatpush1.bf16.msra.mxu0 0
    %272 = vmatprep.subr.bf16.mxu0 0
    %273 = vmatpush1.bf16.msra.mxu0 0
    %274 = vmatprep.subr.bf16.mxu0 0
    %275 = vmatpush1.bf16.msra.mxu0 0
    %276 = vmatprep.subr.bf16.mxu0 0
    %277 = vmatpush1.bf16.msra.mxu0 0
    %278 = vmatprep.subr.bf16.mxu0 0
    %279 = vmatpush1.bf16.msra.mxu0 0
    %280 = vmatprep.subr.bf16.mxu0 0
    %281 = vmatpush1.bf16.msra.mxu0 0
    %282 = vmatprep.subr.bf16.mxu0 0
    %283 = vmatpush1.bf16.msra.mxu0 %v266
    %284 = vmatprep.subr.bf16.mxu0 0
    %285 = vmatpush2.bf16.msra.mxu0 0
    %286 = vmatprep.subr.bf16.mxu0 0
    %287 = vmatpush2.bf16.msra.mxu0 0
    %288 = vmatprep.subr.bf16.mxu0 0
    %289 = vmatpush2.bf16.msra.mxu0 0
    %290 = vmatprep.subr.bf16.mxu0 0
    %291 = vmatpush2.bf16.msra.mxu0 0
    %292 = vmatprep.subr.bf16.mxu0 0
    %293 = vmatpush2.bf16.msra.mxu0 0
    %294 = vmatprep.subr.bf16.mxu0 0
    %295 = vmatpush2.bf16.msra.mxu0 0
    %296 = vmatprep.subr.bf16.mxu0 0
    %297 = vmatpush2.bf16.msra.mxu0 0
    %298 = vmatprep.subr.bf16.mxu0 0
    %299 = vmatpush2.bf16.msra.mxu0 0
    %300 = vmatprep.mubr.bf16.mxu0 0
    %301 = vmatmul.mubr.bf16.gmra.mxu0 %v257
    %v302 = vpop.f32.mrf.mxu0
    %v303 = vadd.f32 %v208, %v302
    %v304 = vpop.f32.mrf.mxu0
    %v305 = vpop.f32.mrf.mxu0
    %v306 = vadd.f32 %v211, %v305
    %v307 = vpop.f32.mrf.mxu0
    %308 = vmatprep.mubr.bf16.mxu0 0
    %309 = vmatmul.mubr.bf16.gmra.mxu0 %v260
    %v310 = vpop.f32.mrf.mxu0
    %v311 = vadd.f32 %v216, %v310
    %v312 = vpop.f32.mrf.mxu0
    %v313 = vpop.f32.mrf.mxu0
    %v314 = vadd.f32 %v219, %v313
    %v315 = vpop.f32.mrf.mxu0
    %316 = vmatprep.mubr.bf16.mxu0 0
    %317 = vmatmul.mubr.bf16.gmra.mxu0 %v263
    %v318 = vpop.f32.mrf.mxu0
    %v319 = vadd.f32 %v224, %v318
    %v320 = vpop.f32.mrf.mxu0
    %v321 = vpop.f32.mrf.mxu0
    %v322 = vpop.f32.mrf.mxu0
    %323 = vdwg.mxu0
    %v324 = vld [vmem:[#allocation2 + $0x14] sm:$0x3]
    %s325 = scalar_lea.vmem %s1, 8
    %v326 = vld [vmem:[%s325] sm:$0xf]
    %v328 = vunpack.c.l.b16 %v324
    %v329 = vpack.c.b16 %v328, %v148
    %vm330 = vsmask.f32 6400
    %v332 = vshrl.u32 %v150, 16
    %v334 = vrot.slane %v332, 1
    %v335 = vshll.u32 %v150, 16
    %v337 = vrot.slane %v335, 2
    %v338 = vor.u32 %v334, %v337
    %v339 = vrot.slane %v245, 1
    %v340 = vrot.slane %v241, 2
    %v341 = vor.u32 %v339, %v340
    %v342 = vsel %vm330, %v338, %v341
    %v344 = vshrl.u32 %v329, 16
    %v346 = vrot.slane %v344, 1
    %v347 = vshll.u32 %v329, 16
    %v349 = vrot.slane %v347, 2
    %v350 = vor.u32 %v346, %v349
    %v351 = vsel %vm330, %v341, %v350
    %v353 = vsel %vm159, %v342, 0
    %v356 = vsel %vm159, %v351, 0
    %v359 = vsel %vm159, %v350, 0
    %v362 = vsel %vm169, %v326, 0
    %364 = vmatprep.subr.bf16.mxu0 0
    %365 = vmatpush1.bf16.msra.mxu0 0
    %366 = vmatprep.subr.bf16.mxu0 0
    %367 = vmatpush1.bf16.msra.mxu0 0
    %368 = vmatprep.subr.bf16.mxu0 0
    %369 = vmatpush1.bf16.msra.mxu0 0
    %370 = vmatprep.subr.bf16.mxu0 0
    %371 = vmatpush1.bf16.msra.mxu0 0
    %372 = vmatprep.subr.bf16.mxu0 0
    %373 = vmatpush1.bf16.msra.mxu0 0
    %374 = vmatprep.subr.bf16.mxu0 0
    %375 = vmatpush1.bf16.msra.mxu0 0
    %376 = vmatprep.subr.bf16.mxu0 0
    %377 = vmatpush1.bf16.msra.mxu0 0
    %378 = vmatprep.subr.bf16.mxu0 0
    %379 = vmatpush1.bf16.msra.mxu0 %v362
    %380 = vmatprep.subr.bf16.mxu0 0
    %381 = vmatpush2.bf16.msra.mxu0 0
    %382 = vmatprep.subr.bf16.mxu0 0
    %383 = vmatpush2.bf16.msra.mxu0 0
    %384 = vmatprep.subr.bf16.mxu0 0
    %385 = vmatpush2.bf16.msra.mxu0 0
    %386 = vmatprep.subr.bf16.mxu0 0
    %387 = vmatpush2.bf16.msra.mxu0 0
    %388 = vmatprep.subr.bf16.mxu0 0
    %389 = vmatpush2.bf16.msra.mxu0 0
    %390 = vmatprep.subr.bf16.mxu0 0
    %391 = vmatpush2.bf16.msra.mxu0 0
    %392 = vmatprep.subr.bf16.mxu0 0
    %393 = vmatpush2.bf16.msra.mxu0 0
    %394 = vmatprep.subr.bf16.mxu0 0
    %395 = vmatpush2.bf16.msra.mxu0 0
    %396 = vmatprep.mubr.bf16.mxu0 0
    %397 = vmatmul.mubr.bf16.gmra.mxu0 %v353
    %v398 = vpop.f32.mrf.mxu0
    %v399 = vadd.f32 0.0, %v398
    %v400 = vpop.f32.mrf.mxu0
    %v401 = vpop.f32.mrf.mxu0
    %v402 = vadd.f32 0.0, %v401
    %v403 = vpop.f32.mrf.mxu0
    %404 = vmatprep.mubr.bf16.mxu0 0
    %405 = vmatmul.mubr.bf16.gmra.mxu0 %v356
    %v406 = vpop.f32.mrf.mxu0
    %v407 = vadd.f32 0.0, %v406
    %v408 = vpop.f32.mrf.mxu0
    %v409 = vpop.f32.mrf.mxu0
    %v410 = vadd.f32 0.0, %v409
    %v411 = vpop.f32.mrf.mxu0
    %412 = vmatprep.mubr.bf16.mxu0 0
    %413 = vmatmul.mubr.bf16.gmra.mxu0 %v359
    %v414 = vpop.f32.mrf.mxu0
    %v415 = vadd.f32 0.0, %v414
    %v416 = vpop.f32.mrf.mxu0
    %v417 = vpop.f32.mrf.mxu0
    %v418 = vpop.f32.mrf.mxu0
    %419 = vdwg.mxu0
    %v420 = vadd.f32 %v303, %v399
    %v421 = vadd.f32 %v306, %v402
    %v422 = vadd.f32 %v311, %v407
    %v423 = vadd.f32 %v314, %v410
    %v424 = vadd.f32 %v319, %v415
    %v425 = vld [vmem:[#allocation2] sm:$0x8]
    %v426 = vld [vmem:[#allocation2 + $0x14] sm:$0xf]
    %s427 = scalar_lea.vmem %s1, 12
    %v428 = vld [vmem:[%s427] sm:$0xf]
    %v431 = vunpack.c.l.b16 %v425
    %v432 = vunpack.c.l.b16 %v426
    %v433 = vpack.c.b16 %v145, %v431
    %v434 = vpack.c.b16 %v432, %v148
    %vm435 = vsmask.f32 4352
    %v437 = vshrl.u32 %v433, 16
    %v439 = vrot.slane %v437, 3
    %v440 = vshll.u32 %v433, 16
    %v442 = vrot.slane %v440, 4
    %v443 = vor.u32 %v439, %v442
    %v444 = vrot.slane %v245, 3
    %v445 = vrot.slane %v241, 4
    %v446 = vor.u32 %v444, %v445
    %v447 = vsel %vm435, %v443, %v446
    %v449 = vshrl.u32 %v434, 16
    %v451 = vrot.slane %v449, 3
    %v452 = vshll.u32 %v434, 16
    %v454 = vrot.slane %v452, 4
    %v455 = vor.u32 %v451, %v454
    %v456 = vsel %vm435, %v446, %v455
    %v458 = vsel %vm159, %v447, 0
    %v461 = vsel %vm159, %v456, 0
    %v464 = vsel %vm159, %v455, 0
    %v467 = vsel %vm169, %v428, 0
    %469 = vmatprep.subr.bf16.mxu0 0
    %470 = vmatpush1.bf16.msra.mxu0 0
    %471 = vmatprep.subr.bf16.mxu0 0
    %472 = vmatpush1.bf16.msra.mxu0 0
    %473 = vmatprep.subr.bf16.mxu0 0
    %474 = vmatpush1.bf16.msra.mxu0 0
    %475 = vmatprep.subr.bf16.mxu0 0
    %476 = vmatpush1.bf16.msra.mxu0 0
    %477 = vmatprep.subr.bf16.mxu0 0
    %478 = vmatpush1.bf16.msra.mxu0 0
    %479 = vmatprep.subr.bf16.mxu0 0
    %480 = vmatpush1.bf16.msra.mxu0 0
    %481 = vmatprep.subr.bf16.mxu0 0
    %482 = vmatpush1.bf16.msra.mxu0 0
    %483 = vmatprep.subr.bf16.mxu0 0
    %484 = vmatpush1.bf16.msra.mxu0 %v467
    %485 = vmatprep.subr.bf16.mxu0 0
    %486 = vmatpush2.bf16.msra.mxu0 0
    %487 = vmatprep.subr.bf16.mxu0 0
    %488 = vmatpush2.bf16.msra.mxu0 0
    %489 = vmatprep.subr.bf16.mxu0 0
    %490 = vmatpush2.bf16.msra.mxu0 0
    %491 = vmatprep.subr.bf16.mxu0 0
    %492 = vmatpush2.bf16.msra.mxu0 0
    %493 = vmatprep.subr.bf16.mxu0 0
    %494 = vmatpush2.bf16.msra.mxu0 0
    %495 = vmatprep.subr.bf16.mxu0 0
    %496 = vmatpush2.bf16.msra.mxu0 0
    %497 = vmatprep.subr.bf16.mxu0 0
    %498 = vmatpush2.bf16.msra.mxu0 0
    %499 = vmatprep.subr.bf16.mxu0 0
    %500 = vmatpush2.bf16.msra.mxu0 0
    %501 = vmatprep.mubr.bf16.mxu0 0
    %502 = vmatmul.mubr.bf16.gmra.mxu0 %v458
    %v503 = vpop.f32.mrf.mxu0
    %v504 = vadd.f32 0.0, %v503
    %v505 = vpop.f32.mrf.mxu0
    %v506 = vpop.f32.mrf.mxu0
    %v507 = vadd.f32 0.0, %v506
    %v508 = vpop.f32.mrf.mxu0
    %509 = vmatprep.mubr.bf16.mxu0 0
    %510 = vmatmul.mubr.bf16.gmra.mxu0 %v461
    %v511 = vpop.f32.mrf.mxu0
    %v512 = vadd.f32 0.0, %v511
    %v513 = vpop.f32.mrf.mxu0
    %v514 = vpop.f32.mrf.mxu0
    %v515 = vadd.f32 0.0, %v514
    %v516 = vpop.f32.mrf.mxu0
    %517 = vmatprep.mubr.bf16.mxu0 0
    %518 = vmatmul.mubr.bf16.gmra.mxu0 %v464
    %v519 = vpop.f32.mrf.mxu0
    %v520 = vadd.f32 0.0, %v519
    %v521 = vpop.f32.mrf.mxu0
    %v522 = vpop.f32.mrf.mxu0
    %v523 = vpop.f32.mrf.mxu0
    %524 = vdwg.mxu0
    %v525 = vadd.f32 %v420, %v504
    %v526 = vadd.f32 %v421, %v507
    %v527 = vadd.f32 %v422, %v512
    %v528 = vadd.f32 %v423, %v515
    %v529 = vadd.f32 %v424, %v520
    %s530 = scalar_lea.vmem %s1, 16
    %v531 = vld [vmem:[%s530] sm:$0xf]
    %v532 = vpack.c.b16 %v146, %v145
    %v533 = vpack.c.b16 %v148, %v147
    %v534 = vpack.c.b16 %v432, %v432
    %v536 = vsel %vm159, %v532, 0
    %v539 = vsel %vm159, %v533, 0
    %v542 = vsel %vm159, %v534, 0
    %v545 = vsel %vm169, %v531, 0
    %547 = vmatprep.subr.bf16.mxu0 0
    %548 = vmatpush1.bf16.msra.mxu0 0
    %549 = vmatprep.subr.bf16.mxu0 0
    %550 = vmatpush1.bf16.msra.mxu0 0
    %551 = vmatprep.subr.bf16.mxu0 0
    %552 = vmatpush1.bf16.msra.mxu0 0
    %553 = vmatprep.subr.bf16.mxu0 0
    %554 = vmatpush1.bf16.msra.mxu0 0
    %555 = vmatprep.subr.bf16.mxu0 0
    %556 = vmatpush1.bf16.msra.mxu0 0
    %557 = vmatprep.subr.bf16.mxu0 0
    %558 = vmatpush1.bf16.msra.mxu0 0
    %559 = vmatprep.subr.bf16.mxu0 0
    %560 = vmatpush1.bf16.msra.mxu0 0
    %561 = vmatprep.subr.bf16.mxu0 0
    %562 = vmatpush1.bf16.msra.mxu0 %v545
    %563 = vmatprep.subr.bf16.mxu0 0
    %564 = vmatpush2.bf16.msra.mxu0 0
    %565 = vmatprep.subr.bf16.mxu0 0
    %566 = vmatpush2.bf16.msra.mxu0 0
    %567 = vmatprep.subr.bf16.mxu0 0
    %568 = vmatpush2.bf16.msra.mxu0 0
    %569 = vmatprep.subr.bf16.mxu0 0
    %570 = vmatpush2.bf16.msra.mxu0 0
    %571 = vmatprep.subr.bf16.mxu0 0
    %572 = vmatpush2.bf16.msra.mxu0 0
    %573 = vmatprep.subr.bf16.mxu0 0
    %574 = vmatpush2.bf16.msra.mxu0 0
    %575 = vmatprep.subr.bf16.mxu0 0
    %576 = vmatpush2.bf16.msra.mxu0 0
    %577 = vmatprep.subr.bf16.mxu0 0
    %578 = vmatpush2.bf16.msra.mxu0 0
    %579 = vmatprep.mubr.bf16.mxu0 0
    %580 = vmatmul.mubr.bf16.gmra.mxu0 %v536
    %v581 = vpop.f32.mrf.mxu0
    %v582 = vadd.f32 0.0, %v581
    %v583 = vpop.f32.mrf.mxu0
    %v584 = vpop.f32.mrf.mxu0
    %v585 = vadd.f32 0.0, %v584
    %v586 = vpop.f32.mrf.mxu0
    %587 = vmatprep.mubr.bf16.mxu0 0
    %588 = vmatmul.mubr.bf16.gmra.mxu0 %v539
    %v589 = vpop.f32.mrf.mxu0
    %v590 = vadd.f32 0.0, %v589
    %v591 = vpop.f32.mrf.mxu0
    %v592 = vpop.f32.mrf.mxu0
    %v593 = vadd.f32 0.0, %v592
    %v594 = vpop.f32.mrf.mxu0
    %595 = vmatprep.mubr.bf16.mxu0 0
    %596 = vmatmul.mubr.bf16.gmra.mxu0 %v542
    %v597 = vpop.f32.mrf.mxu0
    %v598 = vadd.f32 0.0, %v597
    %v599 = vpop.f32.mrf.mxu0
    %v600 = vpop.f32.mrf.mxu0
    %v601 = vpop.f32.mrf.mxu0
    %602 = vdwg.mxu0
    %v603 = vadd.f32 %v525, %v582
    %v604 = vadd.f32 %v526, %v585
    %v605 = vadd.f32 %v527, %v590
    %v606 = vadd.f32 %v528, %v593
    %v607 = vadd.f32 %v529, %v598
    %v608 = vld [vmem:[#allocation2 + $0x4] sm:$0xf]
    %v609 = vld [vmem:[#allocation2 + $0x8] sm:$0xf]
    %v610 = vld [vmem:[#allocation2 + $0xc] sm:$0xf]
    %v611 = vld [vmem:[#allocation2 + $0x10] sm:$0xf]
    %v612 = vld [vmem:[#allocation2 + $0x14] sm:$0xf]
    %v613 = vld [vmem:[#allocation2 + $0x18] sm:$0x1]
    %s614 = scalar_lea.vmem %s1, 20
    %v615 = vld [vmem:[%s614] sm:$0xf]
    %v622 = vunpack.c.l.b16 %v608
    %v623 = vunpack.c.l.b16 %v609
    %v624 = vunpack.c.l.b16 %v610
    %v625 = vunpack.c.l.b16 %v611
    %v626 = vunpack.c.l.b16 %v612
    %v627 = vunpack.c.l.b16 %v613
    %v628 = vpack.c.b16 %v623, %v622
    %v629 = vpack.c.b16 %v625, %v624
    %v630 = vpack.c.b16 %v627, %v626
    %v632 = vshrl.u32 %v628, 16
    %v634 = vshll.u32 %v628, 16
    %v636 = vrot.slane %v634, 1
    %v637 = vor.u32 %v632, %v636
    %v639 = vshll.u32 %v629, 16
    %v641 = vrot.slane %v639, 1
    %v642 = vsel %vm232, %v637, %v641
    %v643 = vshrl.u32 %v629, 16
    %v645 = vor.u32 %v643, %v641
    %v647 = vshll.u32 %v630, 16
    %v649 = vrot.slane %v647, 1
    %v650 = vsel %vm232, %v645, %v649
    %v651 = vshrl.u32 %v630, 16
    %v653 = vor.u32 %v651, %v649
    %v655 = vsel %vm159, %v642, 0
    %v658 = vsel %vm159, %v650, 0
    %v661 = vsel %vm159, %v653, 0
    %v664 = vsel %vm169, %v615, 0
    %666 = vmatprep.subr.bf16.mxu0 0
    %667 = vmatpush1.bf16.msra.mxu0 0
    %668 = vmatprep.subr.bf16.mxu0 0
    %669 = vmatpush1.bf16.msra.mxu0 0
    %670 = vmatprep.subr.bf16.mxu0 0
    %671 = vmatpush1.bf16.msra.mxu0 0
    %672 = vmatprep.subr.bf16.mxu0 0
    %673 = vmatpush1.bf16.msra.mxu0 0
    %674 = vmatprep.subr.bf16.mxu0 0
    %675 = vmatpush1.bf16.msra.mxu0 0
    %676 = vmatprep.subr.bf16.mxu0 0
    %677 = vmatpush1.bf16.msra.mxu0 0
    %678 = vmatprep.subr.bf16.mxu0 0
    %679 = vmatpush1.bf16.msra.mxu0 0
    %680 = vmatprep.subr.bf16.mxu0 0
    %681 = vmatpush1.bf16.msra.mxu0 %v664
    %682 = vmatprep.subr.bf16.mxu0 0
    %683 = vmatpush2.bf16.msra.mxu0 0
    %684 = vmatprep.subr.bf16.mxu0 0
    %685 = vmatpush2.bf16.msra.mxu0 0
    %686 = vmatprep.subr.bf16.mxu0 0
    %687 = vmatpush2.bf16.msra.mxu0 0
    %688 = vmatprep.subr.bf16.mxu0 0
    %689 = vmatpush2.bf16.msra.mxu0 0
    %690 = vmatprep.subr.bf16.mxu0 0
    %691 = vmatpush2.bf16.msra.mxu0 0
    %692 = vmatprep.subr.bf16.mxu0 0
    %693 = vmatpush2.bf16.msra.mxu0 0
    %694 = vmatprep.subr.bf16.mxu0 0
    %695 = vmatpush2.bf16.msra.mxu0 0
    %696 = vmatprep.subr.bf16.mxu0 0
    %697 = vmatpush2.bf16.msra.mxu0 0
    %698 = vmatprep.mubr.bf16.mxu0 0
    %699 = vmatmul.mubr.bf16.gmra.mxu0 %v655
    %v700 = vpop.f32.mrf.mxu0
    %v701 = vadd.f32 0.0, %v700
    %v702 = vpop.f32.mrf.mxu0
    %v703 = vpop.f32.mrf.mxu0
    %v704 = vadd.f32 0.0, %v703
    %v705 = vpop.f32.mrf.mxu0
    %706 = vmatprep.mubr.bf16.mxu0 0
    %707 = vmatmul.mubr.bf16.gmra.mxu0 %v658
    %v708 = vpop.f32.mrf.mxu0
    %v709 = vadd.f32 0.0, %v708
    %v710 = vpop.f32.mrf.mxu0
    %v711 = vpop.f32.mrf.mxu0
    %v712 = vadd.f32 0.0, %v711
    %v713 = vpop.f32.mrf.mxu0
    %714 = vmatprep.mubr.bf16.mxu0 0
    %715 = vmatmul.mubr.bf16.gmra.mxu0 %v661
    %v716 = vpop.f32.mrf.mxu0
    %v717 = vadd.f32 0.0, %v716
    %v718 = vpop.f32.mrf.mxu0
    %v719 = vpop.f32.mrf.mxu0
    %v720 = vpop.f32.mrf.mxu0
    %721 = vdwg.mxu0
    %v722 = vadd.f32 %v603, %v701
    %v723 = vadd.f32 %v604, %v704
    %v724 = vadd.f32 %v605, %v709
    %v725 = vadd.f32 %v606, %v712
    %v726 = vadd.f32 %v607, %v717
    %v727 = vld [vmem:[#allocation2 + $0x4] sm:$0xc]
    %v728 = vld [vmem:[#allocation2 + $0x18] sm:$0x7]
    %s729 = scalar_lea.vmem %s1, 24
    %v730 = vld [vmem:[%s729] sm:$0xf]
    %v733 = vunpack.c.l.b16 %v727
    %v734 = vunpack.c.l.b16 %v728
    %v735 = vpack.c.b16 %v623, %v733
    %v736 = vpack.c.b16 %v734, %v626
    %vm737 = vsmask.f32 5376
    %v739 = vshrl.u32 %v735, 16
    %v741 = vrot.slane %v739, 2
    %v742 = vshll.u32 %v735, 16
    %v744 = vrot.slane %v742, 3
    %v745 = vor.u32 %v741, %v744
    %v746 = vrot.slane %v643, 2
    %v747 = vrot.slane %v639, 3
    %v748 = vor.u32 %v746, %v747
    %v749 = vsel %vm737, %v745, %v748
    %v751 = vshrl.u32 %v736, 16
    %v753 = vrot.slane %v751, 2
    %v754 = vshll.u32 %v736, 16
    %v756 = vrot.slane %v754, 3
    %v757 = vor.u32 %v753, %v756
    %v758 = vsel %vm737, %v748, %v757
    %v760 = vsel %vm159, %v749, 0
    %v763 = vsel %vm159, %v758, 0
    %v766 = vsel %vm159, %v757, 0
    %v769 = vsel %vm169, %v730, 0
    %771 = vmatprep.subr.bf16.mxu0 0
    %772 = vmatpush1.bf16.msra.mxu0 0
    %773 = vmatprep.subr.bf16.mxu0 0
    %774 = vmatpush1.bf16.msra.mxu0 0
    %775 = vmatprep.subr.bf16.mxu0 0
    %776 = vmatpush1.bf16.msra.mxu0 0
    %777 = vmatprep.subr.bf16.mxu0 0
    %778 = vmatpush1.bf16.msra.mxu0 0
    %779 = vmatprep.subr.bf16.mxu0 0
    %780 = vmatpush1.bf16.msra.mxu0 0
    %781 = vmatprep.subr.bf16.mxu0 0
    %782 = vmatpush1.bf16.msra.mxu0 0
    %783 = vmatprep.subr.bf16.mxu0 0
    %784 = vmatpush1.bf16.msra.mxu0 0
    %785 = vmatprep.subr.bf16.mxu0 0
    %786 = vmatpush1.bf16.msra.mxu0 %v769
    %787 = vmatprep.subr.bf16.mxu0 0
    %788 = vmatpush2.bf16.msra.mxu0 0
    %789 = vmatprep.subr.bf16.mxu0 0
    %790 = vmatpush2.bf16.msra.mxu0 0
    %791 = vmatprep.subr.bf16.mxu0 0
    %792 = vmatpush2.bf16.msra.mxu0 0
    %793 = vmatprep.subr.bf16.mxu0 0
    %794 = vmatpush2.bf16.msra.mxu0 0
    %795 = vmatprep.subr.bf16.mxu0 0
    %796 = vmatpush2.bf16.msra.mxu0 0
    %797 = vmatprep.subr.bf16.mxu0 0
    %798 = vmatpush2.bf16.msra.mxu0 0
    %799 = vmatprep.subr.bf16.mxu0 0
    %800 = vmatpush2.bf16.msra.mxu0 0
    %801 = vmatprep.subr.bf16.mxu0 0
    %802 = vmatpush2.bf16.msra.mxu0 0
    %803 = vmatprep.mubr.bf16.mxu0 0
    %804 = vmatmul.mubr.bf16.gmra.mxu0 %v760
    %v805 = vpop.f32.mrf.mxu0
    %v806 = vadd.f32 0.0, %v805
    %v807 = vpop.f32.mrf.mxu0
    %v808 = vpop.f32.mrf.mxu0
    %v809 = vadd.f32 0.0, %v808
    %v810 = vpop.f32.mrf.mxu0
    %811 = vmatprep.mubr.bf16.mxu0 0
    %812 = vmatmul.mubr.bf16.gmra.mxu0 %v763
    %v813 = vpop.f32.mrf.mxu0
    %v814 = vadd.f32 0.0, %v813
    %v815 = vpop.f32.mrf.mxu0
    %v816 = vpop.f32.mrf.mxu0
    %v817 = vadd.f32 0.0, %v816
    %v818 = vpop.f32.mrf.mxu0
    %819 = vmatprep.mubr.bf16.mxu0 0
    %820 = vmatmul.mubr.bf16.gmra.mxu0 %v766
    %v821 = vpop.f32.mrf.mxu0
    %v822 = vadd.f32 0.0, %v821
    %v823 = vpop.f32.mrf.mxu0
    %v824 = vpop.f32.mrf.mxu0
    %v825 = vpop.f32.mrf.mxu0
    %826 = vdwg.mxu0
    %v827 = vadd.f32 %v722, %v806
    %v828 = vadd.f32 %v723, %v809
    %v829 = vadd.f32 %v724, %v814
    %v830 = vadd.f32 %v725, %v817
    %v831 = vadd.f32 %v726, %v822
    %v832 = vld [vmem:[#allocation2 + $0x4] sm:$0x8]
    %s833 = scalar_lea.vmem %s1, 28
    %v834 = vld [vmem:[%s833] sm:$0xf]
    %v836 = vunpack.c.l.b16 %v832
    %v837 = vpack.c.b16 %v623, %v836
    %vm838 = vcmask 1044480
    %v839 = vrot.slane %v837, 3
    %v840 = vrot.slane %v629, 3
    %v841 = vsel %vm838, %v839, %v840
    %v842 = vrot.slane %v736, 3
    %v843 = vsel %vm838, %v840, %v842
    %v845 = vsel %vm159, %v841, 0
    %v848 = vsel %vm159, %v843, 0
    %v851 = vsel %vm159, %v842, 0
    %v854 = vsel %vm169, %v834, 0
    %856 = vmatprep.subr.bf16.mxu0 0
    %857 = vmatpush1.bf16.msra.mxu0 0
    %858 = vmatprep.subr.bf16.mxu0 0
    %859 = vmatpush1.bf16.msra.mxu0 0
    %860 = vmatprep.subr.bf16.mxu0 0
    %861 = vmatpush1.bf16.msra.mxu0 0
    %862 = vmatprep.subr.bf16.mxu0 0
    %863 = vmatpush1.bf16.msra.mxu0 0
    %864 = vmatprep.subr.bf16.mxu0 0
    %865 = vmatpush1.bf16.msra.mxu0 0
    %866 = vmatprep.subr.bf16.mxu0 0
    %867 = vmatpush1.bf16.msra.mxu0 0
    %868 = vmatprep.subr.bf16.mxu0 0
    %869 = vmatpush1.bf16.msra.mxu0 0
    %870 = vmatprep.subr.bf16.mxu0 0
    %871 = vmatpush1.bf16.msra.mxu0 %v854
    %872 = vmatprep.subr.bf16.mxu0 0
    %873 = vmatpush2.bf16.msra.mxu0 0
    %874 = vmatprep.subr.bf16.mxu0 0
    %875 = vmatpush2.bf16.msra.mxu0 0
    %876 = vmatprep.subr.bf16.mxu0 0
    %877 = vmatpush2.bf16.msra.mxu0 0
    %878 = vmatprep.subr.bf16.mxu0 0
    %879 = vmatpush2.bf16.msra.mxu0 0
    %880 = vmatprep.subr.bf16.mxu0 0
    %881 = vmatpush2.bf16.msra.mxu0 0
    %882 = vmatprep.subr.bf16.mxu0 0
    %883 = vmatpush2.bf16.msra.mxu0 0
    %884 = vmatprep.subr.bf16.mxu0 0
    %885 = vmatpush2.bf16.msra.mxu0 0
    %886 = vmatprep.subr.bf16.mxu0 0
    %887 = vmatpush2.bf16.msra.mxu0 0
    %888 = vmatprep.mubr.bf16.mxu0 0
    %889 = vmatmul.mubr.bf16.gmra.mxu0 %v845
    %v890 = vpop.f32.mrf.mxu0
    %v891 = vadd.f32 0.0, %v890
    %v892 = vpop.f32.mrf.mxu0
    %v893 = vpop.f32.mrf.mxu0
    %v894 = vadd.f32 0.0, %v893
    %v895 = vpop.f32.mrf.mxu0
    %896 = vmatprep.mubr.bf16.mxu0 0
    %897 = vmatmul.mubr.bf16.gmra.mxu0 %v848
    %v898 = vpop.f32.mrf.mxu0
    %v899 = vadd.f32 0.0, %v898
    %v900 = vpop.f32.mrf.mxu0
    %v901 = vpop.f32.mrf.mxu0
    %v902 = vadd.f32 0.0, %v901
    %v903 = vpop.f32.mrf.mxu0
    %904 = vmatprep.mubr.bf16.mxu0 0
    %905 = vmatmul.mubr.bf16.gmra.mxu0 %v851
    %v906 = vpop.f32.mrf.mxu0
    %v907 = vadd.f32 0.0, %v906
    %v908 = vpop.f32.mrf.mxu0
    %v909 = vpop.f32.mrf.mxu0
    %v910 = vpop.f32.mrf.mxu0
    %911 = vdwg.mxu0
    %v912 = vadd.f32 %v827, %v891
    %v913 = vadd.f32 %v828, %v894
    %v914 = vadd.f32 %v829, %v899
    %v915 = vadd.f32 %v830, %v902
    %v916 = vadd.f32 %v831, %v907
    %v917 = vld [vmem:[#allocation2 + $0x18] sm:$0xf]
    %s918 = scalar_lea.vmem %s1, 32
    %v919 = vld [vmem:[%s918] sm:$0xf]
    %v921 = vunpack.c.l.b16 %v917
    %v922 = vpack.c.b16 %v921, %v626
    %v924 = vshrl.u32 %v837, 16
    %v926 = vrot.slane %v924, 3
    %v927 = vshll.u32 %v837, 16
    %v929 = vrot.slane %v927, 4
    %v930 = vor.u32 %v926, %v929
    %v931 = vrot.slane %v643, 3
    %v932 = vrot.slane %v639, 4
    %v933 = vor.u32 %v931, %v932
    %v934 = vsel %vm435, %v930, %v933
    %v936 = vshrl.u32 %v922, 16
    %v938 = vrot.slane %v936, 3
    %v939 = vshll.u32 %v922, 16
    %v941 = vrot.slane %v939, 4
    %v942 = vor.u32 %v938, %v941
    %v943 = vsel %vm435, %v933, %v942
    %v945 = vsel %vm159, %v934, 0
    %v948 = vsel %vm159, %v943, 0
    %v951 = vsel %vm159, %v942, 0
    %v954 = vsel %vm169, %v919, 0
    %956 = vmatprep.subr.bf16.mxu0 0
    %957 = vmatpush1.bf16.msra.mxu0 0
    %958 = vmatprep.subr.bf16.mxu0 0
    %959 = vmatpush1.bf16.msra.mxu0 0
    %960 = vmatprep.subr.bf16.mxu0 0
    %961 = vmatpush1.bf16.msra.mxu0 0
    %962 = vmatprep.subr.bf16.mxu0 0
    %963 = vmatpush1.bf16.msra.mxu0 0
    %964 = vmatprep.subr.bf16.mxu0 0
    %965 = vmatpush1.bf16.msra.mxu0 0
    %966 = vmatprep.subr.bf16.mxu0 0
    %967 = vmatpush1.bf16.msra.mxu0 0
    %968 = vmatprep.subr.bf16.mxu0 0
    %969 = vmatpush1.bf16.msra.mxu0 0
    %970 = vmatprep.subr.bf16.mxu0 0
    %971 = vmatpush1.bf16.msra.mxu0 %v954
    %972 = vmatprep.subr.bf16.mxu0 0
    %973 = vmatpush2.bf16.msra.mxu0 0
    %974 = vmatprep.subr.bf16.mxu0 0
    %975 = vmatpush2.bf16.msra.mxu0 0
    %976 = vmatprep.subr.bf16.mxu0 0
    %977 = vmatpush2.bf16.msra.mxu0 0
    %978 = vmatprep.subr.bf16.mxu0 0
    %979 = vmatpush2.bf16.msra.mxu0 0
    %980 = vmatprep.subr.bf16.mxu0 0
    %981 = vmatpush2.bf16.msra.mxu0 0
    %982 = vmatprep.subr.bf16.mxu0 0
    %983 = vmatpush2.bf16.msra.mxu0 0
    %984 = vmatprep.subr.bf16.mxu0 0
    %985 = vmatpush2.bf16.msra.mxu0 0
    %986 = vmatprep.subr.bf16.mxu0 0
    %987 = vmatpush2.bf16.msra.mxu0 0
    %988 = vmatprep.mubr.bf16.mxu0 0
    %989 = vmatmul.mubr.bf16.gmra.mxu0 %v945
    %v990 = vpop.f32.mrf.mxu0
    %v991 = vadd.f32 0.0, %v990
    %v992 = vpop.f32.mrf.mxu0
    %v993 = vpop.f32.mrf.mxu0
    %v994 = vadd.f32 0.0, %v993
    %v995 = vpop.f32.mrf.mxu0
    %996 = vmatprep.mubr.bf16.mxu0 0
    %997 = vmatmul.mubr.bf16.gmra.mxu0 %v948
    %v998 = vpop.f32.mrf.mxu0
    %v999 = vadd.f32 0.0, %v998
    %v1000 = vpop.f32.mrf.mxu0
    %v1001 = vpop.f32.mrf.mxu0
    %v1002 = vadd.f32 0.0, %v1001
    %v1003 = vpop.f32.mrf.mxu0
    %1004 = vmatprep.mubr.bf16.mxu0 0
    %1005 = vmatmul.mubr.bf16.gmra.mxu0 %v951
    %v1006 = vpop.f32.mrf.mxu0
    %v1007 = vadd.f32 0.0, %v1006
    %v1008 = vpop.f32.mrf.mxu0
    %v1009 = vpop.f32.mrf.mxu0
    %v1010 = vpop.f32.mrf.mxu0
    %1011 = vdwg.mxu0
    %v1012 = vadd.f32 %v912, %v991
    %v1013 = vadd.f32 %v913, %v994
    %v1014 = vadd.f32 %v914, %v999
    %v1015 = vadd.f32 %v915, %v1002
    %v1016 = vadd.f32 %v916, %v1007
    %v1017 = vld [vmem:[%s2] sm:$0x1]
    %v1019 = vlaneseq
    %v1020 = vshrl.u32 %v1019, 7
    %v1021 = vsub.s32 0, %v1020
    %v1022 = vrot.slane %v1017, %v1021
    %v1024 = vadd.f32 %v1012, %v1022
    %v1025 = vadd.f32 %v1013, %v1022
    %v1026 = vadd.f32 %v1014, %v1022
    %v1027 = vadd.f32 %v1015, %v1022
    %v1028 = vadd.f32 %v1016, %v1022
    %v1029 = vld [vmem:[%s45] sm:$0xff]
    %v1030 = vld [vmem:[%s45 + $0x8] sm:$0xff]
    %v1031 = vld [vmem:[%s45 + $0x10] sm:$0xff]
    %v1032 = vld [vmem:[%s45 + $0x18] sm:$0xff]
    %v1033 = vld [vmem:[%s45 + $0x20] sm:$0xff]
    %vm1034 = vcmp.gt.f32.partialorder %v1029, 0.5
    %vm1035 = vcmp.gt.f32.partialorder %v1030, 0.5
    %vm1036 = vcmp.gt.f32.partialorder %v1031, 0.5
    %vm1037 = vcmp.gt.f32.partialorder %v1032, 0.5
    %vm1038 = vcmp.gt.f32.partialorder %v1033, 0.5
    %v1039 = vsel %vm1034, 1, 0
    %v1040 = vsel %vm1035, 1, 0
    %v1041 = vsel %vm1036, 1, 0
    %v1042 = vsel %vm1037, 1, 0
    %v1043 = vsel %vm1038, 1, 0
    %1044 = vset.pattern.permute.xlu0 0
    %1045 = vperm.xlu0 %1044, %v1039
    %v1046 = vpop.permute.xlu0 %1045
    %1047 = vset.pattern.permute.xlu0 0
    %1048 = vperm.xlu0 %1047, %v1040
    %v1049 = vpop.permute.xlu0 %1048
    %1050 = vset.pattern.permute.xlu0 0
    %1051 = vperm.xlu0 %1050, %v1041
    %v1052 = vpop.permute.xlu0 %1051
    %1053 = vset.pattern.permute.xlu0 0
    %1054 = vperm.xlu0 %1053, %v1042
    %v1055 = vpop.permute.xlu0 %1054
    %1056 = vset.pattern.permute.xlu0 0
    %1057 = vperm.xlu0 %1056, %v1043
    %v1058 = vpop.permute.xlu0 %1057
    %vm1059 = vcmp.eq.s32.totalorder %v1046, 1
    %vm1060 = vcmp.eq.s32.totalorder %v1049, 1
    %vm1061 = vcmp.eq.s32.totalorder %v1052, 1
    %vm1062 = vcmp.eq.s32.totalorder %v1055, 1
    %vm1063 = vcmp.eq.s32.totalorder %v1058, 1
    %v1064 = vsel %vm1059, %v1024, 0.0
    %v1065 = vsel %vm1060, %v1025, 0.0
    %v1066 = vsel %vm1061, %v1026, 0.0
    %v1067 = vsel %vm1062, %v1027, 0.0
    %v1068 = vsel %vm1063, %v1028, 0.0
    %v1069 = vpack.c.bf16 %v1065, %v1064
    %v1070 = vpack.c.bf16 %v1067, %v1066
    %v1071 = vpack.c.bf16 %v1068, %v1068
    %v1075 = vunpack.c.l.b16 %v1069
    %v1076 = vunpack.c.h.b16 %v1069
    %v1077 = vunpack.c.l.b16 %v1070
    %v1078 = vunpack.c.h.b16 %v1070
    %v1079 = vunpack.c.l.b16 %v1071
    %v1080 = vpack.c.b16 %v1075, %v1075
    %v1081 = vpack.c.b16 %v1076, %v1076
    %v1082 = vpack.c.b16 %v1077, %v1077
    %v1083 = vpack.c.b16 %v1078, %v1078
    %v1084 = vpack.c.b16 %v1079, %v1079
    %vm1090 = vcmask 60416
    %1091 = vst.msk [vmem:[%s53] sm:$0xf] %vm1090, %v1080
    %1092 = vst.msk [vmem:[%s53 + $0x4] sm:$0xf] %vm1090, %v1081
    %1093 = vst.msk [vmem:[%s53 + $0x8] sm:$0xf] %vm1090, %v1082
    %1094 = vst.msk [vmem:[%s53 + $0xc] sm:$0xf] %vm1090, %v1083
    %1095 = vst.msk [vmem:[%s53 + $0x10] sm:$0xf] %vm1090, %v1084
    %v1096 = vsel %vm159, %v1064, 0.0
    %v1097 = vsel %vm159, %v1065, 0.0
    %v1098 = vadd.f32 %v1096, %v1097
    %v1099 = vsel %vm159, %v1066, 0.0
    %v1100 = vadd.f32 %v1098, %v1099
    %v1101 = vsel %vm159, %v1067, 0.0
    %v1102 = vadd.f32 %v1100, %v1101
    %v1103 = vsel %vm159, %v1068, 0.0
    %v1104 = vadd.f32 %v1102, %v1103
    %v1105 = vrot.slane %v1104, 4
    %v1106 = vadd.f32 %v1104, %v1105
    %v1107 = vrot.slane %v1106, 2
    %v1108 = vadd.f32 %v1106, %v1107
    %v1109 = vrot.slane %v1108, 1
    %v1110 = vadd.f32 %v1108, %v1109
    %v1111 = vmul.f32 %v1064, %v1064
    %v1112 = vmul.f32 %v1065, %v1065
    %v1113 = vmul.f32 %v1066, %v1066
    %v1114 = vmul.f32 %v1067, %v1067
    %v1115 = vmul.f32 %v1068, %v1068
    %v1116 = vsel %vm159, %v1111, 0.0
    %v1117 = vsel %vm159, %v1112, 0.0
    %v1118 = vadd.f32 %v1116, %v1117
    %v1119 = vsel %vm159, %v1113, 0.0
    %v1120 = vadd.f32 %v1118, %v1119
    %v1121 = vsel %vm159, %v1114, 0.0
    %v1122 = vadd.f32 %v1120, %v1121
    %v1123 = vsel %vm159, %v1115, 0.0
    %v1124 = vadd.f32 %v1122, %v1123
    %v1125 = vrot.slane %v1124, 4
    %v1126 = vadd.f32 %v1124, %v1125
    %v1127 = vrot.slane %v1126, 2
    %v1128 = vadd.f32 %v1126, %v1127
    %v1129 = vrot.slane %v1128, 1
    %v1130 = vadd.f32 %v1128, %v1129
    %1131 = vst.msk [vmem:[#allocation4] sm:$0xff] %vm159, %v1110
    %1132 = vst.msk [vmem:[#allocation6] sm:$0xff] %vm159, %v1130
    %s1133 = sadd.s32 0, 1
    %s1134 = smul.u32 5, %s1133
    %p1135 = scmp.lt.s32.totalorder %s1134, 14
    %s1136 = scalar_select %p1135, %s1134, 14
    %s1137 = smul.addr %s1136, 4
    %s1138 = scalar_lea.vmem %s4, %s1137
    // Predicated region
    $region51: #{tpu_custom_call.1} parent=1 // pred_check
      _
    $region52: #{tpu_custom_call.1} parent=1 // pred_check_branch
      %1140 = sbr.rel (0) target = $region54
    $region53: #{tpu_custom_call.1} parent=1 // pred_region
      %s1141 = sadd.s32 0, 1
      %s1142 = smul.u32 5, %s1141
    $region54: #{tpu_custom_call.1} parent=1 // pred_fallthru
      _
    // Predicated region
    $region55: #{tpu_custom_call.1} parent=1 // pred_check
      _
    $region56: #{tpu_custom_call.1} parent=1 // pred_check_branch
      %1144 = sbr.rel (0) target = $region58
    $region57: #{tpu_custom_call.1} parent=1 // pred_region
      %s1146 = ssub.s32 128, 128
      %1147 = vsyncadd [#allocation5], %s1146
      %s1149 = sshll.u32 [#allocation4], 4
      %s1150 = int_to_ptr.vmem [resolvable:$true] %s1149
      %1152 = dma.vmem_to_hbm [thread:$0]  %s1150, 128, %s5, [#allocation5]
    $region58: #{tpu_custom_call.1} parent=1 // pred_fallthru
      _
    // Predicated region
    $region59: #{tpu_custom_call.1} parent=1 // pred_check
      _
    $region60: #{tpu_custom_call.1} parent=1 // pred_check_branch
      %1154 = sbr.rel (0) target = $region62
    $region61: #{tpu_custom_call.1} parent=1 // pred_region
      %s1156 = ssub.s32 128, 128
      %1157 = vsyncadd [#allocation7], %s1156
      %s1159 = sshll.u32 [#allocation6], 4
      %s1160 = int_to_ptr.vmem [resolvable:$true] %s1159
      %1162 = dma.vmem_to_hbm [thread:$0]  %s1160, 128, %s6, [#allocation7]
    $region62: #{tpu_custom_call.1} parent=1 // pred_fallthru
      _
    // Predicated region
    $region63: #{tpu_custom_call.1} parent=1 // pred_check
      _
    $region64: #{tpu_custom_call.1} parent=1 // pred_check_branch
      %1164 = sbr.rel (0) target = $region66
    $region65: #{tpu_custom_call.1} parent=1 // pred_region
      %s1165 = sadd.s32 0, 1
      %s1166 = smul.u32 5, %s1165
      %p1167 = scmp.lt.s32.totalorder %s1166, 14
      %s1168 = scalar_select %p1167, %s1166, 14
      %s1169 = smul.addr %s1168, 4
      %s1170 = scalar_lea.vmem %s4, %s1169
    $region66: #{tpu_custom_call.1} parent=1 // pred_fallthru
      _
    // Predicated region
    $region67: #{tpu_custom_call.1} parent=1 // pred_check
      _
    $region68: #{tpu_custom_call.1} parent=1 // pred_check_branch
      %1172 = sbr.rel (0) target = $region70
    $region69: #{tpu_custom_call.1} parent=1 // pred_region
      %1173 = dma.done [#allocation5], 128
    $region70: #{tpu_custom_call.1} parent=1 // pred_fallthru
      _
    // Predicated region
    $region71: #{tpu_custom_call.1} parent=1 // pred_check
      _
    $region72: #{tpu_custom_call.1} parent=1 // pred_check_branch
      %1175 = sbr.rel (0) target = $region74
    $region73: #{tpu_custom_call.1} parent=1 // pred_region
      %1176 = dma.done [#allocation7], 128
    $region74: #{tpu_custom_call.1} parent=1 // pred_fallthru
      _
    %1177 = vsyncpa [#allocation5], 1
    %1178 = vsyncpa [#allocation7], 1
  %1179 = vsyncmov [#allocation3]
  %s1180 = vpop.sfrf %1179
  %p1181 = scmp.eq.s32.totalorder %s1180, 0
  %p1182 = pneg %p1181
  %1184 = shalt.err (%p1182)

// kernel: tpu_custom_call.1
$region0: #{tpu_custom_call.1}
  #allocation0 [shape = 'u32[]', space=smem, size = 0x4, offset = 0x4, fixed_abs, tag = 'smem constant byte address 0x4 - core index']
  #allocation1 [shape = 'u32[144,128]{1,0:T(1,128)}', space=vmem, size = 0x12000, scoped, tag = 'internal scratch']
  #allocation2 [shape = 'bf16[512,27]{1,0:T(8,128)(2,1)}', space=vmem, size = 0x20000, scoped, tag = 'scratch operand']
  #allocation3 [shape = 's32[1]{0}', space=sflag, size = 0x4, scoped, tag = 'scratch operand']
  #allocation4 [shape = 's32[]', space=sflag, size = 0x4, offset = 0, fixed_abs, tag = 'sflag constant byte address 0x0 - dummy sync flag']
  %s0 = inlined_call_operand.vmem [shape: bf16[3584,27], index: 0, kind: input, shape index: {}]
  %s1 = inlined_call_operand.vmem [shape: bf16[1,27,32], index: 1, kind: input, shape index: {}]
  %s2 = inlined_call_operand.vmem [shape: f32[1,32], index: 2, kind: input, shape index: {}]
  %s3 = inlined_call_operand.vmem [shape: f32[3584,1], index: 3, kind: input, shape index: {}]
  %s4 = inlined_call_operand.vmem [shape: bf16[3584,32], index: 4, kind: output, shape index: {0}]
  %s5 = inlined_call_operand.vmem [shape: f32[40,32], index: 5, kind: output, shape index: {1}]
  %s6 = inlined_call_operand.vmem [shape: f32[40,32], index: 6, kind: output, shape index: {2}]
  %7 = xla_tuple %s4, %s5, %s6
  %s8 = sld [smem:[#allocation0]]
  $region95: #{tpu_custom_call.1} parent=0
    _
  %s10 = ssub.s32 1, %s8
  %s11 = scalar_select 0, %s10, %s8
  loop: start=0, step=1, limit=7
  $region2: #{tpu_custom_call.1} parent=0 // loop_pre_header
    _
  $region3: #{tpu_custom_call.1} parent=0 // loop_header
    %s13 = sphi 0, %s17
    %p14 = scmp.ge.s32.totalorder %s13, 7
    %s21 = sphi 0, %s21
    %s23 = sphi 0, %s21
    %s24 = sphi 0, %s23
    %s38 = sphi 0, %s24
    %s42 = sphi 0, %s42
    %s44 = sphi 0, %s42
    %s45 = sphi 0, %s44
    %s59 = sphi 0, %s45
    %s67 = sphi 0, %s69
    %s70 = sphi 0, %s67
    %s71 = sphi 0, %s70
    %s87 = sphi 0, %s71
    %s95 = sphi 0, %s97
    %s98 = sphi 0, %s95
    %s99 = sphi 0, %s98
    %s115 = sphi 0, %s99
    %s121 = sphi 0, %s123
    %s124 = sphi 0, %s121
    %s125 = sphi 0, %s124
    %s141 = sphi 0, %s125
    %s147 = sphi 0, %s149
    %s150 = sphi 0, %s147
    %s151 = sphi 0, %s150
    %s167 = sphi 0, %s151
  $region4: #{tpu_custom_call.1} parent=0 // loop_header_branch
    %16 = sbr.rel (%p14) target = $region8
  $region5: #{tpu_custom_call.1} parent=0 // loop_body
    %s18 = ssub.s32 %s13, 1
    %s19 = ssub.s32 %s13, 2
    %s20 = sadd.s32 %s13, 1
    %s22 = sadd.s32 %s21, 1
    %p25 = scmp.eq.s32.totalorder %s13, 4
    %p26 = scmp.ne.s32.totalorder %s21, %s23
    %p27 = scmp.eq.s32.totalorder %s13, 0
    %p28 = por %p26, %p27
    %p29 = scmp.ne.s32.totalorder %s21, %s23
    %p30 = scmp.eq.s32.totalorder %s18, 4
    %p31 = por %p29, %p30
    %p32 = scmp.ne.s32.totalorder %s23, %s24
    %p33 = scmp.eq.s32.totalorder %s18, 0
    %p34 = por %p32, %p33
    %p35 = scmp.ne.s32.totalorder %s23, %s24
    %p36 = scmp.eq.s32.totalorder %s19, 4
    %p37 = por %p35, %p36
    %p39 = scmp.ne.s32.totalorder %s24, %s38
    %p40 = scmp.eq.s32.totalorder %s19, 0
    %p41 = por %p39, %p40
    %s43 = sadd.s32 %s42, 1
    %p46 = scmp.eq.s32.totalorder %s13, 4
    %p47 = scmp.ne.s32.totalorder %s42, %s44
    %p48 = scmp.eq.s32.totalorder %s13, 0
    %p49 = por %p47, %p48
    %p50 = scmp.ne.s32.totalorder %s42, %s44
    %p51 = scmp.eq.s32.totalorder %s18, 4
    %p52 = por %p50, %p51
    %p53 = scmp.ne.s32.totalorder %s44, %s45
    %p54 = scmp.eq.s32.totalorder %s18, 0
    %p55 = por %p53, %p54
    %p56 = scmp.ne.s32.totalorder %s44, %s45
    %p57 = scmp.eq.s32.totalorder %s19, 4
    %p58 = por %p56, %p57
    %p60 = scmp.ne.s32.totalorder %s45, %s59
    %p61 = scmp.eq.s32.totalorder %s19, 0
    %p62 = por %p60, %p61
    %s63 = sadd.s32 %s13, 1
    %s64 = sadd.s32 %s20, 1
    %s65 = ssub.s32 %s63, %s64
    %p66 = scmp.eq.s32.totalorder %s65, 0
    %s68 = sadd.s32 %s67, 1
    %s69 = scalar_select %p66, %s67, %s68
    %p72 = pneg %p66
    %p73 = scmp.eq.s32.totalorder %s13, 4
    %p74 = por %p72, %p73
    %p75 = scmp.ne.s32.totalorder %s67, %s70
    %p76 = scmp.eq.s32.totalorder %s13, 0
    %p77 = por %p75, %p76
    %p78 = scmp.ne.s32.totalorder %s67, %s70
    %p79 = scmp.eq.s32.totalorder %s18, 4
    %p80 = por %p78, %p79
    %p81 = scmp.ne.s32.totalorder %s70, %s71
    %p82 = scmp.eq.s32.totalorder %s18, 0
    %p83 = por %p81, %p82
    %p84 = scmp.ne.s32.totalorder %s70, %s71
    %p85 = scmp.eq.s32.totalorder %s19, 4
    %p86 = por %p84, %p85
    %p88 = scmp.ne.s32.totalorder %s71, %s87
    %p89 = scmp.eq.s32.totalorder %s19, 0
    %p90 = por %p88, %p89
    %s91 = sadd.s32 %s13, 1
    %s92 = sadd.s32 %s20, 1
    %s93 = ssub.s32 %s91, %s92
    %p94 = scmp.eq.s32.totalorder %s93, 0
    %s96 = sadd.s32 %s95, 1
    %s97 = scalar_select %p94, %s95, %s96
    %p100 = pneg %p94
    %p101 = scmp.eq.s32.totalorder %s13, 4
    %p102 = por %p100, %p101
    %p103 = scmp.ne.s32.totalorder %s95, %s98
    %p104 = scmp.eq.s32.totalorder %s13, 0
    %p105 = por %p103, %p104
    %p106 = scmp.ne.s32.totalorder %s95, %s98
    %p107 = scmp.eq.s32.totalorder %s18, 4
    %p108 = por %p106, %p107
    %p109 = scmp.ne.s32.totalorder %s98, %s99
    %p110 = scmp.eq.s32.totalorder %s18, 0
    %p111 = por %p109, %p110
    %p112 = scmp.ne.s32.totalorder %s98, %s99
    %p113 = scmp.eq.s32.totalorder %s19, 4
    %p114 = por %p112, %p113
    %p116 = scmp.ne.s32.totalorder %s99, %s115
    %p117 = scmp.eq.s32.totalorder %s19, 0
    %p118 = por %p116, %p117
    %s119 = ssub.s32 %s13, %s20
    %p120 = scmp.eq.s32.totalorder %s119, 0
    %s122 = sadd.s32 %s121, 1
    %s123 = scalar_select %p120, %s121, %s122
    %p126 = pneg %p120
    %p127 = scmp.eq.s32.totalorder %s13, 4
    %p128 = por %p126, %p127
    %p129 = scmp.ne.s32.totalorder %s121, %s124
    %p130 = scmp.eq.s32.totalorder %s13, 0
    %p131 = por %p129, %p130
    %p132 = scmp.ne.s32.totalorder %s121, %s124
    %p133 = scmp.eq.s32.totalorder %s18, 4
    %p134 = por %p132, %p133
    %p135 = scmp.ne.s32.totalorder %s124, %s125
    %p136 = scmp.eq.s32.totalorder %s18, 0
    %p137 = por %p135, %p136
    %p138 = scmp.ne.s32.totalorder %s124, %s125
    %p139 = scmp.eq.s32.totalorder %s19, 4
    %p140 = por %p138, %p139
    %p142 = scmp.ne.s32.totalorder %s125, %s141
    %p143 = scmp.eq.s32.totalorder %s19, 0
    %p144 = por %p142, %p143
    %s145 = ssub.s32 %s13, %s20
    %p146 = scmp.eq.s32.totalorder %s145, 0
    %s148 = sadd.s32 %s147, 1
    %s149 = scalar_select %p146, %s147, %s148
    %p152 = pneg %p146
    %p153 = scmp.eq.s32.totalorder %s13, 4
    %p154 = por %p152, %p153
    %p155 = scmp.ne.s32.totalorder %s147, %s150
    %p156 = scmp.eq.s32.totalorder %s13, 0
    %p157 = por %p155, %p156
    %p158 = scmp.ne.s32.totalorder %s147, %s150
    %p159 = scmp.eq.s32.totalorder %s18, 4
    %p160 = por %p158, %p159
    %p161 = scmp.ne.s32.totalorder %s150, %s151
    %p162 = scmp.eq.s32.totalorder %s18, 0
    %p163 = por %p161, %p162
    %p164 = scmp.ne.s32.totalorder %s150, %s151
    %p165 = scmp.eq.s32.totalorder %s19, 4
    %p166 = por %p164, %p165
    %p168 = scmp.ne.s32.totalorder %s151, %s167
    %p169 = scmp.eq.s32.totalorder %s19, 0
    %p170 = por %p168, %p169
    %p171 = scmp.le.s32.totalorder 1, %s13
    %p172 = scmp.lt.s32.totalorder %s13, 6
    %p173 = pnand %p171, %p172
    %p174 = pneg %p173
    // Predicated region
    $region9: #{tpu_custom_call.1} parent=5 // pred_check
      _
    $region10: #{tpu_custom_call.1} parent=5 // pred_check_branch
      %176 = sbr.rel (%p173) target = $region12
    $region11: #{tpu_custom_call.1} parent=5 // pred_region
      %s177 = ssub.s32 %s13, 1
      // Predicated region
      $region13: #{tpu_custom_call.1} parent=11 // pred_check
        %p178 = pneg %p34
      $region14: #{tpu_custom_call.1} parent=11 // pred_check_branch
        %180 = sbr.rel (%p178) target = $region16
      $region15: #{tpu_custom_call.1} parent=11 // pred_region
        _
      $region16: #{tpu_custom_call.1} parent=11 // pred_fallthru
        _
      // Predicated region
      $region17: #{tpu_custom_call.1} parent=11 // pred_check
        %p181 = pneg %p55
      $region18: #{tpu_custom_call.1} parent=11 // pred_check_branch
        %183 = sbr.rel (%p181) target = $region20
      $region19: #{tpu_custom_call.1} parent=11 // pred_region
        _
      $region20: #{tpu_custom_call.1} parent=11 // pred_fallthru
        _
    $region12: #{tpu_custom_call.1} parent=5 // pred_fallthru
      _
    %p184 = scmp.lt.s32.totalorder %s13, 5
    // Predicated region
    $region21: #{tpu_custom_call.1} parent=5 // pred_check
      %p185 = pneg %p184
    $region22: #{tpu_custom_call.1} parent=5 // pred_check_branch
      %187 = sbr.rel (%p185) target = $region24
    $region23: #{tpu_custom_call.1} parent=5 // pred_region
      // Predicated region
      $region25: #{tpu_custom_call.1} parent=23 // pred_check
        %p188 = pneg %p77
      $region26: #{tpu_custom_call.1} parent=23 // pred_check_branch
        %190 = sbr.rel (%p188) target = $region28
      $region27: #{tpu_custom_call.1} parent=23 // pred_region
        %s191 = sadd.s32 %s13, 1
        %s192 = smul.u32 64, %s191
        %p193 = scmp.lt.s32.totalorder %s192, 447
        %s194 = scalar_select %p193, %s192, 447
        %s195 = smul.addr %s194, 8
        %s196 = scalar_lea.vmem %s3, %s195
        %s197 = sadd.s32 %s13, 1
        %s198 = smul.u32 64, %s197
      $region28: #{tpu_custom_call.1} parent=23 // pred_fallthru
        _
    $region24: #{tpu_custom_call.1} parent=5 // pred_fallthru
      _
    %p199 = scmp.le.s32.totalorder 1, %s13
    %p200 = scmp.lt.s32.totalorder %s13, 6
    %p201 = pnand %p199, %p200
    %p202 = pneg %p201
    // Predicated region
    $region29: #{tpu_custom_call.1} parent=5 // pred_check
      _
    $region30: #{tpu_custom_call.1} parent=5 // pred_check_branch
      %204 = sbr.rel (%p201) target = $region32
    $region31: #{tpu_custom_call.1} parent=5 // pred_region
      %s205 = ssub.s32 %s13, 1
      %p206 = pneg %p34
      %p207 = pneg %p31
      %p208 = pneg %p55
      %p209 = pneg %p52
      %s210 = sadd.s32 %s18, 1
      %s211 = smul.u32 64, %s210
      %p212 = scmp.lt.s32.totalorder %s211, 447
      %s213 = scalar_select %p212, %s211, 447
      %s214 = smul.addr %s213, 8
      %s215 = scalar_lea.vmem %s3, %s214
      %p216 = pneg %p83
      %p217 = pneg %p80
      %p218 = pneg %p111
      %p219 = pneg %p108
      %s220 = sadd.s32 %s18, 1
      %s221 = smul.u32 64, %s220
      %p222 = scmp.lt.s32.totalorder %s221, 447
      %s223 = scalar_select %p222, %s221, 447
      %s224 = smul.addr %s223, 4
      %s225 = scalar_lea.vmem %s4, %s224
      %p226 = pneg %p137
      %p227 = pneg %p134
      %p228 = scmp.lt.s32.totalorder %s18, 4
      %s229 = scalar_select %p228, %s18, 4
      %s230 = smul.addr %s229, 8
      %s231 = scalar_lea.vmem %s5, %s230
      %p232 = pneg %p163
      %p233 = pneg %p160
      %p234 = scmp.lt.s32.totalorder %s18, 4
      %s235 = scalar_select %p234, %s18, 4
      %s236 = smul.addr %s235, 8
      %s237 = scalar_lea.vmem %s6, %s236
      %s238 = sadd.s32 %s18, 1
      %s239 = smul.u32 64, %s238
      %p240 = scmp.lt.s32.totalorder %s239, 447
      %s241 = scalar_select %p240, %s239, 447
      %s242 = smul.addr %s241, 8
      %s243 = scalar_lea.vmem %s3, %s242
      %s244 = sadd.s32 %s18, 1
      %s245 = smul.u32 64, %s244
      %s246 = sadd.s32 %s18, 1
      %s247 = smul.u32 64, %s246
      %p248 = scmp.lt.s32.totalorder %s247, 447
      %s249 = scalar_select %p248, %s247, 447
      %s250 = smul.addr %s249, 4
      %s251 = scalar_lea.vmem %s4, %s250
      %s252 = sadd.s32 %s18, 1
      %s253 = smul.u32 64, %s252
      %p254 = scmp.lt.s32.totalorder %s18, 4
      %s255 = scalar_select %p254, %s18, 4
      %s256 = smul.addr %s255, 8
      %s257 = scalar_lea.vmem %s5, %s256
      %p258 = scmp.lt.s32.totalorder %s18, 4
      %s259 = scalar_select %p258, %s18, 4
      %s260 = smul.addr %s259, 8
      %s261 = scalar_lea.vmem %s6, %s260
      %s263 = sadd.s32 %s18, 1
      %s264 = smul.u32 %s263, 512
      %s265 = sshra.s32 %s264, 3
      %s266 = sand.u32 %s264, 7
      %s267 = smul.addr %s265, 4
      %s268 = scalar_lea.vmem %s0, %s267
      %p270 = scmp.lt.u32.totalorder 256, 8
      %p271 = pneg %p270
      // Predicated region
      $region33: #{tpu_custom_call.1} parent=31 // pred_check
        _
      $region34: #{tpu_custom_call.1} parent=31 // pred_check_branch
        %273 = sbr.rel (%p270) target = $region36
      $region35: #{tpu_custom_call.1} parent=31 // pred_region
        %s289 = sand.u32 256, 7
        %p290 = scmp.eq.s32.totalorder %s289, 0
        // Predicated region
        $region48: #{tpu_custom_call.1} parent=35 // pred_check
          %p291 = pneg %p290
        $region49: #{tpu_custom_call.1} parent=35 // pred_check_branch
          %293 = sbr.rel (%p291) target = $region51
        $region50: #{tpu_custom_call.1} parent=35 // pred_region
          loop: start=0, step=1, limit=1
          $region52: #{tpu_custom_call.1} parent=50 // loop_pre_header
            _
          $region53: #{tpu_custom_call.1} parent=50 // loop_header
            %s295 = sphi 0, %s299
            %p296 = scmp.ge.s32.totalorder %s295, 1
            %s300 = sphi %s268, %s268
            %s301 = sphi [#allocation2], [#allocation2]
          $region54: #{tpu_custom_call.1} parent=50 // loop_header_branch
            %298 = sbr.rel (%p296) target = $region58
          $region55: #{tpu_custom_call.1} parent=50 // loop_body
            %v302 = vld [vmem:[%s300] sm:$0xff]
            %303 = vst [vmem:[%s301] sm:$0xff] %v302
            %v304 = vld [vmem:[%s300 + $0x8] sm:$0xff]
            %305 = vst [vmem:[%s301 + $0x8] sm:$0xff] %v304
            %v306 = vld [vmem:[%s300 + $0x10] sm:$0xff]
            %307 = vst [vmem:[%s301 + $0x10] sm:$0xff] %v306
            %v308 = vld [vmem:[%s300 + $0x18] sm:$0xff]
            %309 = vst [vmem:[%s301 + $0x18] sm:$0xff] %v308
            %v310 = vld [vmem:[%s300 + $0x20] sm:$0xff]
            %311 = vst [vmem:[%s301 + $0x20] sm:$0xff] %v310
            %v312 = vld [vmem:[%s300 + $0x28] sm:$0xff]
            %313 = vst [vmem:[%s301 + $0x28] sm:$0xff] %v312
            %v314 = vld [vmem:[%s300 + $0x30] sm:$0xff]
            %315 = vst [vmem:[%s301 + $0x30] sm:$0xff] %v314
            %v316 = vld [vmem:[%s300 + $0x38] sm:$0xff]
            %317 = vst [vmem:[%s301 + $0x38] sm:$0xff] %v316
            %v318 = vld [vmem:[%s300 + $0x40] sm:$0xff]
            %319 = vst [vmem:[%s301 + $0x40] sm:$0xff] %v318
            %v320 = vld [vmem:[%s300 + $0x48] sm:$0xff]
            %321 = vst [vmem:[%s301 + $0x48] sm:$0xff] %v320
            %v322 = vld [vmem:[%s300 + $0x50] sm:$0xff]
            %323 = vst [vmem:[%s301 + $0x50] sm:$0xff] %v322
            %v324 = vld [vmem:[%s300 + $0x58] sm:$0xff]
            %325 = vst [vmem:[%s301 + $0x58] sm:$0xff] %v324
            %v326 = vld [vmem:[%s300 + $0x60] sm:$0xff]
            %327 = vst [vmem:[%s301 + $0x60] sm:$0xff] %v326
            %v328 = vld [vmem:[%s300 + $0x68] sm:$0xff]
            %329 = vst [vmem:[%s301 + $0x68] sm:$0xff] %v328
            %v330 = vld [vmem:[%s300 + $0x70] sm:$0xff]
            %331 = vst [vmem:[%s301 + $0x70] sm:$0xff] %v330
            %v332 = vld [vmem:[%s300 + $0x78] sm:$0xff]
            %333 = vst [vmem:[%s301 + $0x78] sm:$0xff] %v332
            %v334 = vld [vmem:[%s300 + $0x80] sm:$0xff]
            %335 = vst [vmem:[%s301 + $0x80] sm:$0xff] %v334
            %v336 = vld [vmem:[%s300 + $0x88] sm:$0xff]
            %337 = vst [vmem:[%s301 + $0x88] sm:$0xff] %v336
            %v338 = vld [vmem:[%s300 + $0x90] sm:$0xff]
            %339 = vst [vmem:[%s301 + $0x90] sm:$0xff] %v338
            %v340 = vld [vmem:[%s300 + $0x98] sm:$0xff]
            %341 = vst [vmem:[%s301 + $0x98] sm:$0xff] %v340
            %v342 = vld [vmem:[%s300 + $0xa0] sm:$0xff]
            %343 = vst [vmem:[%s301 + $0xa0] sm:$0xff] %v342
            %v344 = vld [vmem:[%s300 + $0xa8] sm:$0xff]
            %345 = vst [vmem:[%s301 + $0xa8] sm:$0xff] %v344
            %v346 = vld [vmem:[%s300 + $0xb0] sm:$0xff]
            %347 = vst [vmem:[%s301 + $0xb0] sm:$0xff] %v346
            %v348 = vld [vmem:[%s300 + $0xb8] sm:$0xff]
            %349 = vst [vmem:[%s301 + $0xb8] sm:$0xff] %v348
            %v350 = vld [vmem:[%s300 + $0xc0] sm:$0xff]
            %351 = vst [vmem:[%s301 + $0xc0] sm:$0xff] %v350
            %v352 = vld [vmem:[%s300 + $0xc8] sm:$0xff]
            %353 = vst [vmem:[%s301 + $0xc8] sm:$0xff] %v352
            %v354 = vld [vmem:[%s300 + $0xd0] sm:$0xff]
            %355 = vst [vmem:[%s301 + $0xd0] sm:$0xff] %v354
            %v356 = vld [vmem:[%s300 + $0xd8] sm:$0xff]
            %357 = vst [vmem:[%s301 + $0xd8] sm:$0xff] %v356
            %v358 = vld [vmem:[%s300 + $0xe0] sm:$0xff]
            %359 = vst [vmem:[%s301 + $0xe0] sm:$0xff] %v358
            %v360 = vld [vmem:[%s300 + $0xe8] sm:$0xff]
            %361 = vst [vmem:[%s301 + $0xe8] sm:$0xff] %v360
            %v362 = vld [vmem:[%s300 + $0xf0] sm:$0xff]
            %363 = vst [vmem:[%s301 + $0xf0] sm:$0xff] %v362
            %v364 = vld [vmem:[%s300 + $0xf8] sm:$0xff]
            %365 = vst [vmem:[%s301 + $0xf8] sm:$0xff] %v364
          $region56: #{tpu_custom_call.1} parent=50 // loop_footer
            %s299 = sadd.s32 1, %s295
          $region57: #{tpu_custom_call.1} parent=50 // loop_footer_branch
            %294 = sbr.rel target = $region53
          $region58: #{tpu_custom_call.1} parent=50 // loop_exit
            _
        $region51: #{tpu_custom_call.1} parent=35 // pred_fallthru
          _
        %p366 = pneg %p290
        // Predicated region
        $region59: #{tpu_custom_call.1} parent=35 // pred_check
          _
        $region60: #{tpu_custom_call.1} parent=35 // pred_check_branch
          %368 = sbr.rel (%p290) target = $region62
        $region61: #{tpu_custom_call.1} parent=35 // pred_region
          %s369 = sand.u32 256, 7
        $region62: #{tpu_custom_call.1} parent=35 // pred_fallthru
          _
      $region36: #{tpu_custom_call.1} parent=31 // pred_fallthru
        _
      // Predicated region
      $region37: #{tpu_custom_call.1} parent=31 // pred_check
        %p274 = pneg %p270
      $region38: #{tpu_custom_call.1} parent=31 // pred_check_branch
        %276 = sbr.rel (%p274) target = $region40
      $region39: #{tpu_custom_call.1} parent=31 // pred_region
        %s277 = sshll.u32 1, 256
        %s278 = ssub.s32 %s277, 1
        loop: start=0, step=1, limit=1
        $region41: #{tpu_custom_call.1} parent=39 // loop_pre_header
          _
        $region42: #{tpu_custom_call.1} parent=39 // loop_header
          %s280 = sphi 0, %s284
          %p281 = scmp.ge.s32.totalorder %s280, 1
          %s285 = sphi %s268, %s268
          %s286 = sphi [#allocation2], [#allocation2]
        $region43: #{tpu_custom_call.1} parent=39 // loop_header_branch
          %283 = sbr.rel (%p281) target = $region47
        $region44: #{tpu_custom_call.1} parent=39 // loop_body
          %v287 = vld [vmem:[%s285] sm:%s278]
          %288 = vst [vmem:[%s286] sm:%s278] %v287
        $region45: #{tpu_custom_call.1} parent=39 // loop_footer
          %s284 = sadd.s32 1, %s280
        $region46: #{tpu_custom_call.1} parent=39 // loop_footer_branch
          %279 = sbr.rel target = $region42
        $region47: #{tpu_custom_call.1} parent=39 // loop_exit
          _
      $region40: #{tpu_custom_call.1} parent=31 // pred_fallthru
        _
      // Predicated region
      $region63: #{tpu_custom_call.1} parent=31 // pred_check
        _
      $region64: #{tpu_custom_call.1} parent=31 // pred_check_branch
        %372 = sbr.rel (0) target = $region66
      $region65: #{tpu_custom_call.1} parent=31 // pred_region
        %373 = vsyncadd [#allocation3], 4096
      $region66: #{tpu_custom_call.1} parent=31 // pred_fallthru
        _
      %s374 = smul.u32 4, 64
      %s375 = smul.u32 %s374, 1
      %s376 = sshll.u32 %s375, 4
      %377 = dma.done [#allocation3], %s376
      %v378 = vld [vmem:[#allocation2] sm:$0xf]
      %v379 = vld [vmem:[#allocation2 + $0x4] sm:$0xf]
      %v380 = vld [vmem:[#allocation2 + $0x8] sm:$0xf]
      %v381 = vld [vmem:[#allocation2 + $0xc] sm:$0xf]
      %v382 = vld [vmem:[#allocation2 + $0x10] sm:$0xf]
      %v383 = vld [vmem:[#allocation2 + $0x14] sm:$0xf]
      %v384 = vld [vmem:[#allocation2 + $0x18] sm:$0xf]
      %v385 = vld [vmem:[#allocation2 + $0x1c] sm:$0xf]
      %v386 = vld [vmem:[#allocation2 + $0x20] sm:$0xf]
      %v387 = vld [vmem:[#allocation2 + $0x24] sm:$0xf]
      %v388 = vld [vmem:[#allocation2 + $0x28] sm:$0xf]
      %v389 = vld [vmem:[#allocation2 + $0x2c] sm:$0xf]
      %v390 = vld [vmem:[#allocation2 + $0x30] sm:$0xf]
      %v391 = vld [vmem:[#allocation2 + $0x34] sm:$0xf]
      %v392 = vld [vmem:[#allocation2 + $0x38] sm:$0xf]
      %v393 = vld [vmem:[#allocation2 + $0x3c] sm:$0xf]
      %v394 = vld [vmem:[#allocation2 + $0x40] sm:$0xf]
      %v395 = vld [vmem:[#allocation2 + $0x44] sm:$0xf]
      %v396 = vld [vmem:[#allocation2 + $0x48] sm:$0xf]
      %v397 = vld [vmem:[#allocation2 + $0x4c] sm:$0xf]
      %v398 = vld [vmem:[#allocation2 + $0x50] sm:$0xf]
      %v399 = vld [vmem:[#allocation2 + $0x54] sm:$0xf]
      %v400 = vld [vmem:[#allocation2 + $0x58] sm:$0xf]
      %v401 = vld [vmem:[#allocation2 + $0x5c] sm:$0xf]
      %v402 = vld [vmem:[#allocation2 + $0x60] sm:$0xf]
      %v403 = vld [vmem:[#allocation2 + $0x64] sm:$0xf]
      %v404 = vld [vmem:[#allocation2 + $0x68] sm:$0xf]
      %v405 = vld [vmem:[#allocation2 + $0x6c] sm:$0xf]
      %v406 = vld [vmem:[#allocation2 + $0x70] sm:$0xf]
      %v407 = vld [vmem:[#allocation2 + $0x74] sm:$0xf]
      %v408 = vld [vmem:[#allocation2 + $0x78] sm:$0xf]
      %v409 = vld [vmem:[#allocation2 + $0x7c] sm:$0xf]
      %v410 = vld [vmem:[#allocation2 + $0x80] sm:$0xf]
      %v411 = vld [vmem:[#allocation2 + $0x84] sm:$0xf]
      %v412 = vld [vmem:[#allocation2 + $0x88] sm:$0xf]
      %v413 = vld [vmem:[#allocation2 + $0x8c] sm:$0xf]
      %v414 = vld [vmem:[#allocation2 + $0x90] sm:$0xf]
      %v415 = vld [vmem:[#allocation2 + $0x94] sm:$0xf]
      %v416 = vld [vmem:[#allocation2 + $0x98] sm:$0xf]
      %v417 = vld [vmem:[#allocation2 + $0x9c] sm:$0xf]
      %v418 = vld [vmem:[#allocation2 + $0xa0] sm:$0xf]
      %v419 = vld [vmem:[#allocation2 + $0xa4] sm:$0xf]
      %v420 = vld [vmem:[#allocation2 + $0xa8] sm:$0xf]
      %v421 = vld [vmem:[#allocation2 + $0xac] sm:$0xf]
      %v422 = vld [vmem:[#allocation2 + $0xb0] sm:$0xf]
      %v423 = vld [vmem:[#allocation2 + $0xb4] sm:$0xf]
      %v424 = vld [vmem:[#allocation2 + $0xb8] sm:$0xf]
      %v425 = vld [vmem:[#allocation2 + $0xbc] sm:$0xf]
      %v426 = vld [vmem:[#allocation2 + $0xc0] sm:$0xf]
      %v427 = vld [vmem:[#allocation2 + $0xc4] sm:$0xf]
      %v428 = vld [vmem:[#allocation2 + $0xc8] sm:$0xf]
      %v429 = vld [vmem:[#allocation2 + $0xcc] sm:$0xf]
      %v430 = vld [vmem:[#allocation2 + $0xd0] sm:$0xf]
      %v431 = vld [vmem:[#allocation2 + $0xd4] sm:$0xf]
      %v432 = vld [vmem:[#allocation2 + $0xd8] sm:$0xf]
      %v433 = vld [vmem:[#allocation2 + $0xdc] sm:$0xf]
      %v434 = vld [vmem:[#allocation2 + $0xe0] sm:$0xf]
      %v435 = vld [vmem:[#allocation2 + $0xe4] sm:$0xf]
      %v436 = vld [vmem:[#allocation2 + $0xe8] sm:$0xf]
      %v437 = vld [vmem:[#allocation2 + $0xec] sm:$0xf]
      %v438 = vld [vmem:[#allocation2 + $0xf0] sm:$0xf]
      %v439 = vld [vmem:[#allocation2 + $0xf4] sm:$0xf]
      %v440 = vld [vmem:[#allocation2 + $0xf8] sm:$0xf]
      %v441 = vld [vmem:[#allocation2 + $0xfc] sm:$0xf]
      %v442 = vld [vmem:[%s1] sm:$0xf]
      %v443 = vld [vmem:[%s1 + $0x4] sm:$0xf]
      %v444 = vld [vmem:[%s1 + $0x8] sm:$0xf]
      %v445 = vld [vmem:[%s1 + $0xc] sm:$0x3]
      %v446 = vld [vmem:[%s2] sm:$0x1]
      %v448 = vlaneseq
      %v449 = vshrl.u32 %v448, 7
      %v450 = vsub.s32 0, %v449
      %v451 = vrot.slane %v446, %v450
      %v517 = vunpack.c.l.b16 %v378
      %v518 = vunpack.c.l.b16 %v379
      %v519 = vunpack.c.l.b16 %v380
      %v520 = vunpack.c.l.b16 %v381
      %v521 = vunpack.c.l.b16 %v382
      %v522 = vunpack.c.l.b16 %v383
      %v523 = vunpack.c.l.b16 %v384
      %v524 = vunpack.c.l.b16 %v385
      %v525 = vunpack.c.l.b16 %v386
      %v526 = vunpack.c.l.b16 %v387
      %v527 = vunpack.c.l.b16 %v388
      %v528 = vunpack.c.l.b16 %v389
      %v529 = vunpack.c.l.b16 %v390
      %v530 = vunpack.c.l.b16 %v391
      %v531 = vunpack.c.l.b16 %v392
      %v532 = vunpack.c.l.b16 %v393
      %v533 = vunpack.c.l.b16 %v394
      %v534 = vunpack.c.l.b16 %v395
      %v535 = vunpack.c.l.b16 %v396
      %v536 = vunpack.c.l.b16 %v397
      %v537 = vunpack.c.l.b16 %v398
      %v538 = vunpack.c.l.b16 %v399
      %v539 = vunpack.c.l.b16 %v400
      %v540 = vunpack.c.l.b16 %v401
      %v541 = vunpack.c.l.b16 %v402
      %v542 = vunpack.c.l.b16 %v403
      %v543 = vunpack.c.l.b16 %v404
      %v544 = vunpack.c.l.b16 %v405
      %v545 = vunpack.c.l.b16 %v406
      %v546 = vunpack.c.l.b16 %v407
      %v547 = vunpack.c.l.b16 %v408
      %v548 = vunpack.c.l.b16 %v409
      %v549 = vunpack.c.l.b16 %v410
      %v550 = vunpack.c.l.b16 %v411
      %v551 = vunpack.c.l.b16 %v412
      %v552 = vunpack.c.l.b16 %v413
      %v553 = vunpack.c.l.b16 %v414
      %v554 = vunpack.c.l.b16 %v415
      %v555 = vunpack.c.l.b16 %v416
      %v556 = vunpack.c.l.b16 %v417
      %v557 = vunpack.c.l.b16 %v418
      %v558 = vunpack.c.l.b16 %v419
      %v559 = vunpack.c.l.b16 %v420
      %v560 = vunpack.c.l.b16 %v421
      %v561 = vunpack.c.l.b16 %v422
      %v562 = vunpack.c.l.b16 %v423
      %v563 = vunpack.c.l.b16 %v424
      %v564 = vunpack.c.l.b16 %v425
      %v565 = vunpack.c.l.b16 %v426
      %v566 = vunpack.c.l.b16 %v427
      %v567 = vunpack.c.l.b16 %v428
      %v568 = vunpack.c.l.b16 %v429
      %v569 = vunpack.c.l.b16 %v430
      %v570 = vunpack.c.l.b16 %v431
      %v571 = vunpack.c.l.b16 %v432
      %v572 = vunpack.c.l.b16 %v433
      %v573 = vunpack.c.l.b16 %v434
      %v574 = vunpack.c.l.b16 %v435
      %v575 = vunpack.c.l.b16 %v436
      %v576 = vunpack.c.l.b16 %v437
      %v577 = vunpack.c.l.b16 %v438
      %v578 = vunpack.c.l.b16 %v439
      %v579 = vunpack.c.l.b16 %v440
      %v580 = vunpack.c.l.b16 %v441
      %v581 = vpack.c.b16 %v518, %v517
      %v582 = vpack.c.b16 %v520, %v519
      %v583 = vpack.c.b16 %v522, %v521
      %v584 = vpack.c.b16 %v524, %v523
      %v585 = vpack.c.b16 %v526, %v525
      %v586 = vpack.c.b16 %v528, %v527
      %v587 = vpack.c.b16 %v530, %v529
      %v588 = vpack.c.b16 %v532, %v531
      %v589 = vpack.c.b16 %v534, %v533
      %v590 = vpack.c.b16 %v536, %v535
      %v591 = vpack.c.b16 %v538, %v537
      %v592 = vpack.c.b16 %v540, %v539
      %v593 = vpack.c.b16 %v542, %v541
      %v594 = vpack.c.b16 %v544, %v543
      %v595 = vpack.c.b16 %v546, %v545
      %v596 = vpack.c.b16 %v548, %v547
      %v597 = vpack.c.b16 %v550, %v549
      %v598 = vpack.c.b16 %v552, %v551
      %v599 = vpack.c.b16 %v554, %v553
      %v600 = vpack.c.b16 %v556, %v555
      %v601 = vpack.c.b16 %v558, %v557
      %v602 = vpack.c.b16 %v560, %v559
      %v603 = vpack.c.b16 %v562, %v561
      %v604 = vpack.c.b16 %v564, %v563
      %v605 = vpack.c.b16 %v566, %v565
      %v606 = vpack.c.b16 %v568, %v567
      %v607 = vpack.c.b16 %v570, %v569
      %v608 = vpack.c.b16 %v572, %v571
      %v609 = vpack.c.b16 %v574, %v573
      %v610 = vpack.c.b16 %v576, %v575
      %v611 = vpack.c.b16 %v578, %v577
      %v612 = vpack.c.b16 %v580, %v579
      %v617 = vunpack.c.l.b16 %v442
      %v618 = vunpack.c.l.b16 %v443
      %v619 = vunpack.c.l.b16 %v444
      %v620 = vunpack.c.l.b16 %v445
      %v621 = vpack.c.b16 %v618, %v617
      %v622 = vpack.c.b16 %v620, %v619
      %vm624 = vcmask 220160
      %v626 = vsel %vm624, %v581, 0
      %v629 = vsel %vm624, %v582, 0
      %v632 = vsel %vm624, %v583, 0
      %v635 = vsel %vm624, %v584, 0
      %v638 = vsel %vm624, %v585, 0
      %v641 = vsel %vm624, %v586, 0
      %v644 = vsel %vm624, %v587, 0
      %v647 = vsel %vm624, %v588, 0
      %v650 = vsel %vm624, %v589, 0
      %v653 = vsel %vm624, %v590, 0
      %v656 = vsel %vm624, %v591, 0
      %v659 = vsel %vm624, %v592, 0
      %v662 = vsel %vm624, %v593, 0
      %v665 = vsel %vm624, %v594, 0
      %v668 = vsel %vm624, %v595, 0
      %v671 = vsel %vm624, %v596, 0
      %v674 = vsel %vm624, %v597, 0
      %v677 = vsel %vm624, %v598, 0
      %v680 = vsel %vm624, %v599, 0
      %v683 = vsel %vm624, %v600, 0
      %v686 = vsel %vm624, %v601, 0
      %v689 = vsel %vm624, %v602, 0
      %v692 = vsel %vm624, %v603, 0
      %v695 = vsel %vm624, %v604, 0
      %v698 = vsel %vm624, %v605, 0
      %v701 = vsel %vm624, %v606, 0
      %v704 = vsel %vm624, %v607, 0
      %v707 = vsel %vm624, %v608, 0
      %v710 = vsel %vm624, %v609, 0
      %v713 = vsel %vm624, %v610, 0
      %v716 = vsel %vm624, %v611, 0
      %v719 = vsel %vm624, %v612, 0
      %vm721 = vcmask 1044480
      %vm722 = vcmask 1045504
      %v723 = vsel %vm721, 4294967295, 65535
      %v724 = vsel %vm722, %v723, 0
      %v726 = vand.u32 %v622, %v724
      %728 = vmatprep.subr.bf16.mxu0 0
      %729 = vmatpush1.bf16.msra.mxu0 0
      %730 = vmatprep.subr.bf16.mxu0 0
      %731 = vmatpush1.bf16.msra.mxu0 0
      %732 = vmatprep.subr.bf16.mxu0 0
      %733 = vmatpush1.bf16.msra.mxu0 0
      %734 = vmatprep.subr.bf16.mxu0 0
      %735 = vmatpush1.bf16.msra.mxu0 0
      %736 = vmatprep.subr.bf16.mxu0 0
      %737 = vmatpush1.bf16.msra.mxu0 0
      %738 = vmatprep.subr.bf16.mxu0 0
      %739 = vmatpush1.bf16.msra.mxu0 0
      %740 = vmatprep.subr.bf16.mxu0 0
      %741 = vmatpush1.bf16.msra.mxu0 %v726
      %742 = vmatprep.subr.bf16.mxu0 0
      %743 = vmatpush1.bf16.msra.mxu0 %v621
      %744 = vmatprep.subr.bf16.mxu0 0
      %745 = vmatpush2.bf16.msra.mxu0 0
      %746 = vmatprep.subr.bf16.mxu0 0
      %747 = vmatpush2.bf16.msra.mxu0 0
      %748 = vmatprep.subr.bf16.mxu0 0
      %749 = vmatpush2.bf16.msra.mxu0 0
      %750 = vmatprep.subr.bf16.mxu0 0
      %751 = vmatpush2.bf16.msra.mxu0 0
      %752 = vmatprep.subr.bf16.mxu0 0
      %753 = vmatpush2.bf16.msra.mxu0 0
      %754 = vmatprep.subr.bf16.mxu0 0
      %755 = vmatpush2.bf16.msra.mxu0 0
      %756 = vmatprep.subr.bf16.mxu0 0
      %757 = vmatpush2.bf16.msra.mxu0 0
      %758 = vmatprep.subr.bf16.mxu0 0
      %759 = vmatpush2.bf16.msra.mxu0 0
      %760 = vmatprep.mubr.bf16.mxu0 0
      %761 = vmatmul.mubr.bf16.gmra.mxu0 %v626
      %v762 = vpop.f32.mrf.mxu0
      %v763 = vadd.f32 %v451, %v762
      %v764 = vpop.f32.mrf.mxu0
      %v765 = vpop.f32.mrf.mxu0
      %v766 = vadd.f32 %v451, %v765
      %v767 = vpop.f32.mrf.mxu0
      %768 = vmatprep.mubr.bf16.mxu0 0
      %769 = vmatmul.mubr.bf16.gmra.mxu0 %v629
      %v770 = vpop.f32.mrf.mxu0
      %v771 = vadd.f32 %v451, %v770
      %v772 = vpop.f32.mrf.mxu0
      %v773 = vpop.f32.mrf.mxu0
      %v774 = vadd.f32 %v451, %v773
      %v775 = vpop.f32.mrf.mxu0
      %776 = vmatprep.mubr.bf16.mxu0 0
      %777 = vmatmul.mubr.bf16.gmra.mxu0 %v632
      %v778 = vpop.f32.mrf.mxu0
      %v779 = vadd.f32 %v451, %v778
      %v780 = vpop.f32.mrf.mxu0
      %v781 = vpop.f32.mrf.mxu0
      %v782 = vadd.f32 %v451, %v781
      %v783 = vpop.f32.mrf.mxu0
      %784 = vmatprep.mubr.bf16.mxu0 0
      %785 = vmatmul.mubr.bf16.gmra.mxu0 %v635
      %v786 = vpop.f32.mrf.mxu0
      %v787 = vadd.f32 %v451, %v786
      %v788 = vpop.f32.mrf.mxu0
      %v789 = vpop.f32.mrf.mxu0
      %v790 = vadd.f32 %v451, %v789
      %v791 = vpop.f32.mrf.mxu0
      %792 = vmatprep.mubr.bf16.mxu0 0
      %793 = vmatmul.mubr.bf16.gmra.mxu0 %v638
      %v794 = vpop.f32.mrf.mxu0
      %v795 = vadd.f32 %v451, %v794
      %v796 = vpop.f32.mrf.mxu0
      %v797 = vpop.f32.mrf.mxu0
      %v798 = vadd.f32 %v451, %v797
      %v799 = vpop.f32.mrf.mxu0
      %800 = vmatprep.mubr.bf16.mxu0 0
      %801 = vmatmul.mubr.bf16.gmra.mxu0 %v641
      %v802 = vpop.f32.mrf.mxu0
      %v803 = vadd.f32 %v451, %v802
      %v804 = vpop.f32.mrf.mxu0
      %v805 = vpop.f32.mrf.mxu0
      %v806 = vadd.f32 %v451, %v805
      %v807 = vpop.f32.mrf.mxu0
      %808 = vmatprep.mubr.bf16.mxu0 0
      %809 = vmatmul.mubr.bf16.gmra.mxu0 %v644
      %v810 = vpop.f32.mrf.mxu0
      %v811 = vadd.f32 %v451, %v810
      %v812 = vpop.f32.mrf.mxu0
      %v813 = vpop.f32.mrf.mxu0
      %v814 = vadd.f32 %v451, %v813
      %v815 = vpop.f32.mrf.mxu0
      %816 = vmatprep.mubr.bf16.mxu0 0
      %817 = vmatmul.mubr.bf16.gmra.mxu0 %v647
      %v818 = vpop.f32.mrf.mxu0
      %v819 = vadd.f32 %v451, %v818
      %v820 = vpop.f32.mrf.mxu0
      %v821 = vpop.f32.mrf.mxu0
      %v822 = vadd.f32 %v451, %v821
      %v823 = vpop.f32.mrf.mxu0
      %824 = vmatprep.mubr.bf16.mxu0 0
      %825 = vmatmul.mubr.bf16.gmra.mxu0 %v650
      %v826 = vpop.f32.mrf.mxu0
      %v827 = vadd.f32 %v451, %v826
      %v828 = vpop.f32.mrf.mxu0
      %v829 = vpop.f32.mrf.mxu0
      %v830 = vadd.f32 %v451, %v829
      %v831 = vpop.f32.mrf.mxu0
      %832 = vmatprep.mubr.bf16.mxu0 0
      %833 = vmatmul.mubr.bf16.gmra.mxu0 %v653
      %v834 = vpop.f32.mrf.mxu0
      %v835 = vadd.f32 %v451, %v834
      %v836 = vpop.f32.mrf.mxu0
      %v837 = vpop.f32.mrf.mxu0
      %v838 = vadd.f32 %v451, %v837
      %v839 = vpop.f32.mrf.mxu0
      %840 = vmatprep.mubr.bf16.mxu0 0
      %841 = vmatmul.mubr.bf16.gmra.mxu0 %v656
      %v842 = vpop.f32.mrf.mxu0
      %v843 = vadd.f32 %v451, %v842
      %v844 = vpop.f32.mrf.mxu0
      %v845 = vpop.f32.mrf.mxu0
      %v846 = vadd.f32 %v451, %v845
      %v847 = vpop.f32.mrf.mxu0
      %848 = vmatprep.mubr.bf16.mxu0 0
      %849 = vmatmul.mubr.bf16.gmra.mxu0 %v659
      %v850 = vpop.f32.mrf.mxu0
      %v851 = vadd.f32 %v451, %v850
      %v852 = vpop.f32.mrf.mxu0
      %v853 = vpop.f32.mrf.mxu0
      %v854 = vadd.f32 %v451, %v853
      %v855 = vpop.f32.mrf.mxu0
      %856 = vmatprep.mubr.bf16.mxu0 0
      %857 = vmatmul.mubr.bf16.gmra.mxu0 %v662
      %v858 = vpop.f32.mrf.mxu0
      %v859 = vadd.f32 %v451, %v858
      %v860 = vpop.f32.mrf.mxu0
      %v861 = vpop.f32.mrf.mxu0
      %v862 = vadd.f32 %v451, %v861
      %v863 = vpop.f32.mrf.mxu0
      %864 = vmatprep.mubr.bf16.mxu0 0
      %865 = vmatmul.mubr.bf16.gmra.mxu0 %v665
      %v866 = vpop.f32.mrf.mxu0
      %v867 = vadd.f32 %v451, %v866
      %v868 = vpop.f32.mrf.mxu0
      %v869 = vpop.f32.mrf.mxu0
      %v870 = vadd.f32 %v451, %v869
      %v871 = vpop.f32.mrf.mxu0
      %872 = vmatprep.mubr.bf16.mxu0 0
      %873 = vmatmul.mubr.bf16.gmra.mxu0 %v668
      %v874 = vpop.f32.mrf.mxu0
      %v875 = vadd.f32 %v451, %v874
      %v876 = vpop.f32.mrf.mxu0
      %v877 = vpop.f32.mrf.mxu0
      %v878 = vadd.f32 %v451, %v877
      %v879 = vpop.f32.mrf.mxu0
      %880 = vmatprep.mubr.bf16.mxu0 0
      %881 = vmatmul.mubr.bf16.gmra.mxu0 %v671
      %v882 = vpop.f32.mrf.mxu0
      %v883 = vadd.f32 %v451, %v882
      %v884 = vpop.f32.mrf.mxu0
      %v885 = vpop.f32.mrf.mxu0
      %v886 = vadd.f32 %v451, %v885
      %v887 = vpop.f32.mrf.mxu0
      %888 = vmatprep.mubr.bf16.mxu0 0
      %889 = vmatmul.mubr.bf16.gmra.mxu0 %v674
      %v890 = vpop.f32.mrf.mxu0
      %v891 = vadd.f32 %v451, %v890
      %v892 = vpop.f32.mrf.mxu0
      %v893 = vpop.f32.mrf.mxu0
      %v894 = vadd.f32 %v451, %v893
      %v895 = vpop.f32.mrf.mxu0
      %896 = vmatprep.mubr.bf16.mxu0 0
      %897 = vmatmul.mubr.bf16.gmra.mxu0 %v677
      %v898 = vpop.f32.mrf.mxu0
      %v899 = vadd.f32 %v451, %v898
      %v900 = vpop.f32.mrf.mxu0
      %v901 = vpop.f32.mrf.mxu0
      %v902 = vadd.f32 %v451, %v901
      %v903 = vpop.f32.mrf.mxu0
      %904 = vmatprep.mubr.bf16.mxu0 0
      %905 = vmatmul.mubr.bf16.gmra.mxu0 %v680
      %v906 = vpop.f32.mrf.mxu0
      %v907 = vadd.f32 %v451, %v906
      %v908 = vpop.f32.mrf.mxu0
      %v909 = vpop.f32.mrf.mxu0
      %v910 = vadd.f32 %v451, %v909
      %v911 = vpop.f32.mrf.mxu0
      %912 = vmatprep.mubr.bf16.mxu0 0
      %913 = vmatmul.mubr.bf16.gmra.mxu0 %v683
      %v914 = vpop.f32.mrf.mxu0
      %v915 = vadd.f32 %v451, %v914
      %v916 = vpop.f32.mrf.mxu0
      %v917 = vpop.f32.mrf.mxu0
      %v918 = vadd.f32 %v451, %v917
      %v919 = vpop.f32.mrf.mxu0
      %920 = vmatprep.mubr.bf16.mxu0 0
      %921 = vmatmul.mubr.bf16.gmra.mxu0 %v686
      %v922 = vpop.f32.mrf.mxu0
      %v923 = vadd.f32 %v451, %v922
      %v924 = vpop.f32.mrf.mxu0
      %v925 = vpop.f32.mrf.mxu0
      %v926 = vadd.f32 %v451, %v925
      %v927 = vpop.f32.mrf.mxu0
      %928 = vmatprep.mubr.bf16.mxu0 0
      %929 = vmatmul.mubr.bf16.gmra.mxu0 %v689
      %v930 = vpop.f32.mrf.mxu0
      %v931 = vadd.f32 %v451, %v930
      %v932 = vpop.f32.mrf.mxu0
      %v933 = vpop.f32.mrf.mxu0
      %v934 = vadd.f32 %v451, %v933
      %v935 = vpop.f32.mrf.mxu0
      %936 = vmatprep.mubr.bf16.mxu0 0
      %937 = vmatmul.mubr.bf16.gmra.mxu0 %v692
      %v938 = vpop.f32.mrf.mxu0
      %v939 = vadd.f32 %v451, %v938
      %v940 = vpop.f32.mrf.mxu0
      %v941 = vpop.f32.mrf.mxu0
      %v942 = vadd.f32 %v451, %v941
      %v943 = vpop.f32.mrf.mxu0
      %944 = vmatprep.mubr.bf16.mxu0 0
      %945 = vmatmul.mubr.bf16.gmra.mxu0 %v695
      %v946 = vpop.f32.mrf.mxu0
      %v947 = vadd.f32 %v451, %v946
      %v948 = vpop.f32.mrf.mxu0
      %v949 = vpop.f32.mrf.mxu0
      %v950 = vadd.f32 %v451, %v949
      %v951 = vpop.f32.mrf.mxu0
      %952 = vmatprep.mubr.bf16.mxu0 0
      %953 = vmatmul.mubr.bf16.gmra.mxu0 %v698
      %v954 = vpop.f32.mrf.mxu0
      %v955 = vadd.f32 %v451, %v954
      %v956 = vpop.f32.mrf.mxu0
      %v957 = vpop.f32.mrf.mxu0
      %v958 = vadd.f32 %v451, %v957
      %v959 = vpop.f32.mrf.mxu0
      %960 = vmatprep.mubr.bf16.mxu0 0
      %961 = vmatmul.mubr.bf16.gmra.mxu0 %v701
      %v962 = vpop.f32.mrf.mxu0
      %v963 = vadd.f32 %v451, %v962
      %v964 = vpop.f32.mrf.mxu0
      %v965 = vpop.f32.mrf.mxu0
      %v966 = vadd.f32 %v451, %v965
      %v967 = vpop.f32.mrf.mxu0
      %968 = vmatprep.mubr.bf16.mxu0 0
      %969 = vmatmul.mubr.bf16.gmra.mxu0 %v704
      %v970 = vpop.f32.mrf.mxu0
      %v971 = vadd.f32 %v451, %v970
      %v972 = vpop.f32.mrf.mxu0
      %v973 = vpop.f32.mrf.mxu0
      %v974 = vadd.f32 %v451, %v973
      %v975 = vpop.f32.mrf.mxu0
      %976 = vmatprep.mubr.bf16.mxu0 0
      %977 = vmatmul.mubr.bf16.gmra.mxu0 %v707
      %v978 = vpop.f32.mrf.mxu0
      %v979 = vadd.f32 %v451, %v978
      %v980 = vpop.f32.mrf.mxu0
      %v981 = vpop.f32.mrf.mxu0
      %v982 = vadd.f32 %v451, %v981
      %v983 = vpop.f32.mrf.mxu0
      %984 = vmatprep.mubr.bf16.mxu0 0
      %985 = vmatmul.mubr.bf16.gmra.mxu0 %v710
      %v986 = vpop.f32.mrf.mxu0
      %v987 = vadd.f32 %v451, %v986
      %v988 = vpop.f32.mrf.mxu0
      %v989 = vpop.f32.mrf.mxu0
      %v990 = vadd.f32 %v451, %v989
      %v991 = vpop.f32.mrf.mxu0
      %992 = vmatprep.mubr.bf16.mxu0 0
      %993 = vmatmul.mubr.bf16.gmra.mxu0 %v713
      %v994 = vpop.f32.mrf.mxu0
      %v995 = vadd.f32 %v451, %v994
      %v996 = vpop.f32.mrf.mxu0
      %v997 = vpop.f32.mrf.mxu0
      %v998 = vadd.f32 %v451, %v997
      %v999 = vpop.f32.mrf.mxu0
      %1000 = vmatprep.mubr.bf16.mxu0 0
      %1001 = vmatmul.mubr.bf16.gmra.mxu0 %v716
      %v1002 = vpop.f32.mrf.mxu0
      %v1003 = vadd.f32 %v451, %v1002
      %v1004 = vpop.f32.mrf.mxu0
      %v1005 = vpop.f32.mrf.mxu0
      %v1006 = vadd.f32 %v451, %v1005
      %v1007 = vpop.f32.mrf.mxu0
      %1008 = vmatprep.mubr.bf16.mxu0 0
      %1009 = vmatmul.mubr.bf16.gmra.mxu0 %v719
      %v1010 = vpop.f32.mrf.mxu0
      %v1011 = vadd.f32 %v451, %v1010
      %v1012 = vpop.f32.mrf.mxu0
      %v1013 = vpop.f32.mrf.mxu0
      %v1014 = vadd.f32 %v451, %v1013
      %v1015 = vpop.f32.mrf.mxu0
      %1016 = vdwg.mxu0
      %v1017 = vld [vmem:[%s243] sm:$0xff]
      %v1018 = vld [vmem:[%s243 + $0x8] sm:$0xff]
      %v1019 = vld [vmem:[%s243 + $0x10] sm:$0xff]
      %v1020 = vld [vmem:[%s243 + $0x18] sm:$0xff]
      %v1021 = vld [vmem:[%s243 + $0x20] sm:$0xff]
      %v1022 = vld [vmem:[%s243 + $0x28] sm:$0xff]
      %v1023 = vld [vmem:[%s243 + $0x30] sm:$0xff]
      %v1024 = vld [vmem:[%s243 + $0x38] sm:$0xff]
      %v1025 = vld [vmem:[%s243 + $0x40] sm:$0xff]
      %v1026 = vld [vmem:[%s243 + $0x48] sm:$0xff]
      %v1027 = vld [vmem:[%s243 + $0x50] sm:$0xff]
      %v1028 = vld [vmem:[%s243 + $0x58] sm:$0xff]
      %v1029 = vld [vmem:[%s243 + $0x60] sm:$0xff]
      %v1030 = vld [vmem:[%s243 + $0x68] sm:$0xff]
      %v1031 = vld [vmem:[%s243 + $0x70] sm:$0xff]
      %v1032 = vld [vmem:[%s243 + $0x78] sm:$0xff]
      %v1033 = vld [vmem:[%s243 + $0x80] sm:$0xff]
      %v1034 = vld [vmem:[%s243 + $0x88] sm:$0xff]
      %v1035 = vld [vmem:[%s243 + $0x90] sm:$0xff]
      %v1036 = vld [vmem:[%s243 + $0x98] sm:$0xff]
      %v1037 = vld [vmem:[%s243 + $0xa0] sm:$0xff]
      %v1038 = vld [vmem:[%s243 + $0xa8] sm:$0xff]
      %v1039 = vld [vmem:[%s243 + $0xb0] sm:$0xff]
      %v1040 = vld [vmem:[%s243 + $0xb8] sm:$0xff]
      %v1041 = vld [vmem:[%s243 + $0xc0] sm:$0xff]
      %v1042 = vld [vmem:[%s243 + $0xc8] sm:$0xff]
      %v1043 = vld [vmem:[%s243 + $0xd0] sm:$0xff]
      %v1044 = vld [vmem:[%s243 + $0xd8] sm:$0xff]
      %v1045 = vld [vmem:[%s243 + $0xe0] sm:$0xff]
      %v1046 = vld [vmem:[%s243 + $0xe8] sm:$0xff]
      %v1047 = vld [vmem:[%s243 + $0xf0] sm:$0xff]
      %v1048 = vld [vmem:[%s243 + $0xf8] sm:$0xff]
      %v1049 = vld [vmem:[%s243 + $0x100] sm:$0xff]
      %v1050 = vld [vmem:[%s243 + $0x108] sm:$0xff]
      %v1051 = vld [vmem:[%s243 + $0x110] sm:$0xff]
      %v1052 = vld [vmem:[%s243 + $0x118] sm:$0xff]
      %v1053 = vld [vmem:[%s243 + $0x120] sm:$0xff]
      %v1054 = vld [vmem:[%s243 + $0x128] sm:$0xff]
      %v1055 = vld [vmem:[%s243 + $0x130] sm:$0xff]
      %v1056 = vld [vmem:[%s243 + $0x138] sm:$0xff]
      %v1057 = vld [vmem:[%s243 + $0x140] sm:$0xff]
      %v1058 = vld [vmem:[%s243 + $0x148] sm:$0xff]
      %v1059 = vld [vmem:[%s243 + $0x150] sm:$0xff]
      %v1060 = vld [vmem:[%s243 + $0x158] sm:$0xff]
      %v1061 = vld [vmem:[%s243 + $0x160] sm:$0xff]
      %v1062 = vld [vmem:[%s243 + $0x168] sm:$0xff]
      %v1063 = vld [vmem:[%s243 + $0x170] sm:$0xff]
      %v1064 = vld [vmem:[%s243 + $0x178] sm:$0xff]
      %v1065 = vld [vmem:[%s243 + $0x180] sm:$0xff]
      %v1066 = vld [vmem:[%s243 + $0x188] sm:$0xff]
      %v1067 = vld [vmem:[%s243 + $0x190] sm:$0xff]
      %v1068 = vld [vmem:[%s243 + $0x198] sm:$0xff]
      %v1069 = vld [vmem:[%s243 + $0x1a0] sm:$0xff]
      %v1070 = vld [vmem:[%s243 + $0x1a8] sm:$0xff]
      %v1071 = vld [vmem:[%s243 + $0x1b0] sm:$0xff]
      %v1072 = vld [vmem:[%s243 + $0x1b8] sm:$0xff]
      %v1073 = vld [vmem:[%s243 + $0x1c0] sm:$0xff]
      %v1074 = vld [vmem:[%s243 + $0x1c8] sm:$0xff]
      %v1075 = vld [vmem:[%s243 + $0x1d0] sm:$0xff]
      %v1076 = vld [vmem:[%s243 + $0x1d8] sm:$0xff]
      %v1077 = vld [vmem:[%s243 + $0x1e0] sm:$0xff]
      %v1078 = vld [vmem:[%s243 + $0x1e8] sm:$0xff]
      %v1079 = vld [vmem:[%s243 + $0x1f0] sm:$0xff]
      %v1080 = vld [vmem:[%s243 + $0x1f8] sm:$0xff]
      %vm1081 = vcmp.gt.f32.partialorder %v1017, 0.5
      %vm1082 = vcmp.gt.f32.partialorder %v1018, 0.5
      %vm1083 = vcmp.gt.f32.partialorder %v1019, 0.5
      %vm1084 = vcmp.gt.f32.partialorder %v1020, 0.5
      %vm1085 = vcmp.gt.f32.partialorder %v1021, 0.5
      %vm1086 = vcmp.gt.f32.partialorder %v1022, 0.5
      %vm1087 = vcmp.gt.f32.partialorder %v1023, 0.5
      %vm1088 = vcmp.gt.f32.partialorder %v1024, 0.5
      %vm1089 = vcmp.gt.f32.partialorder %v1025, 0.5
      %vm1090 = vcmp.gt.f32.partialorder %v1026, 0.5
      %vm1091 = vcmp.gt.f32.partialorder %v1027, 0.5
      %vm1092 = vcmp.gt.f32.partialorder %v1028, 0.5
      %vm1093 = vcmp.gt.f32.partialorder %v1029, 0.5
      %vm1094 = vcmp.gt.f32.partialorder %v1030, 0.5
      %vm1095 = vcmp.gt.f32.partialorder %v1031, 0.5
      %vm1096 = vcmp.gt.f32.partialorder %v1032, 0.5
      %vm1097 = vcmp.gt.f32.partialorder %v1033, 0.5
      %vm1098 = vcmp.gt.f32.partialorder %v1034, 0.5
      %vm1099 = vcmp.gt.f32.partialorder %v1035, 0.5
      %vm1100 = vcmp.gt.f32.partialorder %v1036, 0.5
      %vm1101 = vcmp.gt.f32.partialorder %v1037, 0.5
      %vm1102 = vcmp.gt.f32.partialorder %v1038, 0.5
      %vm1103 = vcmp.gt.f32.partialorder %v1039, 0.5
      %vm1104 = vcmp.gt.f32.partialorder %v1040, 0.5
      %vm1105 = vcmp.gt.f32.partialorder %v1041, 0.5
      %vm1106 = vcmp.gt.f32.partialorder %v1042, 0.5
      %vm1107 = vcmp.gt.f32.partialorder %v1043, 0.5
      %vm1108 = vcmp.gt.f32.partialorder %v1044, 0.5
      %vm1109 = vcmp.gt.f32.partialorder %v1045, 0.5
      %vm1110 = vcmp.gt.f32.partialorder %v1046, 0.5
      %vm1111 = vcmp.gt.f32.partialorder %v1047, 0.5
      %vm1112 = vcmp.gt.f32.partialorder %v1048, 0.5
      %vm1113 = vcmp.gt.f32.partialorder %v1049, 0.5
      %vm1114 = vcmp.gt.f32.partialorder %v1050, 0.5
      %vm1115 = vcmp.gt.f32.partialorder %v1051, 0.5
      %vm1116 = vcmp.gt.f32.partialorder %v1052, 0.5
      %vm1117 = vcmp.gt.f32.partialorder %v1053, 0.5
      %vm1118 = vcmp.gt.f32.partialorder %v1054, 0.5
      %vm1119 = vcmp.gt.f32.partialorder %v1055, 0.5
      %vm1120 = vcmp.gt.f32.partialorder %v1056, 0.5
      %vm1121 = vcmp.gt.f32.partialorder %v1057, 0.5
      %vm1122 = vcmp.gt.f32.partialorder %v1058, 0.5
      %vm1123 = vcmp.gt.f32.partialorder %v1059, 0.5
      %vm1124 = vcmp.gt.f32.partialorder %v1060, 0.5
      %vm1125 = vcmp.gt.f32.partialorder %v1061, 0.5
      %vm1126 = vcmp.gt.f32.partialorder %v1062, 0.5
      %vm1127 = vcmp.gt.f32.partialorder %v1063, 0.5
      %vm1128 = vcmp.gt.f32.partialorder %v1064, 0.5
      %vm1129 = vcmp.gt.f32.partialorder %v1065, 0.5
      %vm1130 = vcmp.gt.f32.partialorder %v1066, 0.5
      %vm1131 = vcmp.gt.f32.partialorder %v1067, 0.5
      %vm1132 = vcmp.gt.f32.partialorder %v1068, 0.5
      %vm1133 = vcmp.gt.f32.partialorder %v1069, 0.5
      %vm1134 = vcmp.gt.f32.partialorder %v1070, 0.5
      %vm1135 = vcmp.gt.f32.partialorder %v1071, 0.5
      %vm1136 = vcmp.gt.f32.partialorder %v1072, 0.5
      %vm1137 = vcmp.gt.f32.partialorder %v1073, 0.5
      %vm1138 = vcmp.gt.f32.partialorder %v1074, 0.5
      %vm1139 = vcmp.gt.f32.partialorder %v1075, 0.5
      %vm1140 = vcmp.gt.f32.partialorder %v1076, 0.5
      %vm1141 = vcmp.gt.f32.partialorder %v1077, 0.5
      %vm1142 = vcmp.gt.f32.partialorder %v1078, 0.5
      %vm1143 = vcmp.gt.f32.partialorder %v1079, 0.5
      %vm1144 = vcmp.gt.f32.partialorder %v1080, 0.5
      %v1145 = vsel %vm1081, 1, 0
      %v1146 = vsel %vm1082, 1, 0
      %v1147 = vsel %vm1083, 1, 0
      %v1148 = vsel %vm1084, 1, 0
      %v1149 = vsel %vm1085, 1, 0
      %v1150 = vsel %vm1086, 1, 0
      %v1151 = vsel %vm1087, 1, 0
      %v1152 = vsel %vm1088, 1, 0
      %v1153 = vsel %vm1089, 1, 0
      %v1154 = vsel %vm1090, 1, 0
      %v1155 = vsel %vm1091, 1, 0
      %v1156 = vsel %vm1092, 1, 0
      %v1157 = vsel %vm1093, 1, 0
      %v1158 = vsel %vm1094, 1, 0
      %v1159 = vsel %vm1095, 1, 0
      %v1160 = vsel %vm1096, 1, 0
      %v1161 = vsel %vm1097, 1, 0
      %v1162 = vsel %vm1098, 1, 0
      %v1163 = vsel %vm1099, 1, 0
      %v1164 = vsel %vm1100, 1, 0
      %v1165 = vsel %vm1101, 1, 0
      %v1166 = vsel %vm1102, 1, 0
      %v1167 = vsel %vm1103, 1, 0
      %v1168 = vsel %vm1104, 1, 0
      %v1169 = vsel %vm1105, 1, 0
      %v1170 = vsel %vm1106, 1, 0
      %v1171 = vsel %vm1107, 1, 0
      %v1172 = vsel %vm1108, 1, 0
      %v1173 = vsel %vm1109, 1, 0
      %v1174 = vsel %vm1110, 1, 0
      %v1175 = vsel %vm1111, 1, 0
      %v1176 = vsel %vm1112, 1, 0
      %v1177 = vsel %vm1113, 1, 0
      %v1178 = vsel %vm1114, 1, 0
      %v1179 = vsel %vm1115, 1, 0
      %v1180 = vsel %vm1116, 1, 0
      %v1181 = vsel %vm1117, 1, 0
      %v1182 = vsel %vm1118, 1, 0
      %v1183 = vsel %vm1119, 1, 0
      %v1184 = vsel %vm1120, 1, 0
      %v1185 = vsel %vm1121, 1, 0
      %v1186 = vsel %vm1122, 1, 0
      %v1187 = vsel %vm1123, 1, 0
      %v1188 = vsel %vm1124, 1, 0
      %v1189 = vsel %vm1125, 1, 0
      %v1190 = vsel %vm1126, 1, 0
      %v1191 = vsel %vm1127, 1, 0
      %v1192 = vsel %vm1128, 1, 0
      %v1193 = vsel %vm1129, 1, 0
      %v1194 = vsel %vm1130, 1, 0
      %v1195 = vsel %vm1131, 1, 0
      %v1196 = vsel %vm1132, 1, 0
      %v1197 = vsel %vm1133, 1, 0
      %v1198 = vsel %vm1134, 1, 0
      %v1199 = vsel %vm1135, 1, 0
      %v1200 = vsel %vm1136, 1, 0
      %v1201 = vsel %vm1137, 1, 0
      %v1202 = vsel %vm1138, 1, 0
      %v1203 = vsel %vm1139, 1, 0
      %v1204 = vsel %vm1140, 1, 0
      %v1205 = vsel %vm1141, 1, 0
      %v1206 = vsel %vm1142, 1, 0
      %v1207 = vsel %vm1143, 1, 0
      %v1208 = vsel %vm1144, 1, 0
      %1209 = vset.pattern.permute.xlu0 0
      %1210 = vperm.xlu0 %1209, %v1145
      %v1211 = vpop.permute.xlu0 %1210
      %1212 = vset.pattern.permute.xlu0 0
      %1213 = vperm.xlu0 %1212, %v1146
      %v1214 = vpop.permute.xlu0 %1213
      %1215 = vset.pattern.permute.xlu0 0
      %1216 = vperm.xlu0 %1215, %v1147
      %v1217 = vpop.permute.xlu0 %1216
      %1218 = vset.pattern.permute.xlu0 0
      %1219 = vperm.xlu0 %1218, %v1148
      %v1220 = vpop.permute.xlu0 %1219
      %1221 = vset.pattern.permute.xlu0 0
      %1222 = vperm.xlu0 %1221, %v1149
      %v1223 = vpop.permute.xlu0 %1222
      %1224 = vset.pattern.permute.xlu0 0
      %1225 = vperm.xlu0 %1224, %v1150
      %v1226 = vpop.permute.xlu0 %1225
      %1227 = vset.pattern.permute.xlu0 0
      %1228 = vperm.xlu0 %1227, %v1151
      %v1229 = vpop.permute.xlu0 %1228
      %1230 = vset.pattern.permute.xlu0 0
      %1231 = vperm.xlu0 %1230, %v1152
      %v1232 = vpop.permute.xlu0 %1231
      %1233 = vset.pattern.permute.xlu0 0
      %1234 = vperm.xlu0 %1233, %v1153
      %v1235 = vpop.permute.xlu0 %1234
      %1236 = vset.pattern.permute.xlu0 0
      %1237 = vperm.xlu0 %1236, %v1154
      %v1238 = vpop.permute.xlu0 %1237
      %1239 = vset.pattern.permute.xlu0 0
      %1240 = vperm.xlu0 %1239, %v1155
      %v1241 = vpop.permute.xlu0 %1240
      %1242 = vset.pattern.permute.xlu0 0
      %1243 = vperm.xlu0 %1242, %v1156
      %v1244 = vpop.permute.xlu0 %1243
      %1245 = vset.pattern.permute.xlu0 0
      %1246 = vperm.xlu0 %1245, %v1157
      %v1247 = vpop.permute.xlu0 %1246
      %1248 = vset.pattern.permute.xlu0 0
      %1249 = vperm.xlu0 %1248, %v1158
      %v1250 = vpop.permute.xlu0 %1249
      %1251 = vset.pattern.permute.xlu0 0
      %1252 = vperm.xlu0 %1251, %v1159
      %v1253 = vpop.permute.xlu0 %1252
      %1254 = vset.pattern.permute.xlu0 0
      %1255 = vperm.xlu0 %1254, %v1160
      %v1256 = vpop.permute.xlu0 %1255
      %1257 = vset.pattern.permute.xlu0 0
      %1258 = vperm.xlu0 %1257, %v1161
      %v1259 = vpop.permute.xlu0 %1258
      %1260 = vset.pattern.permute.xlu0 0
      %1261 = vperm.xlu0 %1260, %v1162
      %v1262 = vpop.permute.xlu0 %1261
      %1263 = vset.pattern.permute.xlu0 0
      %1264 = vperm.xlu0 %1263, %v1163
      %v1265 = vpop.permute.xlu0 %1264
      %1266 = vset.pattern.permute.xlu0 0
      %1267 = vperm.xlu0 %1266, %v1164
      %v1268 = vpop.permute.xlu0 %1267
      %1269 = vset.pattern.permute.xlu0 0
      %1270 = vperm.xlu0 %1269, %v1165
      %v1271 = vpop.permute.xlu0 %1270
      %1272 = vset.pattern.permute.xlu0 0
      %1273 = vperm.xlu0 %1272, %v1166
      %v1274 = vpop.permute.xlu0 %1273
      %1275 = vset.pattern.permute.xlu0 0
      %1276 = vperm.xlu0 %1275, %v1167
      %v1277 = vpop.permute.xlu0 %1276
      %1278 = vset.pattern.permute.xlu0 0
      %1279 = vperm.xlu0 %1278, %v1168
      %v1280 = vpop.permute.xlu0 %1279
      %1281 = vset.pattern.permute.xlu0 0
      %1282 = vperm.xlu0 %1281, %v1169
      %v1283 = vpop.permute.xlu0 %1282
      %1284 = vset.pattern.permute.xlu0 0
      %1285 = vperm.xlu0 %1284, %v1170
      %v1286 = vpop.permute.xlu0 %1285
      %1287 = vset.pattern.permute.xlu0 0
      %1288 = vperm.xlu0 %1287, %v1171
      %v1289 = vpop.permute.xlu0 %1288
      %1290 = vset.pattern.permute.xlu0 0
      %1291 = vperm.xlu0 %1290, %v1172
      %v1292 = vpop.permute.xlu0 %1291
      %1293 = vset.pattern.permute.xlu0 0
      %1294 = vperm.xlu0 %1293, %v1173
      %v1295 = vpop.permute.xlu0 %1294
      %1296 = vset.pattern.permute.xlu0 0
      %1297 = vperm.xlu0 %1296, %v1174
      %v1298 = vpop.permute.xlu0 %1297
      %1299 = vset.pattern.permute.xlu0 0
      %1300 = vperm.xlu0 %1299, %v1175
      %v1301 = vpop.permute.xlu0 %1300
      %1302 = vset.pattern.permute.xlu0 0
      %1303 = vperm.xlu0 %1302, %v1176
      %v1304 = vpop.permute.xlu0 %1303
      %1305 = vset.pattern.permute.xlu0 0
      %1306 = vperm.xlu0 %1305, %v1177
      %v1307 = vpop.permute.xlu0 %1306
      %1308 = vset.pattern.permute.xlu0 0
      %1309 = vperm.xlu0 %1308, %v1178
      %v1310 = vpop.permute.xlu0 %1309
      %1311 = vset.pattern.permute.xlu0 0
      %1312 = vperm.xlu0 %1311, %v1179
      %v1313 = vpop.permute.xlu0 %1312
      %1314 = vset.pattern.permute.xlu0 0
      %1315 = vperm.xlu0 %1314, %v1180
      %v1316 = vpop.permute.xlu0 %1315
      %1317 = vset.pattern.permute.xlu0 0
      %1318 = vperm.xlu0 %1317, %v1181
      %v1319 = vpop.permute.xlu0 %1318
      %1320 = vset.pattern.permute.xlu0 0
      %1321 = vperm.xlu0 %1320, %v1182
      %v1322 = vpop.permute.xlu0 %1321
      %1323 = vset.pattern.permute.xlu0 0
      %1324 = vperm.xlu0 %1323, %v1183
      %v1325 = vpop.permute.xlu0 %1324
      %1326 = vset.pattern.permute.xlu0 0
      %1327 = vperm.xlu0 %1326, %v1184
      %v1328 = vpop.permute.xlu0 %1327
      %1329 = vset.pattern.permute.xlu0 0
      %1330 = vperm.xlu0 %1329, %v1185
      %v1331 = vpop.permute.xlu0 %1330
      %1332 = vset.pattern.permute.xlu0 0
      %1333 = vperm.xlu0 %1332, %v1186
      %v1334 = vpop.permute.xlu0 %1333
      %1335 = vset.pattern.permute.xlu0 0
      %1336 = vperm.xlu0 %1335, %v1187
      %v1337 = vpop.permute.xlu0 %1336
      %1338 = vset.pattern.permute.xlu0 0
      %1339 = vperm.xlu0 %1338, %v1188
      %v1340 = vpop.permute.xlu0 %1339
      %1341 = vset.pattern.permute.xlu0 0
      %1342 = vperm.xlu0 %1341, %v1189
      %v1343 = vpop.permute.xlu0 %1342
      %1344 = vset.pattern.permute.xlu0 0
      %1345 = vperm.xlu0 %1344, %v1190
      %v1346 = vpop.permute.xlu0 %1345
      %1347 = vset.pattern.permute.xlu0 0
      %1348 = vperm.xlu0 %1347, %v1191
      %v1349 = vpop.permute.xlu0 %1348
      %1350 = vset.pattern.permute.xlu0 0
      %1351 = vperm.xlu0 %1350, %v1192
      %v1352 = vpop.permute.xlu0 %1351
      %1353 = vset.pattern.permute.xlu0 0
      %1354 = vperm.xlu0 %1353, %v1193
      %v1355 = vpop.permute.xlu0 %1354
      %1356 = vset.pattern.permute.xlu0 0
      %1357 = vperm.xlu0 %1356, %v1194
      %v1358 = vpop.permute.xlu0 %1357
      %1359 = vset.pattern.permute.xlu0 0
      %1360 = vperm.xlu0 %1359, %v1195
      %v1361 = vpop.permute.xlu0 %1360
      %1362 = vset.pattern.permute.xlu0 0
      %1363 = vperm.xlu0 %1362, %v1196
      %v1364 = vpop.permute.xlu0 %1363
      %1365 = vset.pattern.permute.xlu0 0
      %1366 = vperm.xlu0 %1365, %v1197
      %v1367 = vpop.permute.xlu0 %1366
      %1368 = vset.pattern.permute.xlu0 0
      %1369 = vperm.xlu0 %1368, %v1198
      %v1370 = vpop.permute.xlu0 %1369
      %1371 = vset.pattern.permute.xlu0 0
      %1372 = vperm.xlu0 %1371, %v1199
      %v1373 = vpop.permute.xlu0 %1372
      %1374 = vset.pattern.permute.xlu0 0
      %1375 = vperm.xlu0 %1374, %v1200
      %v1376 = vpop.permute.xlu0 %1375
      %1377 = vset.pattern.permute.xlu0 0
      %1378 = vperm.xlu0 %1377, %v1201
      %v1379 = vpop.permute.xlu0 %1378
      %1380 = vset.pattern.permute.xlu0 0
      %1381 = vperm.xlu0 %1380, %v1202
      %v1382 = vpop.permute.xlu0 %1381
      %1383 = vset.pattern.permute.xlu0 0
      %1384 = vperm.xlu0 %1383, %v1203
      %v1385 = vpop.permute.xlu0 %1384
      %1386 = vset.pattern.permute.xlu0 0
      %1387 = vperm.xlu0 %1386, %v1204
      %v1388 = vpop.permute.xlu0 %1387
      %1389 = vset.pattern.permute.xlu0 0
      %1390 = vperm.xlu0 %1389, %v1205
      %v1391 = vpop.permute.xlu0 %1390
      %1392 = vset.pattern.permute.xlu0 0
      %1393 = vperm.xlu0 %1392, %v1206
      %v1394 = vpop.permute.xlu0 %1393
      %1395 = vset.pattern.permute.xlu0 0
      %1396 = vperm.xlu0 %1395, %v1207
      %v1397 = vpop.permute.xlu0 %1396
      %1398 = vset.pattern.permute.xlu0 0
      %1399 = vperm.xlu0 %1398, %v1208
      %v1400 = vpop.permute.xlu0 %1399
      %vm1401 = vcmp.eq.s32.totalorder %v1211, 1
      %vm1402 = vcmp.eq.s32.totalorder %v1214, 1
      %vm1403 = vcmp.eq.s32.totalorder %v1217, 1
      %vm1404 = vcmp.eq.s32.totalorder %v1220, 1
      %vm1405 = vcmp.eq.s32.totalorder %v1223, 1
      %vm1406 = vcmp.eq.s32.totalorder %v1226, 1
      %vm1407 = vcmp.eq.s32.totalorder %v1229, 1
      %vm1408 = vcmp.eq.s32.totalorder %v1232, 1
      %vm1409 = vcmp.eq.s32.totalorder %v1235, 1
      %vm1410 = vcmp.eq.s32.totalorder %v1238, 1
      %vm1411 = vcmp.eq.s32.totalorder %v1241, 1
      %vm1412 = vcmp.eq.s32.totalorder %v1244, 1
      %vm1413 = vcmp.eq.s32.totalorder %v1247, 1
      %vm1414 = vcmp.eq.s32.totalorder %v1250, 1
      %vm1415 = vcmp.eq.s32.totalorder %v1253, 1
      %vm1416 = vcmp.eq.s32.totalorder %v1256, 1
      %vm1417 = vcmp.eq.s32.totalorder %v1259, 1
      %vm1418 = vcmp.eq.s32.totalorder %v1262, 1
      %vm1419 = vcmp.eq.s32.totalorder %v1265, 1
      %vm1420 = vcmp.eq.s32.totalorder %v1268, 1
      %vm1421 = vcmp.eq.s32.totalorder %v1271, 1
      %vm1422 = vcmp.eq.s32.totalorder %v1274, 1
      %vm1423 = vcmp.eq.s32.totalorder %v1277, 1
      %vm1424 = vcmp.eq.s32.totalorder %v1280, 1
      %vm1425 = vcmp.eq.s32.totalorder %v1283, 1
      %vm1426 = vcmp.eq.s32.totalorder %v1286, 1
      %vm1427 = vcmp.eq.s32.totalorder %v1289, 1
      %vm1428 = vcmp.eq.s32.totalorder %v1292, 1
      %vm1429 = vcmp.eq.s32.totalorder %v1295, 1
      %vm1430 = vcmp.eq.s32.totalorder %v1298, 1
      %vm1431 = vcmp.eq.s32.totalorder %v1301, 1
      %vm1432 = vcmp.eq.s32.totalorder %v1304, 1
      %vm1433 = vcmp.eq.s32.totalorder %v1307, 1
      %vm1434 = vcmp.eq.s32.totalorder %v1310, 1
      %vm1435 = vcmp.eq.s32.totalorder %v1313, 1
      %vm1436 = vcmp.eq.s32.totalorder %v1316, 1
      %vm1437 = vcmp.eq.s32.totalorder %v1319, 1
      %vm1438 = vcmp.eq.s32.totalorder %v1322, 1
      %vm1439 = vcmp.eq.s32.totalorder %v1325, 1
      %vm1440 = vcmp.eq.s32.totalorder %v1328, 1
      %vm1441 = vcmp.eq.s32.totalorder %v1331, 1
      %vm1442 = vcmp.eq.s32.totalorder %v1334, 1
      %vm1443 = vcmp.eq.s32.totalorder %v1337, 1
      %vm1444 = vcmp.eq.s32.totalorder %v1340, 1
      %vm1445 = vcmp.eq.s32.totalorder %v1343, 1
      %vm1446 = vcmp.eq.s32.totalorder %v1346, 1
      %vm1447 = vcmp.eq.s32.totalorder %v1349, 1
      %vm1448 = vcmp.eq.s32.totalorder %v1352, 1
      %vm1449 = vcmp.eq.s32.totalorder %v1355, 1
      %vm1450 = vcmp.eq.s32.totalorder %v1358, 1
      %vm1451 = vcmp.eq.s32.totalorder %v1361, 1
      %vm1452 = vcmp.eq.s32.totalorder %v1364, 1
      %vm1453 = vcmp.eq.s32.totalorder %v1367, 1
      %vm1454 = vcmp.eq.s32.totalorder %v1370, 1
      %vm1455 = vcmp.eq.s32.totalorder %v1373, 1
      %vm1456 = vcmp.eq.s32.totalorder %v1376, 1
      %vm1457 = vcmp.eq.s32.totalorder %v1379, 1
      %vm1458 = vcmp.eq.s32.totalorder %v1382, 1
      %vm1459 = vcmp.eq.s32.totalorder %v1385, 1
      %vm1460 = vcmp.eq.s32.totalorder %v1388, 1
      %vm1461 = vcmp.eq.s32.totalorder %v1391, 1
      %vm1462 = vcmp.eq.s32.totalorder %v1394, 1
      %vm1463 = vcmp.eq.s32.totalorder %v1397, 1
      %vm1464 = vcmp.eq.s32.totalorder %v1400, 1
      %v1465 = vsel %vm1401, %v763, 0.0
      %v1466 = vsel %vm1402, %v766, 0.0
      %v1467 = vsel %vm1403, %v771, 0.0
      %v1468 = vsel %vm1404, %v774, 0.0
      %v1469 = vsel %vm1405, %v779, 0.0
      %v1470 = vsel %vm1406, %v782, 0.0
      %v1471 = vsel %vm1407, %v787, 0.0
      %v1472 = vsel %vm1408, %v790, 0.0
      %v1473 = vsel %vm1409, %v795, 0.0
      %v1474 = vsel %vm1410, %v798, 0.0
      %v1475 = vsel %vm1411, %v803, 0.0
      %v1476 = vsel %vm1412, %v806, 0.0
      %v1477 = vsel %vm1413, %v811, 0.0
      %v1478 = vsel %vm1414, %v814, 0.0
      %v1479 = vsel %vm1415, %v819, 0.0
      %v1480 = vsel %vm1416, %v822, 0.0
      %v1481 = vsel %vm1417, %v827, 0.0
      %v1482 = vsel %vm1418, %v830, 0.0
      %v1483 = vsel %vm1419, %v835, 0.0
      %v1484 = vsel %vm1420, %v838, 0.0
      %v1485 = vsel %vm1421, %v843, 0.0
      %v1486 = vsel %vm1422, %v846, 0.0
      %v1487 = vsel %vm1423, %v851, 0.0
      %v1488 = vsel %vm1424, %v854, 0.0
      %v1489 = vsel %vm1425, %v859, 0.0
      %v1490 = vsel %vm1426, %v862, 0.0
      %v1491 = vsel %vm1427, %v867, 0.0
      %v1492 = vsel %vm1428, %v870, 0.0
      %v1493 = vsel %vm1429, %v875, 0.0
      %v1494 = vsel %vm1430, %v878, 0.0
      %v1495 = vsel %vm1431, %v883, 0.0
      %v1496 = vsel %vm1432, %v886, 0.0
      %v1497 = vsel %vm1433, %v891, 0.0
      %v1498 = vsel %vm1434, %v894, 0.0
      %v1499 = vsel %vm1435, %v899, 0.0
      %v1500 = vsel %vm1436, %v902, 0.0
      %v1501 = vsel %vm1437, %v907, 0.0
      %v1502 = vsel %vm1438, %v910, 0.0
      %v1503 = vsel %vm1439, %v915, 0.0
      %v1504 = vsel %vm1440, %v918, 0.0
      %v1505 = vsel %vm1441, %v923, 0.0
      %v1506 = vsel %vm1442, %v926, 0.0
      %v1507 = vsel %vm1443, %v931, 0.0
      %v1508 = vsel %vm1444, %v934, 0.0
      %v1509 = vsel %vm1445, %v939, 0.0
      %v1510 = vsel %vm1446, %v942, 0.0
      %v1511 = vsel %vm1447, %v947, 0.0
      %v1512 = vsel %vm1448, %v950, 0.0
      %v1513 = vsel %vm1449, %v955, 0.0
      %v1514 = vsel %vm1450, %v958, 0.0
      %v1515 = vsel %vm1451, %v963, 0.0
      %v1516 = vsel %vm1452, %v966, 0.0
      %v1517 = vsel %vm1453, %v971, 0.0
      %v1518 = vsel %vm1454, %v974, 0.0
      %v1519 = vsel %vm1455, %v979, 0.0
      %v1520 = vsel %vm1456, %v982, 0.0
      %v1521 = vsel %vm1457, %v987, 0.0
      %v1522 = vsel %vm1458, %v990, 0.0
      %v1523 = vsel %vm1459, %v995, 0.0
      %v1524 = vsel %vm1460, %v998, 0.0
      %v1525 = vsel %vm1461, %v1003, 0.0
      %v1526 = vsel %vm1462, %v1006, 0.0
      %v1527 = vsel %vm1463, %v1011, 0.0
      %v1528 = vsel %vm1464, %v1014, 0.0
      %v1529 = vpack.c.bf16 %v1466, %v1465
      %v1530 = vpack.c.bf16 %v1468, %v1467
      %v1531 = vpack.c.bf16 %v1470, %v1469
      %v1532 = vpack.c.bf16 %v1472, %v1471
      %v1533 = vpack.c.bf16 %v1474, %v1473
      %v1534 = vpack.c.bf16 %v1476, %v1475
      %v1535 = vpack.c.bf16 %v1478, %v1477
      %v1536 = vpack.c.bf16 %v1480, %v1479
      %v1537 = vpack.c.bf16 %v1482, %v1481
      %v1538 = vpack.c.bf16 %v1484, %v1483
      %v1539 = vpack.c.bf16 %v1486, %v1485
      %v1540 = vpack.c.bf16 %v1488, %v1487
      %v1541 = vpack.c.bf16 %v1490, %v1489
      %v1542 = vpack.c.bf16 %v1492, %v1491
      %v1543 = vpack.c.bf16 %v1494, %v1493
      %v1544 = vpack.c.bf16 %v1496, %v1495
      %v1545 = vpack.c.bf16 %v1498, %v1497
      %v1546 = vpack.c.bf16 %v1500, %v1499
      %v1547 = vpack.c.bf16 %v1502, %v1501
      %v1548 = vpack.c.bf16 %v1504, %v1503
      %v1549 = vpack.c.bf16 %v1506, %v1505
      %v1550 = vpack.c.bf16 %v1508, %v1507
      %v1551 = vpack.c.bf16 %v1510, %v1509
      %v1552 = vpack.c.bf16 %v1512, %v1511
      %v1553 = vpack.c.bf16 %v1514, %v1513
      %v1554 = vpack.c.bf16 %v1516, %v1515
      %v1555 = vpack.c.bf16 %v1518, %v1517
      %v1556 = vpack.c.bf16 %v1520, %v1519
      %v1557 = vpack.c.bf16 %v1522, %v1521
      %v1558 = vpack.c.bf16 %v1524, %v1523
      %v1559 = vpack.c.bf16 %v1526, %v1525
      %v1560 = vpack.c.bf16 %v1528, %v1527
      %v1593 = vunpack.c.l.b16 %v1529
      %v1594 = vunpack.c.h.b16 %v1529
      %v1595 = vunpack.c.l.b16 %v1530
      %v1596 = vunpack.c.h.b16 %v1530
      %v1597 = vunpack.c.l.b16 %v1531
      %v1598 = vunpack.c.h.b16 %v1531
      %v1599 = vunpack.c.l.b16 %v1532
      %v1600 = vunpack.c.h.b16 %v1532
      %v1601 = vunpack.c.l.b16 %v1533
      %v1602 = vunpack.c.h.b16 %v1533
      %v1603 = vunpack.c.l.b16 %v1534
      %v1604 = vunpack.c.h.b16 %v1534
      %v1605 = vunpack.c.l.b16 %v1535
      %v1606 = vunpack.c.h.b16 %v1535
      %v1607 = vunpack.c.l.b16 %v1536
      %v1608 = vunpack.c.h.b16 %v1536
      %v1609 = vunpack.c.l.b16 %v1537
      %v1610 = vunpack.c.h.b16 %v1537
      %v1611 = vunpack.c.l.b16 %v1538
      %v1612 = vunpack.c.h.b16 %v1538
      %v1613 = vunpack.c.l.b16 %v1539
      %v1614 = vunpack.c.h.b16 %v1539
      %v1615 = vunpack.c.l.b16 %v1540
      %v1616 = vunpack.c.h.b16 %v1540
      %v1617 = vunpack.c.l.b16 %v1541
      %v1618 = vunpack.c.h.b16 %v1541
      %v1619 = vunpack.c.l.b16 %v1542
      %v1620 = vunpack.c.h.b16 %v1542
      %v1621 = vunpack.c.l.b16 %v1543
      %v1622 = vunpack.c.h.b16 %v1543
      %v1623 = vunpack.c.l.b16 %v1544
      %v1624 = vunpack.c.h.b16 %v1544
      %v1625 = vunpack.c.l.b16 %v1545
      %v1626 = vunpack.c.h.b16 %v1545
      %v1627 = vunpack.c.l.b16 %v1546
      %v1628 = vunpack.c.h.b16 %v1546
      %v1629 = vunpack.c.l.b16 %v1547
      %v1630 = vunpack.c.h.b16 %v1547
      %v1631 = vunpack.c.l.b16 %v1548
      %v1632 = vunpack.c.h.b16 %v1548
      %v1633 = vunpack.c.l.b16 %v1549
      %v1634 = vunpack.c.h.b16 %v1549
      %v1635 = vunpack.c.l.b16 %v1550
      %v1636 = vunpack.c.h.b16 %v1550
      %v1637 = vunpack.c.l.b16 %v1551
      %v1638 = vunpack.c.h.b16 %v1551
      %v1639 = vunpack.c.l.b16 %v1552
      %v1640 = vunpack.c.h.b16 %v1552
      %v1641 = vunpack.c.l.b16 %v1553
      %v1642 = vunpack.c.h.b16 %v1553
      %v1643 = vunpack.c.l.b16 %v1554
      %v1644 = vunpack.c.h.b16 %v1554
      %v1645 = vunpack.c.l.b16 %v1555
      %v1646 = vunpack.c.h.b16 %v1555
      %v1647 = vunpack.c.l.b16 %v1556
      %v1648 = vunpack.c.h.b16 %v1556
      %v1649 = vunpack.c.l.b16 %v1557
      %v1650 = vunpack.c.h.b16 %v1557
      %v1651 = vunpack.c.l.b16 %v1558
      %v1652 = vunpack.c.h.b16 %v1558
      %v1653 = vunpack.c.l.b16 %v1559
      %v1654 = vunpack.c.h.b16 %v1559
      %v1655 = vunpack.c.l.b16 %v1560
      %v1656 = vunpack.c.h.b16 %v1560
      %v1657 = vpack.c.b16 %v1593, %v1593
      %v1658 = vpack.c.b16 %v1594, %v1594
      %v1659 = vpack.c.b16 %v1595, %v1595
      %v1660 = vpack.c.b16 %v1596, %v1596
      %v1661 = vpack.c.b16 %v1597, %v1597
      %v1662 = vpack.c.b16 %v1598, %v1598
      %v1663 = vpack.c.b16 %v1599, %v1599
      %v1664 = vpack.c.b16 %v1600, %v1600
      %v1665 = vpack.c.b16 %v1601, %v1601
      %v1666 = vpack.c.b16 %v1602, %v1602
      %v1667 = vpack.c.b16 %v1603, %v1603
      %v1668 = vpack.c.b16 %v1604, %v1604
      %v1669 = vpack.c.b16 %v1605, %v1605
      %v1670 = vpack.c.b16 %v1606, %v1606
      %v1671 = vpack.c.b16 %v1607, %v1607
      %v1672 = vpack.c.b16 %v1608, %v1608
      %v1673 = vpack.c.b16 %v1609, %v1609
      %v1674 = vpack.c.b16 %v1610, %v1610
      %v1675 = vpack.c.b16 %v1611, %v1611
      %v1676 = vpack.c.b16 %v1612, %v1612
      %v1677 = vpack.c.b16 %v1613, %v1613
      %v1678 = vpack.c.b16 %v1614, %v1614
      %v1679 = vpack.c.b16 %v1615, %v1615
      %v1680 = vpack.c.b16 %v1616, %v1616
      %v1681 = vpack.c.b16 %v1617, %v1617
      %v1682 = vpack.c.b16 %v1618, %v1618
      %v1683 = vpack.c.b16 %v1619, %v1619
      %v1684 = vpack.c.b16 %v1620, %v1620
      %v1685 = vpack.c.b16 %v1621, %v1621
      %v1686 = vpack.c.b16 %v1622, %v1622
      %v1687 = vpack.c.b16 %v1623, %v1623
      %v1688 = vpack.c.b16 %v1624, %v1624
      %v1689 = vpack.c.b16 %v1625, %v1625
      %v1690 = vpack.c.b16 %v1626, %v1626
      %v1691 = vpack.c.b16 %v1627, %v1627
      %v1692 = vpack.c.b16 %v1628, %v1628
      %v1693 = vpack.c.b16 %v1629, %v1629
      %v1694 = vpack.c.b16 %v1630, %v1630
      %v1695 = vpack.c.b16 %v1631, %v1631
      %v1696 = vpack.c.b16 %v1632, %v1632
      %v1697 = vpack.c.b16 %v1633, %v1633
      %v1698 = vpack.c.b16 %v1634, %v1634
      %v1699 = vpack.c.b16 %v1635, %v1635
      %v1700 = vpack.c.b16 %v1636, %v1636
      %v1701 = vpack.c.b16 %v1637, %v1637
      %v1702 = vpack.c.b16 %v1638, %v1638
      %v1703 = vpack.c.b16 %v1639, %v1639
      %v1704 = vpack.c.b16 %v1640, %v1640
      %v1705 = vpack.c.b16 %v1641, %v1641
      %v1706 = vpack.c.b16 %v1642, %v1642
      %v1707 = vpack.c.b16 %v1643, %v1643
      %v1708 = vpack.c.b16 %v1644, %v1644
      %v1709 = vpack.c.b16 %v1645, %v1645
      %v1710 = vpack.c.b16 %v1646, %v1646
      %v1711 = vpack.c.b16 %v1647, %v1647
      %v1712 = vpack.c.b16 %v1648, %v1648
      %v1713 = vpack.c.b16 %v1649, %v1649
      %v1714 = vpack.c.b16 %v1650, %v1650
      %v1715 = vpack.c.b16 %v1651, %v1651
      %v1716 = vpack.c.b16 %v1652, %v1652
      %v1717 = vpack.c.b16 %v1653, %v1653
      %v1718 = vpack.c.b16 %v1654, %v1654
      %v1719 = vpack.c.b16 %v1655, %v1655
      %v1720 = vpack.c.b16 %v1656, %v1656
      %vm1785 = vcmask 257024
      %1786 = vst.msk [vmem:[%s251] sm:$0xf] %vm1785, %v1657
      %1787 = vst.msk [vmem:[%s251 + $0x4] sm:$0xf] %vm1785, %v1658
      %1788 = vst.msk [vmem:[%s251 + $0x8] sm:$0xf] %vm1785, %v1659
      %1789 = vst.msk [vmem:[%s251 + $0xc] sm:$0xf] %vm1785, %v1660
      %1790 = vst.msk [vmem:[%s251 + $0x10] sm:$0xf] %vm1785, %v1661
      %1791 = vst.msk [vmem:[%s251 + $0x14] sm:$0xf] %vm1785, %v1662
      %1792 = vst.msk [vmem:[%s251 + $0x18] sm:$0xf] %vm1785, %v1663
      %1793 = vst.msk [vmem:[%s251 + $0x1c] sm:$0xf] %vm1785, %v1664
      %1794 = vst.msk [vmem:[%s251 + $0x20] sm:$0xf] %vm1785, %v1665
      %1795 = vst.msk [vmem:[%s251 + $0x24] sm:$0xf] %vm1785, %v1666
      %1796 = vst.msk [vmem:[%s251 + $0x28] sm:$0xf] %vm1785, %v1667
      %1797 = vst.msk [vmem:[%s251 + $0x2c] sm:$0xf] %vm1785, %v1668
      %1798 = vst.msk [vmem:[%s251 + $0x30] sm:$0xf] %vm1785, %v1669
      %1799 = vst.msk [vmem:[%s251 + $0x34] sm:$0xf] %vm1785, %v1670
      %1800 = vst.msk [vmem:[%s251 + $0x38] sm:$0xf] %vm1785, %v1671
      %1801 = vst.msk [vmem:[%s251 + $0x3c] sm:$0xf] %vm1785, %v1672
      %1802 = vst.msk [vmem:[%s251 + $0x40] sm:$0xf] %vm1785, %v1673
      %1803 = vst.msk [vmem:[%s251 + $0x44] sm:$0xf] %vm1785, %v1674
      %1804 = vst.msk [vmem:[%s251 + $0x48] sm:$0xf] %vm1785, %v1675
      %1805 = vst.msk [vmem:[%s251 + $0x4c] sm:$0xf] %vm1785, %v1676
      %1806 = vst.msk [vmem:[%s251 + $0x50] sm:$0xf] %vm1785, %v1677
      %1807 = vst.msk [vmem:[%s251 + $0x54] sm:$0xf] %vm1785, %v1678
      %1808 = vst.msk [vmem:[%s251 + $0x58] sm:$0xf] %vm1785, %v1679
      %1809 = vst.msk [vmem:[%s251 + $0x5c] sm:$0xf] %vm1785, %v1680
      %1810 = vst.msk [vmem:[%s251 + $0x60] sm:$0xf] %vm1785, %v1681
      %1811 = vst.msk [vmem:[%s251 + $0x64] sm:$0xf] %vm1785, %v1682
      %1812 = vst.msk [vmem:[%s251 + $0x68] sm:$0xf] %vm1785, %v1683
      %1813 = vst.msk [vmem:[%s251 + $0x6c] sm:$0xf] %vm1785, %v1684
      %1814 = vst.msk [vmem:[%s251 + $0x70] sm:$0xf] %vm1785, %v1685
      %1815 = vst.msk [vmem:[%s251 + $0x74] sm:$0xf] %vm1785, %v1686
      %1816 = vst.msk [vmem:[%s251 + $0x78] sm:$0xf] %vm1785, %v1687
      %1817 = vst.msk [vmem:[%s251 + $0x7c] sm:$0xf] %vm1785, %v1688
      %1818 = vst.msk [vmem:[%s251 + $0x80] sm:$0xf] %vm1785, %v1689
      %1819 = vst.msk [vmem:[%s251 + $0x84] sm:$0xf] %vm1785, %v1690
      %1820 = vst.msk [vmem:[%s251 + $0x88] sm:$0xf] %vm1785, %v1691
      %1821 = vst.msk [vmem:[%s251 + $0x8c] sm:$0xf] %vm1785, %v1692
      %1822 = vst.msk [vmem:[%s251 + $0x90] sm:$0xf] %vm1785, %v1693
      %1823 = vst.msk [vmem:[%s251 + $0x94] sm:$0xf] %vm1785, %v1694
      %1824 = vst.msk [vmem:[%s251 + $0x98] sm:$0xf] %vm1785, %v1695
      %1825 = vst.msk [vmem:[%s251 + $0x9c] sm:$0xf] %vm1785, %v1696
      %1826 = vst.msk [vmem:[%s251 + $0xa0] sm:$0xf] %vm1785, %v1697
      %1827 = vst.msk [vmem:[%s251 + $0xa4] sm:$0xf] %vm1785, %v1698
      %1828 = vst.msk [vmem:[%s251 + $0xa8] sm:$0xf] %vm1785, %v1699
      %1829 = vst.msk [vmem:[%s251 + $0xac] sm:$0xf] %vm1785, %v1700
      %1830 = vst.msk [vmem:[%s251 + $0xb0] sm:$0xf] %vm1785, %v1701
      %1831 = vst.msk [vmem:[%s251 + $0xb4] sm:$0xf] %vm1785, %v1702
      %1832 = vst.msk [vmem:[%s251 + $0xb8] sm:$0xf] %vm1785, %v1703
      %1833 = vst.msk [vmem:[%s251 + $0xbc] sm:$0xf] %vm1785, %v1704
      %1834 = vst.msk [vmem:[%s251 + $0xc0] sm:$0xf] %vm1785, %v1705
      %1835 = vst.msk [vmem:[%s251 + $0xc4] sm:$0xf] %vm1785, %v1706
      %1836 = vst.msk [vmem:[%s251 + $0xc8] sm:$0xf] %vm1785, %v1707
      %1837 = vst.msk [vmem:[%s251 + $0xcc] sm:$0xf] %vm1785, %v1708
      %1838 = vst.msk [vmem:[%s251 + $0xd0] sm:$0xf] %vm1785, %v1709
      %1839 = vst.msk [vmem:[%s251 + $0xd4] sm:$0xf] %vm1785, %v1710
      %1840 = vst.msk [vmem:[%s251 + $0xd8] sm:$0xf] %vm1785, %v1711
      %1841 = vst.msk [vmem:[%s251 + $0xdc] sm:$0xf] %vm1785, %v1712
      %1842 = vst.msk [vmem:[%s251 + $0xe0] sm:$0xf] %vm1785, %v1713
      %1843 = vst.msk [vmem:[%s251 + $0xe4] sm:$0xf] %vm1785, %v1714
      %1844 = vst.msk [vmem:[%s251 + $0xe8] sm:$0xf] %vm1785, %v1715
      %1845 = vst.msk [vmem:[%s251 + $0xec] sm:$0xf] %vm1785, %v1716
      %1846 = vst.msk [vmem:[%s251 + $0xf0] sm:$0xf] %vm1785, %v1717
      %1847 = vst.msk [vmem:[%s251 + $0xf4] sm:$0xf] %vm1785, %v1718
      %1848 = vst.msk [vmem:[%s251 + $0xf8] sm:$0xf] %vm1785, %v1719
      %1849 = vst.msk [vmem:[%s251 + $0xfc] sm:$0xf] %vm1785, %v1720
      %vm1850 = vcmask 261120
      %v1851 = vsel %vm1850, %v1465, 0.0
      %v1852 = vsel %vm1850, %v1466, 0.0
      %v1853 = vadd.f32 %v1851, %v1852
      %v1854 = vsel %vm1850, %v1467, 0.0
      %v1855 = vadd.f32 %v1853, %v1854
      %v1856 = vsel %vm1850, %v1468, 0.0
      %v1857 = vadd.f32 %v1855, %v1856
      %v1858 = vsel %vm1850, %v1469, 0.0
      %v1859 = vadd.f32 %v1857, %v1858
      %v1860 = vsel %vm1850, %v1470, 0.0
      %v1861 = vadd.f32 %v1859, %v1860
      %v1862 = vsel %vm1850, %v1471, 0.0
      %v1863 = vadd.f32 %v1861, %v1862
      %v1864 = vsel %vm1850, %v1472, 0.0
      %v1865 = vadd.f32 %v1863, %v1864
      %v1866 = vsel %vm1850, %v1473, 0.0
      %v1867 = vadd.f32 %v1865, %v1866
      %v1868 = vsel %vm1850, %v1474, 0.0
      %v1869 = vadd.f32 %v1867, %v1868
      %v1870 = vsel %vm1850, %v1475, 0.0
      %v1871 = vadd.f32 %v1869, %v1870
      %v1872 = vsel %vm1850, %v1476, 0.0
      %v1873 = vadd.f32 %v1871, %v1872
      %v1874 = vsel %vm1850, %v1477, 0.0
      %v1875 = vadd.f32 %v1873, %v1874
      %v1876 = vsel %vm1850, %v1478, 0.0
      %v1877 = vadd.f32 %v1875, %v1876
      %v1878 = vsel %vm1850, %v1479, 0.0
      %v1879 = vadd.f32 %v1877, %v1878
      %v1880 = vsel %vm1850, %v1480, 0.0
      %v1881 = vadd.f32 %v1879, %v1880
      %v1882 = vsel %vm1850, %v1481, 0.0
      %v1883 = vadd.f32 %v1881, %v1882
      %v1884 = vsel %vm1850, %v1482, 0.0
      %v1885 = vadd.f32 %v1883, %v1884
      %v1886 = vsel %vm1850, %v1483, 0.0
      %v1887 = vadd.f32 %v1885, %v1886
      %v1888 = vsel %vm1850, %v1484, 0.0
      %v1889 = vadd.f32 %v1887, %v1888
      %v1890 = vsel %vm1850, %v1485, 0.0
      %v1891 = vadd.f32 %v1889, %v1890
      %v1892 = vsel %vm1850, %v1486, 0.0
      %v1893 = vadd.f32 %v1891, %v1892
      %v1894 = vsel %vm1850, %v1487, 0.0
      %v1895 = vadd.f32 %v1893, %v1894
      %v1896 = vsel %vm1850, %v1488, 0.0
      %v1897 = vadd.f32 %v1895, %v1896
      %v1898 = vsel %vm1850, %v1489, 0.0
      %v1899 = vadd.f32 %v1897, %v1898
      %v1900 = vsel %vm1850, %v1490, 0.0
      %v1901 = vadd.f32 %v1899, %v1900
      %v1902 = vsel %vm1850, %v1491, 0.0
      %v1903 = vadd.f32 %v1901, %v1902
      %v1904 = vsel %vm1850, %v1492, 0.0
      %v1905 = vadd.f32 %v1903, %v1904
      %v1906 = vsel %vm1850, %v1493, 0.0
      %v1907 = vadd.f32 %v1905, %v1906
      %v1908 = vsel %vm1850, %v1494, 0.0
      %v1909 = vadd.f32 %v1907, %v1908
      %v1910 = vsel %vm1850, %v1495, 0.0
      %v1911 = vadd.f32 %v1909, %v1910
      %v1912 = vsel %vm1850, %v1496, 0.0
      %v1913 = vadd.f32 %v1911, %v1912
      %v1914 = vsel %vm1850, %v1497, 0.0
      %v1915 = vadd.f32 %v1913, %v1914
      %v1916 = vsel %vm1850, %v1498, 0.0
      %v1917 = vadd.f32 %v1915, %v1916
      %v1918 = vsel %vm1850, %v1499, 0.0
      %v1919 = vadd.f32 %v1917, %v1918
      %v1920 = vsel %vm1850, %v1500, 0.0
      %v1921 = vadd.f32 %v1919, %v1920
      %v1922 = vsel %vm1850, %v1501, 0.0
      %v1923 = vadd.f32 %v1921, %v1922
      %v1924 = vsel %vm1850, %v1502, 0.0
      %v1925 = vadd.f32 %v1923, %v1924
      %v1926 = vsel %vm1850, %v1503, 0.0
      %v1927 = vadd.f32 %v1925, %v1926
      %v1928 = vsel %vm1850, %v1504, 0.0
      %v1929 = vadd.f32 %v1927, %v1928
      %v1930 = vsel %vm1850, %v1505, 0.0
      %v1931 = vadd.f32 %v1929, %v1930
      %v1932 = vsel %vm1850, %v1506, 0.0
      %v1933 = vadd.f32 %v1931, %v1932
      %v1934 = vsel %vm1850, %v1507, 0.0
      %v1935 = vadd.f32 %v1933, %v1934
      %v1936 = vsel %vm1850, %v1508, 0.0
      %v1937 = vadd.f32 %v1935, %v1936
      %v1938 = vsel %vm1850, %v1509, 0.0
      %v1939 = vadd.f32 %v1937, %v1938
      %v1940 = vsel %vm1850, %v1510, 0.0
      %v1941 = vadd.f32 %v1939, %v1940
      %v1942 = vsel %vm1850, %v1511, 0.0
      %v1943 = vadd.f32 %v1941, %v1942
      %v1944 = vsel %vm1850, %v1512, 0.0
      %v1945 = vadd.f32 %v1943, %v1944
      %v1946 = vsel %vm1850, %v1513, 0.0
      %v1947 = vadd.f32 %v1945, %v1946
      %v1948 = vsel %vm1850, %v1514, 0.0
      %v1949 = vadd.f32 %v1947, %v1948
      %v1950 = vsel %vm1850, %v1515, 0.0
      %v1951 = vadd.f32 %v1949, %v1950
      %v1952 = vsel %vm1850, %v1516, 0.0
      %v1953 = vadd.f32 %v1951, %v1952
      %v1954 = vsel %vm1850, %v1517, 0.0
      %v1955 = vadd.f32 %v1953, %v1954
      %v1956 = vsel %vm1850, %v1518, 0.0
      %v1957 = vadd.f32 %v1955, %v1956
      %v1958 = vsel %vm1850, %v1519, 0.0
      %v1959 = vadd.f32 %v1957, %v1958
      %v1960 = vsel %vm1850, %v1520, 0.0
      %v1961 = vadd.f32 %v1959, %v1960
      %v1962 = vsel %vm1850, %v1521, 0.0
      %v1963 = vadd.f32 %v1961, %v1962
      %v1964 = vsel %vm1850, %v1522, 0.0
      %v1965 = vadd.f32 %v1963, %v1964
      %v1966 = vsel %vm1850, %v1523, 0.0
      %v1967 = vadd.f32 %v1965, %v1966
      %v1968 = vsel %vm1850, %v1524, 0.0
      %v1969 = vadd.f32 %v1967, %v1968
      %v1970 = vsel %vm1850, %v1525, 0.0
      %v1971 = vadd.f32 %v1969, %v1970
      %v1972 = vsel %vm1850, %v1526, 0.0
      %v1973 = vadd.f32 %v1971, %v1972
      %v1974 = vsel %vm1850, %v1527, 0.0
      %v1975 = vadd.f32 %v1973, %v1974
      %v1976 = vsel %vm1850, %v1528, 0.0
      %v1977 = vadd.f32 %v1975, %v1976
      %v1978 = vrot.slane %v1977, 4
      %v1979 = vadd.f32 %v1977, %v1978
      %v1980 = vrot.slane %v1979, 2
      %v1981 = vadd.f32 %v1979, %v1980
      %v1982 = vrot.slane %v1981, 1
      %v1983 = vadd.f32 %v1981, %v1982
      %v1984 = vmul.f32 %v1465, %v1465
      %v1985 = vmul.f32 %v1466, %v1466
      %v1986 = vmul.f32 %v1467, %v1467
      %v1987 = vmul.f32 %v1468, %v1468
      %v1988 = vmul.f32 %v1469, %v1469
      %v1989 = vmul.f32 %v1470, %v1470
      %v1990 = vmul.f32 %v1471, %v1471
      %v1991 = vmul.f32 %v1472, %v1472
      %v1992 = vmul.f32 %v1473, %v1473
      %v1993 = vmul.f32 %v1474, %v1474
      %v1994 = vmul.f32 %v1475, %v1475
      %v1995 = vmul.f32 %v1476, %v1476
      %v1996 = vmul.f32 %v1477, %v1477
      %v1997 = vmul.f32 %v1478, %v1478
      %v1998 = vmul.f32 %v1479, %v1479
      %v1999 = vmul.f32 %v1480, %v1480
      %v2000 = vmul.f32 %v1481, %v1481
      %v2001 = vmul.f32 %v1482, %v1482
      %v2002 = vmul.f32 %v1483, %v1483
      %v2003 = vmul.f32 %v1484, %v1484
      %v2004 = vmul.f32 %v1485, %v1485
      %v2005 = vmul.f32 %v1486, %v1486
      %v2006 = vmul.f32 %v1487, %v1487
      %v2007 = vmul.f32 %v1488, %v1488
      %v2008 = vmul.f32 %v1489, %v1489
      %v2009 = vmul.f32 %v1490, %v1490
      %v2010 = vmul.f32 %v1491, %v1491
      %v2011 = vmul.f32 %v1492, %v1492
      %v2012 = vmul.f32 %v1493, %v1493
      %v2013 = vmul.f32 %v1494, %v1494
      %v2014 = vmul.f32 %v1495, %v1495
      %v2015 = vmul.f32 %v1496, %v1496
      %v2016 = vmul.f32 %v1497, %v1497
      %v2017 = vmul.f32 %v1498, %v1498
      %v2018 = vmul.f32 %v1499, %v1499
      %v2019 = vmul.f32 %v1500, %v1500
      %v2020 = vmul.f32 %v1501, %v1501
      %v2021 = vmul.f32 %v1502, %v1502
      %v2022 = vmul.f32 %v1503, %v1503
      %v2023 = vmul.f32 %v1504, %v1504
      %v2024 = vmul.f32 %v1505, %v1505
      %v2025 = vmul.f32 %v1506, %v1506
      %v2026 = vmul.f32 %v1507, %v1507
      %v2027 = vmul.f32 %v1508, %v1508
      %v2028 = vmul.f32 %v1509, %v1509
      %v2029 = vmul.f32 %v1510, %v1510
      %v2030 = vmul.f32 %v1511, %v1511
      %v2031 = vmul.f32 %v1512, %v1512
      %v2032 = vmul.f32 %v1513, %v1513
      %v2033 = vmul.f32 %v1514, %v1514
      %v2034 = vmul.f32 %v1515, %v1515
      %v2035 = vmul.f32 %v1516, %v1516
      %v2036 = vmul.f32 %v1517, %v1517
      %v2037 = vmul.f32 %v1518, %v1518
      %v2038 = vmul.f32 %v1519, %v1519
      %v2039 = vmul.f32 %v1520, %v1520
      %v2040 = vmul.f32 %v1521, %v1521
      %v2041 = vmul.f32 %v1522, %v1522
      %v2042 = vmul.f32 %v1523, %v1523
      %v2043 = vmul.f32 %v1524, %v1524
      %v2044 = vmul.f32 %v1525, %v1525
      %v2045 = vmul.f32 %v1526, %v1526
      %v2046 = vmul.f32 %v1527, %v1527
      %v2047 = vmul.f32 %v1528, %v1528
      %v2048 = vsel %vm1850, %v1984, 0.0
      %v2049 = vsel %vm1850, %v1985, 0.0
      %v2050 = vadd.f32 %v2048, %v2049
      %v2051 = vsel %vm1850, %v1986, 0.0
      %v2052 = vadd.f32 %v2050, %v2051
      %v2053 = vsel %vm1850, %v1987, 0.0
      %v2054 = vadd.f32 %v2052, %v2053
      %v2055 = vsel %vm1850, %v1988, 0.0
      %v2056 = vadd.f32 %v2054, %v2055
      %v2057 = vsel %vm1850, %v1989, 0.0
      %v2058 = vadd.f32 %v2056, %v2057
      %v2059 = vsel %vm1850, %v1990, 0.0
      %v2060 = vadd.f32 %v2058, %v2059
      %v2061 = vsel %vm1850, %v1991, 0.0
      %v2062 = vadd.f32 %v2060, %v2061
      %v2063 = vsel %vm1850, %v1992, 0.0
      %v2064 = vadd.f32 %v2062, %v2063
      %v2065 = vsel %vm1850, %v1993, 0.0
      %v2066 = vadd.f32 %v2064, %v2065
      %v2067 = vsel %vm1850, %v1994, 0.0
      %v2068 = vadd.f32 %v2066, %v2067
      %v2069 = vsel %vm1850, %v1995, 0.0
      %v2070 = vadd.f32 %v2068, %v2069
      %v2071 = vsel %vm1850, %v1996, 0.0
      %v2072 = vadd.f32 %v2070, %v2071
      %v2073 = vsel %vm1850, %v1997, 0.0
      %v2074 = vadd.f32 %v2072, %v2073
      %v2075 = vsel %vm1850, %v1998, 0.0
      %v2076 = vadd.f32 %v2074, %v2075
      %v2077 = vsel %vm1850, %v1999, 0.0
      %v2078 = vadd.f32 %v2076, %v2077
      %v2079 = vsel %vm1850, %v2000, 0.0
      %v2080 = vadd.f32 %v2078, %v2079
      %v2081 = vsel %vm1850, %v2001, 0.0
      %v2082 = vadd.f32 %v2080, %v2081
      %v2083 = vsel %vm1850, %v2002, 0.0
      %v2084 = vadd.f32 %v2082, %v2083
      %v2085 = vsel %vm1850, %v2003, 0.0
      %v2086 = vadd.f32 %v2084, %v2085
      %v2087 = vsel %vm1850, %v2004, 0.0
      %v2088 = vadd.f32 %v2086, %v2087
      %v2089 = vsel %vm1850, %v2005, 0.0
      %v2090 = vadd.f32 %v2088, %v2089
      %v2091 = vsel %vm1850, %v2006, 0.0
      %v2092 = vadd.f32 %v2090, %v2091
      %v2093 = vsel %vm1850, %v2007, 0.0
      %v2094 = vadd.f32 %v2092, %v2093
      %v2095 = vsel %vm1850, %v2008, 0.0
      %v2096 = vadd.f32 %v2094, %v2095
      %v2097 = vsel %vm1850, %v2009, 0.0
      %v2098 = vadd.f32 %v2096, %v2097
      %v2099 = vsel %vm1850, %v2010, 0.0
      %v2100 = vadd.f32 %v2098, %v2099
      %v2101 = vsel %vm1850, %v2011, 0.0
      %v2102 = vadd.f32 %v2100, %v2101
      %v2103 = vsel %vm1850, %v2012, 0.0
      %v2104 = vadd.f32 %v2102, %v2103
      %v2105 = vsel %vm1850, %v2013, 0.0
      %v2106 = vadd.f32 %v2104, %v2105
      %v2107 = vsel %vm1850, %v2014, 0.0
      %v2108 = vadd.f32 %v2106, %v2107
      %v2109 = vsel %vm1850, %v2015, 0.0
      %v2110 = vadd.f32 %v2108, %v2109
      %v2111 = vsel %vm1850, %v2016, 0.0
      %v2112 = vadd.f32 %v2110, %v2111
      %v2113 = vsel %vm1850, %v2017, 0.0
      %v2114 = vadd.f32 %v2112, %v2113
      %v2115 = vsel %vm1850, %v2018, 0.0
      %v2116 = vadd.f32 %v2114, %v2115
      %v2117 = vsel %vm1850, %v2019, 0.0
      %v2118 = vadd.f32 %v2116, %v2117
      %v2119 = vsel %vm1850, %v2020, 0.0
      %v2120 = vadd.f32 %v2118, %v2119
      %v2121 = vsel %vm1850, %v2021, 0.0
      %v2122 = vadd.f32 %v2120, %v2121
      %v2123 = vsel %vm1850, %v2022, 0.0
      %v2124 = vadd.f32 %v2122, %v2123
      %v2125 = vsel %vm1850, %v2023, 0.0
      %v2126 = vadd.f32 %v2124, %v2125
      %v2127 = vsel %vm1850, %v2024, 0.0
      %v2128 = vadd.f32 %v2126, %v2127
      %v2129 = vsel %vm1850, %v2025, 0.0
      %v2130 = vadd.f32 %v2128, %v2129
      %v2131 = vsel %vm1850, %v2026, 0.0
      %v2132 = vadd.f32 %v2130, %v2131
      %v2133 = vsel %vm1850, %v2027, 0.0
      %v2134 = vadd.f32 %v2132, %v2133
      %v2135 = vsel %vm1850, %v2028, 0.0
      %v2136 = vadd.f32 %v2134, %v2135
      %v2137 = vsel %vm1850, %v2029, 0.0
      %v2138 = vadd.f32 %v2136, %v2137
      %v2139 = vsel %vm1850, %v2030, 0.0
      %v2140 = vadd.f32 %v2138, %v2139
      %v2141 = vsel %vm1850, %v2031, 0.0
      %v2142 = vadd.f32 %v2140, %v2141
      %v2143 = vsel %vm1850, %v2032, 0.0
      %v2144 = vadd.f32 %v2142, %v2143
      %v2145 = vsel %vm1850, %v2033, 0.0
      %v2146 = vadd.f32 %v2144, %v2145
      %v2147 = vsel %vm1850, %v2034, 0.0
      %v2148 = vadd.f32 %v2146, %v2147
      %v2149 = vsel %vm1850, %v2035, 0.0
      %v2150 = vadd.f32 %v2148, %v2149
      %v2151 = vsel %vm1850, %v2036, 0.0
      %v2152 = vadd.f32 %v2150, %v2151
      %v2153 = vsel %vm1850, %v2037, 0.0
      %v2154 = vadd.f32 %v2152, %v2153
      %v2155 = vsel %vm1850, %v2038, 0.0
      %v2156 = vadd.f32 %v2154, %v2155
      %v2157 = vsel %vm1850, %v2039, 0.0
      %v2158 = vadd.f32 %v2156, %v2157
      %v2159 = vsel %vm1850, %v2040, 0.0
      %v2160 = vadd.f32 %v2158, %v2159
      %v2161 = vsel %vm1850, %v2041, 0.0
      %v2162 = vadd.f32 %v2160, %v2161
      %v2163 = vsel %vm1850, %v2042, 0.0
      %v2164 = vadd.f32 %v2162, %v2163
      %v2165 = vsel %vm1850, %v2043, 0.0
      %v2166 = vadd.f32 %v2164, %v2165
      %v2167 = vsel %vm1850, %v2044, 0.0
      %v2168 = vadd.f32 %v2166, %v2167
      %v2169 = vsel %vm1850, %v2045, 0.0
      %v2170 = vadd.f32 %v2168, %v2169
      %v2171 = vsel %vm1850, %v2046, 0.0
      %v2172 = vadd.f32 %v2170, %v2171
      %v2173 = vsel %vm1850, %v2047, 0.0
      %v2174 = vadd.f32 %v2172, %v2173
      %v2175 = vrot.slane %v2174, 4
      %v2176 = vadd.f32 %v2174, %v2175
      %v2177 = vrot.slane %v2176, 2
      %v2178 = vadd.f32 %v2176, %v2177
      %v2179 = vrot.slane %v2178, 1
      %v2180 = vadd.f32 %v2178, %v2179
      %2181 = vst.msk [vmem:[%s257] sm:$0xff] %vm1850, %v1983
      %2182 = vst.msk [vmem:[%s261] sm:$0xff] %vm1850, %v2180
      %s2183 = sadd.s32 %s18, 1
      %s2184 = smul.u32 64, %s2183
      %p2185 = scmp.lt.s32.totalorder %s2184, 447
      %s2186 = scalar_select %p2185, %s2184, 447
      %s2187 = smul.addr %s2186, 4
      %s2188 = scalar_lea.vmem %s4, %s2187
      %p2189 = scmp.lt.s32.totalorder %s18, 4
      %s2190 = scalar_select %p2189, %s18, 4
      %s2191 = smul.addr %s2190, 8
      %s2192 = scalar_lea.vmem %s5, %s2191
      %p2193 = scmp.lt.s32.totalorder %s18, 4
      %s2194 = scalar_select %p2193, %s18, 4
      %s2195 = smul.addr %s2194, 8
      %s2196 = scalar_lea.vmem %s6, %s2195
      // Predicated region
      $region67: #{tpu_custom_call.1} parent=31 // pred_check
        %p2197 = pneg %p108
      $region68: #{tpu_custom_call.1} parent=31 // pred_check_branch
        %2199 = sbr.rel (%p2197) target = $region70
      $region69: #{tpu_custom_call.1} parent=31 // pred_region
        %s2200 = sadd.s32 %s18, 1
        %s2201 = smul.u32 64, %s2200
      $region70: #{tpu_custom_call.1} parent=31 // pred_fallthru
        _
      // Predicated region
      $region71: #{tpu_custom_call.1} parent=31 // pred_check
        %p2202 = pneg %p134
      $region72: #{tpu_custom_call.1} parent=31 // pred_check_branch
        %2204 = sbr.rel (%p2202) target = $region74
      $region73: #{tpu_custom_call.1} parent=31 // pred_region
        _
      $region74: #{tpu_custom_call.1} parent=31 // pred_fallthru
        _
      // Predicated region
      $region75: #{tpu_custom_call.1} parent=31 // pred_check
        %p2205 = pneg %p160
      $region76: #{tpu_custom_call.1} parent=31 // pred_check_branch
        %2207 = sbr.rel (%p2205) target = $region78
      $region77: #{tpu_custom_call.1} parent=31 // pred_region
        _
      $region78: #{tpu_custom_call.1} parent=31 // pred_fallthru
        _
    $region32: #{tpu_custom_call.1} parent=5 // pred_fallthru
      _
    %p2208 = scmp.le.s32.totalorder 2, %s13
    // Predicated region
    $region79: #{tpu_custom_call.1} parent=5 // pred_check
      %p2209 = pneg %p2208
    $region80: #{tpu_custom_call.1} parent=5 // pred_check_branch
      %2211 = sbr.rel (%p2209) target = $region82
    $region81: #{tpu_custom_call.1} parent=5 // pred_region
      %s2212 = ssub.s32 %s13, 2
      // Predicated region
      $region83: #{tpu_custom_call.1} parent=81 // pred_check
        %p2213 = pneg %p114
      $region84: #{tpu_custom_call.1} parent=81 // pred_check_branch
        %2215 = sbr.rel (%p2213) target = $region86
      $region85: #{tpu_custom_call.1} parent=81 // pred_region
        %s2216 = sadd.s32 %s19, 1
        %s2217 = smul.u32 64, %s2216
        %p2218 = scmp.lt.s32.totalorder %s2217, 447
        %s2219 = scalar_select %p2218, %s2217, 447
        %s2220 = smul.addr %s2219, 4
        %s2221 = scalar_lea.vmem %s4, %s2220
      $region86: #{tpu_custom_call.1} parent=81 // pred_fallthru
        _
      // Predicated region
      $region87: #{tpu_custom_call.1} parent=81 // pred_check
        %p2222 = pneg %p140
      $region88: #{tpu_custom_call.1} parent=81 // pred_check_branch
        %2224 = sbr.rel (%p2222) target = $region90
      $region89: #{tpu_custom_call.1} parent=81 // pred_region
        %p2225 = scmp.lt.s32.totalorder %s19, 4
        %s2226 = scalar_select %p2225, %s19, 4
        %s2227 = smul.addr %s2226, 8
        %s2228 = scalar_lea.vmem %s5, %s2227
      $region90: #{tpu_custom_call.1} parent=81 // pred_fallthru
        _
      // Predicated region
      $region91: #{tpu_custom_call.1} parent=81 // pred_check
        %p2229 = pneg %p166
      $region92: #{tpu_custom_call.1} parent=81 // pred_check_branch
        %2231 = sbr.rel (%p2229) target = $region94
      $region93: #{tpu_custom_call.1} parent=81 // pred_region
        %p2232 = scmp.lt.s32.totalorder %s19, 4
        %s2233 = scalar_select %p2232, %s19, 4
        %s2234 = smul.addr %s2233, 8
        %s2235 = scalar_lea.vmem %s6, %s2234
      $region94: #{tpu_custom_call.1} parent=81 // pred_fallthru
        _
    $region82: #{tpu_custom_call.1} parent=5 // pred_fallthru
      _
  $region6: #{tpu_custom_call.1} parent=0 // loop_footer
    %s17 = sadd.s32 1, %s13
  $region7: #{tpu_custom_call.1} parent=0 // loop_footer_branch
    %12 = sbr.rel target = $region3
  $region8: #{tpu_custom_call.1} parent=0 // loop_exit
    _
  %2236 = vsyncmov [#allocation3]
  %s2237 = vpop.sfrf %2236
  %p2238 = scmp.eq.s32.totalorder %s2237, 0
  %p2239 = pneg %p2238
  %2241 = shalt.err (%p2239)

</llo_original>
